<compile_context>
chip_gen: v7x
topology: tpu7x:2x2x1
jax: 0.10.0
libtpu: 0.0.40
codegen_flags: <defaults>
</compile_context>

<pallas_src>
import functools
import math

import jax
import jax.numpy as jnp
from jax import lax
from jax.experimental import pallas as pl
from jax.experimental.pallas import tpu as pltpu

# ---------------- config (mirrors the torch `config()`) ----------------
D_MODEL = 32          # c.d_model
SEQ_L = 8             # c.sequence_l
N_HEAD = 4            # c.number_head
N_LAYER = 2           # c.num_layer
BATCH = 2             # c.batch_size
VOCAB = 16            # len(stoi)
DROPOUT = 0.0         # c.dropout  (0.0 -> identity, deterministic)
HEAD_SIZE = D_MODEL // N_HEAD
FF_DIM = 4 * D_MODEL
LN_EPS = 1e-5
LANE = 128            # lane width; logits/loss are emitted lane-dense
NEG_BIG = -1e30       # additive mask / logit-padding value (finite, no inf math)

VEC_ROWS_PER_LAYER = 6   # ln1_g, ln1_b, b0, ln2_g, ln2_b, bf2

assert FF_DIM == LANE, "head_slab packing assumes FF_DIM == LANE (128)"


def _layernorm(x, gamma, beta):
    mu = jnp.mean(x, axis=-1, keepdims=True)
    var = jnp.mean((x - mu) ** 2, axis=-1, keepdims=True)
    return (x - mu) * lax.rsqrt(var + LN_EPS) * gamma + beta


# ---------------- single fused kernel (gridless, everything VMEM-resident) ----
def fused_forward_kernel(xid_ref, yid_ref, emb_ref, wqkv_ref, w0_ref, w1_ref,
                         w2_ref, vec_ref, head_ref, out_ref,
                         *, n_layer, n_head, head_size, seq_l, vocab):
    BL = xid_ref.shape[0]                 # batch*seq on the sublane axis
    D = emb_ref.shape[1]
    pow2 = (seq_l & (seq_l - 1)) == 0

    x_tok = xid_ref[...]                  # (BL, 1) int32
    y_tok = yid_ref[...]                  # (BL, 1) int32

    # ---- fused token + position embedding gather: ONE one-hot MXU matmul ----
    n_rows = vocab + seq_l
    gcol = lax.broadcasted_iota(jnp.int32, (BL, n_rows), 1)
    grow = lax.broadcasted_iota(jnp.int32, (BL, n_rows), 0)
    gpos = (grow & (seq_l - 1)) if pow2 else (grow % seq_l)
    gather_oh = ((gcol == x_tok) | (gcol == vocab + gpos)).astype(jnp.float32)
    x = jnp.dot(gather_oh, emb_ref[...], preferred_element_type=jnp.float32)
    # Dropout(p=0.0) on embeddings == identity.

    # ---- additive attention bias (causal & same-sequence), built once ----
    ar = lax.broadcasted_iota(jnp.int32, (BL, BL), 0)
    ac = lax.broadcasted_iota(jnp.int32, (BL, BL), 1)
    if pow2:
        shift = seq_l.bit_length() - 1
        same_seq = (ar >> shift) == (ac >> shift)
    else:
        same_seq = (ar // seq_l) == (ac // seq_l)
    keep = same_seq & (ac <= ar)
    attn_bias = jnp.where(keep, 0.0, NEG_BIG).astype(jnp.float32)

    scale = 1.0 / math.sqrt(head_size)

    for l in range(n_layer):                       # static, fully unrolled
        base = l * VEC_ROWS_PER_LAYER
        ln1_g = vec_ref[base + 0:base + 1, :]
        ln1_b = vec_ref[base + 1:base + 2, :]
        b0    = vec_ref[base + 2:base + 3, :]
        ln2_g = vec_ref[base + 3:base + 4, :]
        ln2_b = vec_ref[base + 4:base + 5, :]
        bf2   = vec_ref[base + 5:base + 6, :]
        bf1   = head_ref[D + 1 + l:D + 2 + l, :]   # (1, FF_DIM)

        # ---- multi-head causal self-attention on LN1(x) ----
        xn = _layernorm(x, ln1_g, ln1_b)
        qkv = jnp.dot(xn.astype(jnp.bfloat16), wqkv_ref[l],
                      preferred_element_type=jnp.float32)          # (BL, 3D)

        z_heads = []
        for h in range(n_head):                    # static, n_head is tiny
            lo = h * head_size
            q_h = qkv[:, lo:lo + head_size]
            k_h = qkv[:, D + lo:D + lo + head_size]
            v_h = qkv[:, 2 * D + lo:2 * D + lo + head_size]
            s = jnp.dot(q_h, k_h.T, preferred_element_type=jnp.float32) * scale
            s = s + attn_bias
            s = s - jnp.max(s, axis=-1, keepdims=True)
            p = jnp.exp(s)
            p = p * pl.reciprocal(jnp.sum(p, axis=-1, keepdims=True), approx=True)
            z_heads.append(jnp.dot(p, v_h, preferred_element_type=jnp.float32))
        z_all = jnp.concatenate(z_heads, axis=-1)                   # (BL, D)
        attn = jnp.dot(z_all.astype(jnp.bfloat16), w0_ref[l],
                       preferred_element_type=jnp.float32) + b0     # one w0 dot
        x = x + attn                                                # residual 1

        # ---- feed-forward on LN2(x) ----
        xn2 = _layernorm(x, ln2_g, ln2_b)
        h1 = jnp.dot(xn2.astype(jnp.bfloat16), w1_ref[l],
                     preferred_element_type=jnp.float32) + bf1
        h1 = jnp.maximum(h1, 0.0)                                   # ReLU
        ff = jnp.dot(h1.astype(jnp.bfloat16), w2_ref[l],
                     preferred_element_type=jnp.float32) + bf2
        x = x + ff                                                  # residual 2

    # ---- final LayerNorm + vocab projection (lane-dense, padded to 128) ----
    fbase = n_layer * VEC_ROWS_PER_LAYER
    lnf_g = vec_ref[fbase + 0:fbase + 1, :]
    lnf_b = vec_ref[fbase + 1:fbase + 2, :]
    xn = _layernorm(x, lnf_g, lnf_b)
    wp = head_ref[0:D, :]                 # (D, 128): real wp in lanes 0:VOCAB
    bp = head_ref[D:D + 1, :]             # (1, 128): 0 in 0:VOCAB, -1e30 pads
    logits = jnp.dot(xn, wp, preferred_element_type=jnp.float32) + bp   # (BL,128)

    # ---- cross entropy ('mean') reduced to a scalar in-kernel ----
    m = jnp.max(logits, axis=-1, keepdims=True)
    lse = m + jnp.log(jnp.sum(jnp.exp(logits - m), axis=-1, keepdims=True))
    vcol = lax.broadcasted_iota(jnp.int32, logits.shape, 1)
    y_oh = (vcol == y_tok).astype(jnp.float32)
    tgt = jnp.sum(logits * y_oh, axis=-1, keepdims=True)
    loss_mean = jnp.sum(lse - tgt) * (1.0 / BL)

    # ---- single lane-dense output: rows 0:BL logits, rows BL:BL+8 loss ----
    out_ref[0:BL, :] = logits
    out_ref[BL:BL + 8, :] = jnp.full((8, LANE), loss_mean, dtype=jnp.float32)


# ---------------- params (pre-packed into a few slabs at init time) ----------
def init_params(key):
    def nrm(k, shape, dtype=jnp.float32):
        return (0.02 * jax.random.normal(k, shape, dtype=jnp.float32)).astype(dtype)

    ks = jax.random.split(key, 7)

    # token + position embedding tables stacked into one slab
    emb_slab = jnp.concatenate(
        [nrm(ks[0], (VOCAB, D_MODEL)), nrm(ks[1], (SEQ_L, D_MODEL))], axis=0)

    # large matmul weights, stacked over layers, stored bf16 (MXU-native)
    wqkv = nrm(ks[2], (N_LAYER, D_MODEL, 3 * D_MODEL), jnp.bfloat16)
    w0 = nrm(ks[3], (N_LAYER, D_MODEL, D_MODEL), jnp.bfloat16)
    w1 = nrm(ks[4], (N_LAYER, D_MODEL, FF_DIM), jnp.bfloat16)
    w2 = nrm(ks[5], (N_LAYER, FF_DIM, D_MODEL), jnp.bfloat16)

    # all (1, D) vectors in one slab: per layer [ln1_g, ln1_b, b0, ln2_g,
    # ln2_b, bf2], then [lnf_g, lnf_b]
    ones = jnp.ones((1, D_MODEL), jnp.float32)
    zeros = jnp.zeros((1, D_MODEL), jnp.float32)
    per_layer = jnp.concatenate([ones, zeros, zeros, ones, zeros, zeros], axis=0)
    vec_slab = jnp.concatenate([per_layer] * N_LAYER + [ones, zeros], axis=0)

    # head slab (width 128): rows 0:D = wp padded to 128 lanes (zeros in pads),
    # row D = bp padded with -1e30 (so padded logits never win max / lse),
    # rows D+1 .. D+N_LAYER = bf1 per layer.
    wp = nrm(ks[6], (D_MODEL, VOCAB))
    wp_pad = jnp.zeros((D_MODEL, LANE), jnp.float32).at[:, :VOCAB].set(wp)
    bp_pad = jnp.full((1, LANE), NEG_BIG, jnp.float32).at[:, :VOCAB].set(0.0)
    bf1 = jnp.zeros((N_LAYER, FF_DIM), jnp.float32)
    head_slab = jnp.concatenate([wp_pad, bp_pad, bf1], axis=0)

    return {"emb_slab": emb_slab, "wqkv": wqkv, "w0": w0, "w1": w1, "w2": w2,
            "vec_slab": vec_slab, "head_slab": head_slab}


# ---------------- wrapper ----------------
@jax.jit
def model_forward(params, x_tokens, y_tokens):
    B, L = x_tokens.shape
    BL = B * L
    x_ids = x_tokens.reshape(BL, 1).astype(jnp.int32)   # metadata-only reshape
    y_ids = y_tokens.reshape(BL, 1).astype(jnp.int32)

    kernel = functools.partial(fused_forward_kernel, n_layer=N_LAYER,
                               n_head=N_HEAD, head_size=HEAD_SIZE,
                               seq_l=L, vocab=VOCAB)
    vmem = pl.BlockSpec(memory_space=pltpu.MemorySpace.VMEM)
    out = pl.pallas_call(
        kernel,
        out_shape=jax.ShapeDtypeStruct((BL + 8, LANE), jnp.float32),
        in_specs=[vmem] * 9,
        out_specs=vmem,
        cost_estimate=pl.CostEstimate(flops=1_100_000, transcendentals=4_400,
                                      bytes_accessed=96_000),
    )(x_ids, y_ids, params["emb_slab"], params["wqkv"], params["w0"],
      params["w1"], params["w2"], params["vec_slab"], params["head_slab"])

    logits = out[:BL, :VOCAB]       # train-mode view: (B*L, vocab)
    loss = out[BL, 0]
    perplexity = jnp.exp(loss)
    return logits, loss, perplexity


if __name__ == "__main__":
    key = jax.random.PRNGKey(0)
    pkey, xkey, ykey = jax.random.split(key, 3)
    params = init_params(pkey)
    x = jax.random.randint(xkey, (BATCH, SEQ_L), 0, VOCAB, dtype=jnp.int32)
    y = jax.random.randint(ykey, (BATCH, SEQ_L), 0, VOCAB, dtype=jnp.int32)

    logits, loss, ppl = model_forward(params, x, y)
    jax.block_until_ready((logits, loss, ppl))

    assert logits.shape == (BATCH * SEQ_L, VOCAB)
    assert bool(jnp.isfinite(loss)) and bool(jnp.isfinite(ppl))
    print("KERNEL_OK")
</pallas_src>

<mosaic_0001>
module attributes {stable_mosaic.version = 11 : i64} {
  func.func @fused_forward_kernel(%arg0: memref<16x1xi32, #tpu.memory_space<vmem>>, %arg1: memref<16x1xi32, #tpu.memory_space<vmem>>, %arg2: memref<24x32xf32, #tpu.memory_space<vmem>>, %arg3: memref<2x32x96xbf16, #tpu.memory_space<vmem>>, %arg4: memref<2x32x32xbf16, #tpu.memory_space<vmem>>, %arg5: memref<2x32x128xbf16, #tpu.memory_space<vmem>>, %arg6: memref<2x128x32xbf16, #tpu.memory_space<vmem>>, %arg7: memref<14x32xf32, #tpu.memory_space<vmem>>, %arg8: memref<35x128xf32, #tpu.memory_space<vmem>>, %arg9: memref<24x128xf32, #tpu.memory_space<vmem>>) attributes {dimension_semantics = [], scalar_prefetch = 0 : i64, scratch_operands = 0 : i64, tpu.core_type = #tpu.core_type<tc>} {
    %c0 = arith.constant 0 : index
    %c0_0 = arith.constant 0 : index
    %0 = vector.load %arg0[%c0, %c0_0] : memref<16x1xi32, #tpu.memory_space<vmem>>, vector<16x1xi32>
    %c0_1 = arith.constant 0 : index
    %c0_2 = arith.constant 0 : index
    %1 = vector.load %arg1[%c0_1, %c0_2] : memref<16x1xi32, #tpu.memory_space<vmem>>, vector<16x1xi32>
    %2 = tpu.iota {dimensions = array<i32: 1>} : vector<16x24xi32>
    %3 = tpu.iota {dimensions = array<i32: 0>} : vector<16x24xi32>
    %c7_i32 = arith.constant 7 : i32
    %4 = vector.broadcast %c7_i32 : i32 to vector<16x24xi32>
    %5 = arith.andi %3, %4 : vector<16x24xi32>
    %6 = vector.broadcast %0 : vector<16x1xi32> to vector<16x24xi32>
    %7 = arith.cmpi eq, %2, %6 : vector<16x24xi32>
    %c16_i32 = arith.constant 16 : i32
    %8 = vector.broadcast %c16_i32 : i32 to vector<16x24xi32>
    %9 = arith.addi %8, %5 : vector<16x24xi32>
    %10 = arith.cmpi eq, %2, %9 : vector<16x24xi32>
    %11 = arith.ori %7, %10 : vector<16x24xi1>
    %12 = arith.extui %11 : vector<16x24xi1> to vector<16x24xi32>
    %13 = arith.sitofp %12 : vector<16x24xi32> to vector<16x24xf32>
    %c0_3 = arith.constant 0 : index
    %c0_4 = arith.constant 0 : index
    %14 = vector.load %arg2[%c0_3, %c0_4] : memref<24x32xf32, #tpu.memory_space<vmem>>, vector<24x32xf32>
    %cst = arith.constant dense<0.000000e+00> : vector<16x32xf32>
    %15 = tpu.matmul %13, %14, %cst {dimension_numbers = #tpu.dot_dimension_numbers<[1], [0], [0], [1], [0, 0, 1, 1], [], []>} : vector<16x24xf32>, vector<24x32xf32>, vector<16x32xf32> -> vector<16x32xf32>
    %16 = tpu.iota {dimensions = array<i32: 0>} : vector<16x16xi32>
    %17 = tpu.iota {dimensions = array<i32: 1>} : vector<16x16xi32>
    %c3_i32 = arith.constant 3 : i32
    %18 = vector.broadcast %c3_i32 : i32 to vector<16x16xi32>
    %19 = arith.shrsi %16, %18 : vector<16x16xi32>
    %c3_i32_5 = arith.constant 3 : i32
    %20 = vector.broadcast %c3_i32_5 : i32 to vector<16x16xi32>
    %21 = arith.shrsi %17, %20 : vector<16x16xi32>
    %22 = arith.cmpi eq, %19, %21 : vector<16x16xi32>
    %23 = arith.cmpi sle, %17, %16 : vector<16x16xi32>
    %24 = arith.andi %22, %23 : vector<16x16xi1>
    %cst_6 = arith.constant 0.000000e+00 : f32
    %cst_7 = arith.constant -1.000000e+30 : f32
    %25 = vector.broadcast %cst_6 : f32 to vector<16x16xf32>
    %26 = vector.broadcast %cst_7 : f32 to vector<16x16xf32>
    %27 = arith.select %24, %25, %26 : vector<16x16xi1>, vector<16x16xf32>
    %c0_8 = arith.constant 0 : index
    %c0_9 = arith.constant 0 : index
    %28 = vector.load %arg7[%c0_8, %c0_9] : memref<14x32xf32, #tpu.memory_space<vmem>>, vector<1x32xf32>
    %c1 = arith.constant 1 : index
    %c0_10 = arith.constant 0 : index
    %29 = vector.load %arg7[%c1, %c0_10] : memref<14x32xf32, #tpu.memory_space<vmem>>, vector<1x32xf32>
    %c2 = arith.constant 2 : index
    %c0_11 = arith.constant 0 : index
    %30 = vector.load %arg7[%c2, %c0_11] : memref<14x32xf32, #tpu.memory_space<vmem>>, vector<1x32xf32>
    %c3 = arith.constant 3 : index
    %c0_12 = arith.constant 0 : index
    %31 = vector.load %arg7[%c3, %c0_12] : memref<14x32xf32, #tpu.memory_space<vmem>>, vector<1x32xf32>
    %c4 = arith.constant 4 : index
    %c0_13 = arith.constant 0 : index
    %32 = vector.load %arg7[%c4, %c0_13] : memref<14x32xf32, #tpu.memory_space<vmem>>, vector<1x32xf32>
    %c5 = arith.constant 5 : index
    %c0_14 = arith.constant 0 : index
    %33 = vector.load %arg7[%c5, %c0_14] : memref<14x32xf32, #tpu.memory_space<vmem>>, vector<1x32xf32>
    %c33 = arith.constant 33 : index
    %c0_15 = arith.constant 0 : index
    %34 = vector.load %arg8[%c33, %c0_15] : memref<35x128xf32, #tpu.memory_space<vmem>>, vector<1x128xf32>
    %cst_16 = arith.constant dense<0.000000e+00> : vector<16xf32>
    %35 = vector.multi_reduction <add>, %15, %cst_16 [1] : vector<16x32xf32> to vector<16xf32>
    %36 = vector.shape_cast %35 : vector<16xf32> to vector<16x1xf32>
    %cst_17 = arith.constant 3.200000e+01 : f32
    %37 = vector.broadcast %cst_17 : f32 to vector<16x1xf32>
    %38 = arith.divf %36, %37 : vector<16x1xf32>
    %39 = vector.broadcast %38 : vector<16x1xf32> to vector<16x32xf32>
    %40 = arith.subf %15, %39 : vector<16x32xf32>
    %41 = arith.mulf %40, %40 : vector<16x32xf32>
    %cst_18 = arith.constant dense<0.000000e+00> : vector<16xf32>
    %42 = vector.multi_reduction <add>, %41, %cst_18 [1] : vector<16x32xf32> to vector<16xf32>
    %43 = vector.shape_cast %42 : vector<16xf32> to vector<16x1xf32>
    %cst_19 = arith.constant 3.200000e+01 : f32
    %44 = vector.broadcast %cst_19 : f32 to vector<16x1xf32>
    %45 = arith.divf %43, %44 : vector<16x1xf32>
    %46 = vector.broadcast %38 : vector<16x1xf32> to vector<16x32xf32>
    %47 = arith.subf %15, %46 : vector<16x32xf32>
    %cst_20 = arith.constant 9.99999974E-6 : f32
    %48 = vector.broadcast %cst_20 : f32 to vector<16x1xf32>
    %49 = arith.addf %45, %48 : vector<16x1xf32>
    %50 = math.rsqrt %49 : vector<16x1xf32>
    %51 = vector.broadcast %50 : vector<16x1xf32> to vector<16x32xf32>
    %52 = arith.mulf %47, %51 : vector<16x32xf32>
    %53 = vector.broadcast %28 : vector<1x32xf32> to vector<16x32xf32>
    %54 = arith.mulf %52, %53 : vector<16x32xf32>
    %55 = vector.broadcast %29 : vector<1x32xf32> to vector<16x32xf32>
    %56 = arith.addf %54, %55 : vector<16x32xf32>
    %57 = arith.truncf %56 : vector<16x32xf32> to vector<16x32xbf16>
    %c0_21 = arith.constant 0 : index
    %c0_22 = arith.constant 0 : index
    %c0_23 = arith.constant 0 : index
    %58 = vector.load %arg3[%c0_21, %c0_22, %c0_23] : memref<2x32x96xbf16, #tpu.memory_space<vmem>>, vector<1x32x96xbf16>
    %59 = vector.shape_cast %58 : vector<1x32x96xbf16> to vector<32x96xbf16>
    %cst_24 = arith.constant dense<0.000000e+00> : vector<16x96xf32>
    %60 = tpu.matmul %57, %59, %cst_24 {dimension_numbers = #tpu.dot_dimension_numbers<[1], [0], [0], [1], [0, 0, 1, 1], [], []>} : vector<16x32xbf16>, vector<32x96xbf16>, vector<16x96xf32> -> vector<16x96xf32>
    %61 = vector.extract_strided_slice %60 {offsets = [0, 0], sizes = [16, 8], strides = [1, 1]} : vector<16x96xf32> to vector<16x8xf32>
    %62 = vector.extract_strided_slice %60 {offsets = [0, 32], sizes = [16, 8], strides = [1, 1]} : vector<16x96xf32> to vector<16x8xf32>
    %63 = vector.extract_strided_slice %60 {offsets = [0, 64], sizes = [16, 8], strides = [1, 1]} : vector<16x96xf32> to vector<16x8xf32>
    %64 = tpu.transpose %62, [1, 0] : vector<16x8xf32> -> vector<8x16xf32>
    %cst_25 = arith.constant dense<0.000000e+00> : vector<16x16xf32>
    %65 = tpu.matmul %61, %64, %cst_25 {dimension_numbers = #tpu.dot_dimension_numbers<[1], [0], [0], [1], [0, 0, 1, 1], [], []>} : vector<16x8xf32>, vector<8x16xf32>, vector<16x16xf32> -> vector<16x16xf32>
    %cst_26 = arith.constant 0.353553385 : f32
    %66 = vector.broadcast %cst_26 : f32 to vector<16x16xf32>
    %67 = arith.mulf %65, %66 : vector<16x16xf32>
    %68 = arith.addf %67, %27 : vector<16x16xf32>
    %cst_27 = arith.constant dense<0xFF800000> : vector<16xf32>
    %69 = vector.multi_reduction <maximumf>, %68, %cst_27 [1] : vector<16x16xf32> to vector<16xf32>
    %70 = vector.shape_cast %69 : vector<16xf32> to vector<16x1xf32>
    %71 = vector.broadcast %70 : vector<16x1xf32> to vector<16x16xf32>
    %72 = arith.subf %68, %71 : vector<16x16xf32>
    %73 = math.exp %72 : vector<16x16xf32>
    %cst_28 = arith.constant dense<0.000000e+00> : vector<16xf32>
    %74 = vector.multi_reduction <add>, %73, %cst_28 [1] : vector<16x16xf32> to vector<16xf32>
    %75 = vector.shape_cast %74 : vector<16xf32> to vector<16x1xf32>
    %76 = tpu.reciprocal %75 {approx = true} : vector<16x1xf32> -> vector<16x1xf32>
    %77 = vector.broadcast %76 : vector<16x1xf32> to vector<16x16xf32>
    %78 = arith.mulf %73, %77 : vector<16x16xf32>
    %cst_29 = arith.constant dense<0.000000e+00> : vector<16x8xf32>
    %79 = tpu.matmul %78, %63, %cst_29 {dimension_numbers = #tpu.dot_dimension_numbers<[1], [0], [0], [1], [0, 0, 1, 1], [], []>} : vector<16x16xf32>, vector<16x8xf32>, vector<16x8xf32> -> vector<16x8xf32>
    %80 = vector.extract_strided_slice %60 {offsets = [0, 8], sizes = [16, 8], strides = [1, 1]} : vector<16x96xf32> to vector<16x8xf32>
    %81 = vector.extract_strided_slice %60 {offsets = [0, 40], sizes = [16, 8], strides = [1, 1]} : vector<16x96xf32> to vector<16x8xf32>
    %82 = vector.extract_strided_slice %60 {offsets = [0, 72], sizes = [16, 8], strides = [1, 1]} : vector<16x96xf32> to vector<16x8xf32>
    %83 = tpu.transpose %81, [1, 0] : vector<16x8xf32> -> vector<8x16xf32>
    %cst_30 = arith.constant dense<0.000000e+00> : vector<16x16xf32>
    %84 = tpu.matmul %80, %83, %cst_30 {dimension_numbers = #tpu.dot_dimension_numbers<[1], [0], [0], [1], [0, 0, 1, 1], [], []>} : vector<16x8xf32>, vector<8x16xf32>, vector<16x16xf32> -> vector<16x16xf32>
    %cst_31 = arith.constant 0.353553385 : f32
    %85 = vector.broadcast %cst_31 : f32 to vector<16x16xf32>
    %86 = arith.mulf %84, %85 : vector<16x16xf32>
    %87 = arith.addf %86, %27 : vector<16x16xf32>
    %cst_32 = arith.constant dense<0xFF800000> : vector<16xf32>
    %88 = vector.multi_reduction <maximumf>, %87, %cst_32 [1] : vector<16x16xf32> to vector<16xf32>
    %89 = vector.shape_cast %88 : vector<16xf32> to vector<16x1xf32>
    %90 = vector.broadcast %89 : vector<16x1xf32> to vector<16x16xf32>
    %91 = arith.subf %87, %90 : vector<16x16xf32>
    %92 = math.exp %91 : vector<16x16xf32>
    %cst_33 = arith.constant dense<0.000000e+00> : vector<16xf32>
    %93 = vector.multi_reduction <add>, %92, %cst_33 [1] : vector<16x16xf32> to vector<16xf32>
    %94 = vector.shape_cast %93 : vector<16xf32> to vector<16x1xf32>
    %95 = tpu.reciprocal %94 {approx = true} : vector<16x1xf32> -> vector<16x1xf32>
    %96 = vector.broadcast %95 : vector<16x1xf32> to vector<16x16xf32>
    %97 = arith.mulf %92, %96 : vector<16x16xf32>
    %cst_34 = arith.constant dense<0.000000e+00> : vector<16x8xf32>
    %98 = tpu.matmul %97, %82, %cst_34 {dimension_numbers = #tpu.dot_dimension_numbers<[1], [0], [0], [1], [0, 0, 1, 1], [], []>} : vector<16x16xf32>, vector<16x8xf32>, vector<16x8xf32> -> vector<16x8xf32>
    %99 = vector.extract_strided_slice %60 {offsets = [0, 16], sizes = [16, 8], strides = [1, 1]} : vector<16x96xf32> to vector<16x8xf32>
    %100 = vector.extract_strided_slice %60 {offsets = [0, 48], sizes = [16, 8], strides = [1, 1]} : vector<16x96xf32> to vector<16x8xf32>
    %101 = vector.extract_strided_slice %60 {offsets = [0, 80], sizes = [16, 8], strides = [1, 1]} : vector<16x96xf32> to vector<16x8xf32>
    %102 = tpu.transpose %100, [1, 0] : vector<16x8xf32> -> vector<8x16xf32>
    %cst_35 = arith.constant dense<0.000000e+00> : vector<16x16xf32>
    %103 = tpu.matmul %99, %102, %cst_35 {dimension_numbers = #tpu.dot_dimension_numbers<[1], [0], [0], [1], [0, 0, 1, 1], [], []>} : vector<16x8xf32>, vector<8x16xf32>, vector<16x16xf32> -> vector<16x16xf32>
    %cst_36 = arith.constant 0.353553385 : f32
    %104 = vector.broadcast %cst_36 : f32 to vector<16x16xf32>
    %105 = arith.mulf %103, %104 : vector<16x16xf32>
    %106 = arith.addf %105, %27 : vector<16x16xf32>
    %cst_37 = arith.constant dense<0xFF800000> : vector<16xf32>
    %107 = vector.multi_reduction <maximumf>, %106, %cst_37 [1] : vector<16x16xf32> to vector<16xf32>
    %108 = vector.shape_cast %107 : vector<16xf32> to vector<16x1xf32>
    %109 = vector.broadcast %108 : vector<16x1xf32> to vector<16x16xf32>
    %110 = arith.subf %106, %109 : vector<16x16xf32>
    %111 = math.exp %110 : vector<16x16xf32>
    %cst_38 = arith.constant dense<0.000000e+00> : vector<16xf32>
    %112 = vector.multi_reduction <add>, %111, %cst_38 [1] : vector<16x16xf32> to vector<16xf32>
    %113 = vector.shape_cast %112 : vector<16xf32> to vector<16x1xf32>
    %114 = tpu.reciprocal %113 {approx = true} : vector<16x1xf32> -> vector<16x1xf32>
    %115 = vector.broadcast %114 : vector<16x1xf32> to vector<16x16xf32>
    %116 = arith.mulf %111, %115 : vector<16x16xf32>
    %cst_39 = arith.constant dense<0.000000e+00> : vector<16x8xf32>
    %117 = tpu.matmul %116, %101, %cst_39 {dimension_numbers = #tpu.dot_dimension_numbers<[1], [0], [0], [1], [0, 0, 1, 1], [], []>} : vector<16x16xf32>, vector<16x8xf32>, vector<16x8xf32> -> vector<16x8xf32>
    %118 = vector.extract_strided_slice %60 {offsets = [0, 24], sizes = [16, 8], strides = [1, 1]} : vector<16x96xf32> to vector<16x8xf32>
    %119 = vector.extract_strided_slice %60 {offsets = [0, 56], sizes = [16, 8], strides = [1, 1]} : vector<16x96xf32> to vector<16x8xf32>
    %120 = vector.extract_strided_slice %60 {offsets = [0, 88], sizes = [16, 8], strides = [1, 1]} : vector<16x96xf32> to vector<16x8xf32>
    %121 = tpu.transpose %119, [1, 0] : vector<16x8xf32> -> vector<8x16xf32>
    %cst_40 = arith.constant dense<0.000000e+00> : vector<16x16xf32>
    %122 = tpu.matmul %118, %121, %cst_40 {dimension_numbers = #tpu.dot_dimension_numbers<[1], [0], [0], [1], [0, 0, 1, 1], [], []>} : vector<16x8xf32>, vector<8x16xf32>, vector<16x16xf32> -> vector<16x16xf32>
    %cst_41 = arith.constant 0.353553385 : f32
    %123 = vector.broadcast %cst_41 : f32 to vector<16x16xf32>
    %124 = arith.mulf %122, %123 : vector<16x16xf32>
    %125 = arith.addf %124, %27 : vector<16x16xf32>
    %cst_42 = arith.constant dense<0xFF800000> : vector<16xf32>
    %126 = vector.multi_reduction <maximumf>, %125, %cst_42 [1] : vector<16x16xf32> to vector<16xf32>
    %127 = vector.shape_cast %126 : vector<16xf32> to vector<16x1xf32>
    %128 = vector.broadcast %127 : vector<16x1xf32> to vector<16x16xf32>
    %129 = arith.subf %125, %128 : vector<16x16xf32>
    %130 = math.exp %129 : vector<16x16xf32>
    %cst_43 = arith.constant dense<0.000000e+00> : vector<16xf32>
    %131 = vector.multi_reduction <add>, %130, %cst_43 [1] : vector<16x16xf32> to vector<16xf32>
    %132 = vector.shape_cast %131 : vector<16xf32> to vector<16x1xf32>
    %133 = tpu.reciprocal %132 {approx = true} : vector<16x1xf32> -> vector<16x1xf32>
    %134 = vector.broadcast %133 : vector<16x1xf32> to vector<16x16xf32>
    %135 = arith.mulf %130, %134 : vector<16x16xf32>
    %cst_44 = arith.constant dense<0.000000e+00> : vector<16x8xf32>
    %136 = tpu.matmul %135, %120, %cst_44 {dimension_numbers = #tpu.dot_dimension_numbers<[1], [0], [0], [1], [0, 0, 1, 1], [], []>} : vector<16x16xf32>, vector<16x8xf32>, vector<16x8xf32> -> vector<16x8xf32>
    %137 = tpu.concatenate %79, %98, %117, %136 in 1 : vector<16x8xf32>, vector<16x8xf32>, vector<16x8xf32>, vector<16x8xf32> -> vector<16x32xf32>
    %138 = arith.truncf %137 : vector<16x32xf32> to vector<16x32xbf16>
    %c0_45 = arith.constant 0 : index
    %c0_46 = arith.constant 0 : index
    %c0_47 = arith.constant 0 : index
    %139 = vector.load %arg4[%c0_45, %c0_46, %c0_47] : memref<2x32x32xbf16, #tpu.memory_space<vmem>>, vector<1x32x32xbf16>
    %140 = vector.shape_cast %139 : vector<1x32x32xbf16> to vector<32x32xbf16>
    %cst_48 = arith.constant dense<0.000000e+00> : vector<16x32xf32>
    %141 = tpu.matmul %138, %140, %cst_48 {dimension_numbers = #tpu.dot_dimension_numbers<[1], [0], [0], [1], [0, 0, 1, 1], [], []>} : vector<16x32xbf16>, vector<32x32xbf16>, vector<16x32xf32> -> vector<16x32xf32>
    %142 = vector.broadcast %30 : vector<1x32xf32> to vector<16x32xf32>
    %143 = arith.addf %141, %142 : vector<16x32xf32>
    %144 = arith.addf %15, %143 : vector<16x32xf32>
    %cst_49 = arith.constant dense<0.000000e+00> : vector<16xf32>
    %145 = vector.multi_reduction <add>, %144, %cst_49 [1] : vector<16x32xf32> to vector<16xf32>
    %146 = vector.shape_cast %145 : vector<16xf32> to vector<16x1xf32>
    %cst_50 = arith.constant 3.200000e+01 : f32
    %147 = vector.broadcast %cst_50 : f32 to vector<16x1xf32>
    %148 = arith.divf %146, %147 : vector<16x1xf32>
    %149 = vector.broadcast %148 : vector<16x1xf32> to vector<16x32xf32>
    %150 = arith.subf %144, %149 : vector<16x32xf32>
    %151 = arith.mulf %150, %150 : vector<16x32xf32>
    %cst_51 = arith.constant dense<0.000000e+00> : vector<16xf32>
    %152 = vector.multi_reduction <add>, %151, %cst_51 [1] : vector<16x32xf32> to vector<16xf32>
    %153 = vector.shape_cast %152 : vector<16xf32> to vector<16x1xf32>
    %cst_52 = arith.constant 3.200000e+01 : f32
    %154 = vector.broadcast %cst_52 : f32 to vector<16x1xf32>
    %155 = arith.divf %153, %154 : vector<16x1xf32>
    %156 = vector.broadcast %148 : vector<16x1xf32> to vector<16x32xf32>
    %157 = arith.subf %144, %156 : vector<16x32xf32>
    %cst_53 = arith.constant 9.99999974E-6 : f32
    %158 = vector.broadcast %cst_53 : f32 to vector<16x1xf32>
    %159 = arith.addf %155, %158 : vector<16x1xf32>
    %160 = math.rsqrt %159 : vector<16x1xf32>
    %161 = vector.broadcast %160 : vector<16x1xf32> to vector<16x32xf32>
    %162 = arith.mulf %157, %161 : vector<16x32xf32>
    %163 = vector.broadcast %31 : vector<1x32xf32> to vector<16x32xf32>
    %164 = arith.mulf %162, %163 : vector<16x32xf32>
    %165 = vector.broadcast %32 : vector<1x32xf32> to vector<16x32xf32>
    %166 = arith.addf %164, %165 : vector<16x32xf32>
    %167 = arith.truncf %166 : vector<16x32xf32> to vector<16x32xbf16>
    %c0_54 = arith.constant 0 : index
    %c0_55 = arith.constant 0 : index
    %c0_56 = arith.constant 0 : index
    %168 = vector.load %arg5[%c0_54, %c0_55, %c0_56] : memref<2x32x128xbf16, #tpu.memory_space<vmem>>, vector<1x32x128xbf16>
    %169 = vector.shape_cast %168 : vector<1x32x128xbf16> to vector<32x128xbf16>
    %cst_57 = arith.constant dense<0.000000e+00> : vector<16x128xf32>
    %170 = tpu.matmul %167, %169, %cst_57 {dimension_numbers = #tpu.dot_dimension_numbers<[1], [0], [0], [1], [0, 0, 1, 1], [], []>} : vector<16x32xbf16>, vector<32x128xbf16>, vector<16x128xf32> -> vector<16x128xf32>
    %171 = vector.broadcast %34 : vector<1x128xf32> to vector<16x128xf32>
    %172 = arith.addf %170, %171 : vector<16x128xf32>
    %cst_58 = arith.constant 0.000000e+00 : f32
    %173 = vector.broadcast %cst_58 : f32 to vector<16x128xf32>
    %174 = arith.maximumf %172, %173 : vector<16x128xf32>
    %175 = arith.truncf %174 : vector<16x128xf32> to vector<16x128xbf16>
    %c0_59 = arith.constant 0 : index
    %c0_60 = arith.constant 0 : index
    %c0_61 = arith.constant 0 : index
    %176 = vector.load %arg6[%c0_59, %c0_60, %c0_61] : memref<2x128x32xbf16, #tpu.memory_space<vmem>>, vector<1x128x32xbf16>
    %177 = vector.shape_cast %176 : vector<1x128x32xbf16> to vector<128x32xbf16>
    %cst_62 = arith.constant dense<0.000000e+00> : vector<16x32xf32>
    %178 = tpu.matmul %175, %177, %cst_62 {dimension_numbers = #tpu.dot_dimension_numbers<[1], [0], [0], [1], [0, 0, 1, 1], [], []>} : vector<16x128xbf16>, vector<128x32xbf16>, vector<16x32xf32> -> vector<16x32xf32>
    %179 = vector.broadcast %33 : vector<1x32xf32> to vector<16x32xf32>
    %180 = arith.addf %178, %179 : vector<16x32xf32>
    %181 = arith.addf %144, %180 : vector<16x32xf32>
    %c6 = arith.constant 6 : index
    %c0_63 = arith.constant 0 : index
    %182 = vector.load %arg7[%c6, %c0_63] : memref<14x32xf32, #tpu.memory_space<vmem>>, vector<1x32xf32>
    %c7 = arith.constant 7 : index
    %c0_64 = arith.constant 0 : index
    %183 = vector.load %arg7[%c7, %c0_64] : memref<14x32xf32, #tpu.memory_space<vmem>>, vector<1x32xf32>
    %c8 = arith.constant 8 : index
    %c0_65 = arith.constant 0 : index
    %184 = vector.load %arg7[%c8, %c0_65] : memref<14x32xf32, #tpu.memory_space<vmem>>, vector<1x32xf32>
    %c9 = arith.constant 9 : index
    %c0_66 = arith.constant 0 : index
    %185 = vector.load %arg7[%c9, %c0_66] : memref<14x32xf32, #tpu.memory_space<vmem>>, vector<1x32xf32>
    %c10 = arith.constant 10 : index
    %c0_67 = arith.constant 0 : index
    %186 = vector.load %arg7[%c10, %c0_67] : memref<14x32xf32, #tpu.memory_space<vmem>>, vector<1x32xf32>
    %c11 = arith.constant 11 : index
    %c0_68 = arith.constant 0 : index
    %187 = vector.load %arg7[%c11, %c0_68] : memref<14x32xf32, #tpu.memory_space<vmem>>, vector<1x32xf32>
    %c34 = arith.constant 34 : index
    %c0_69 = arith.constant 0 : index
    %188 = vector.load %arg8[%c34, %c0_69] : memref<35x128xf32, #tpu.memory_space<vmem>>, vector<1x128xf32>
    %cst_70 = arith.constant dense<0.000000e+00> : vector<16xf32>
    %189 = vector.multi_reduction <add>, %181, %cst_70 [1] : vector<16x32xf32> to vector<16xf32>
    %190 = vector.shape_cast %189 : vector<16xf32> to vector<16x1xf32>
    %cst_71 = arith.constant 3.200000e+01 : f32
    %191 = vector.broadcast %cst_71 : f32 to vector<16x1xf32>
    %192 = arith.divf %190, %191 : vector<16x1xf32>
    %193 = vector.broadcast %192 : vector<16x1xf32> to vector<16x32xf32>
    %194 = arith.subf %181, %193 : vector<16x32xf32>
    %195 = arith.mulf %194, %194 : vector<16x32xf32>
    %cst_72 = arith.constant dense<0.000000e+00> : vector<16xf32>
    %196 = vector.multi_reduction <add>, %195, %cst_72 [1] : vector<16x32xf32> to vector<16xf32>
    %197 = vector.shape_cast %196 : vector<16xf32> to vector<16x1xf32>
    %cst_73 = arith.constant 3.200000e+01 : f32
    %198 = vector.broadcast %cst_73 : f32 to vector<16x1xf32>
    %199 = arith.divf %197, %198 : vector<16x1xf32>
    %200 = vector.broadcast %192 : vector<16x1xf32> to vector<16x32xf32>
    %201 = arith.subf %181, %200 : vector<16x32xf32>
    %cst_74 = arith.constant 9.99999974E-6 : f32
    %202 = vector.broadcast %cst_74 : f32 to vector<16x1xf32>
    %203 = arith.addf %199, %202 : vector<16x1xf32>
    %204 = math.rsqrt %203 : vector<16x1xf32>
    %205 = vector.broadcast %204 : vector<16x1xf32> to vector<16x32xf32>
    %206 = arith.mulf %201, %205 : vector<16x32xf32>
    %207 = vector.broadcast %182 : vector<1x32xf32> to vector<16x32xf32>
    %208 = arith.mulf %206, %207 : vector<16x32xf32>
    %209 = vector.broadcast %183 : vector<1x32xf32> to vector<16x32xf32>
    %210 = arith.addf %208, %209 : vector<16x32xf32>
    %211 = arith.truncf %210 : vector<16x32xf32> to vector<16x32xbf16>
    %c1_75 = arith.constant 1 : index
    %c0_76 = arith.constant 0 : index
    %c0_77 = arith.constant 0 : index
    %212 = vector.load %arg3[%c1_75, %c0_76, %c0_77] : memref<2x32x96xbf16, #tpu.memory_space<vmem>>, vector<1x32x96xbf16>
    %213 = vector.shape_cast %212 : vector<1x32x96xbf16> to vector<32x96xbf16>
    %cst_78 = arith.constant dense<0.000000e+00> : vector<16x96xf32>
    %214 = tpu.matmul %211, %213, %cst_78 {dimension_numbers = #tpu.dot_dimension_numbers<[1], [0], [0], [1], [0, 0, 1, 1], [], []>} : vector<16x32xbf16>, vector<32x96xbf16>, vector<16x96xf32> -> vector<16x96xf32>
    %215 = vector.extract_strided_slice %214 {offsets = [0, 0], sizes = [16, 8], strides = [1, 1]} : vector<16x96xf32> to vector<16x8xf32>
    %216 = vector.extract_strided_slice %214 {offsets = [0, 32], sizes = [16, 8], strides = [1, 1]} : vector<16x96xf32> to vector<16x8xf32>
    %217 = vector.extract_strided_slice %214 {offsets = [0, 64], sizes = [16, 8], strides = [1, 1]} : vector<16x96xf32> to vector<16x8xf32>
    %218 = tpu.transpose %216, [1, 0] : vector<16x8xf32> -> vector<8x16xf32>
    %cst_79 = arith.constant dense<0.000000e+00> : vector<16x16xf32>
    %219 = tpu.matmul %215, %218, %cst_79 {dimension_numbers = #tpu.dot_dimension_numbers<[1], [0], [0], [1], [0, 0, 1, 1], [], []>} : vector<16x8xf32>, vector<8x16xf32>, vector<16x16xf32> -> vector<16x16xf32>
    %cst_80 = arith.constant 0.353553385 : f32
    %220 = vector.broadcast %cst_80 : f32 to vector<16x16xf32>
    %221 = arith.mulf %219, %220 : vector<16x16xf32>
    %222 = arith.addf %221, %27 : vector<16x16xf32>
    %cst_81 = arith.constant dense<0xFF800000> : vector<16xf32>
    %223 = vector.multi_reduction <maximumf>, %222, %cst_81 [1] : vector<16x16xf32> to vector<16xf32>
    %224 = vector.shape_cast %223 : vector<16xf32> to vector<16x1xf32>
    %225 = vector.broadcast %224 : vector<16x1xf32> to vector<16x16xf32>
    %226 = arith.subf %222, %225 : vector<16x16xf32>
    %227 = math.exp %226 : vector<16x16xf32>
    %cst_82 = arith.constant dense<0.000000e+00> : vector<16xf32>
    %228 = vector.multi_reduction <add>, %227, %cst_82 [1] : vector<16x16xf32> to vector<16xf32>
    %229 = vector.shape_cast %228 : vector<16xf32> to vector<16x1xf32>
    %230 = tpu.reciprocal %229 {approx = true} : vector<16x1xf32> -> vector<16x1xf32>
    %231 = vector.broadcast %230 : vector<16x1xf32> to vector<16x16xf32>
    %232 = arith.mulf %227, %231 : vector<16x16xf32>
    %cst_83 = arith.constant dense<0.000000e+00> : vector<16x8xf32>
    %233 = tpu.matmul %232, %217, %cst_83 {dimension_numbers = #tpu.dot_dimension_numbers<[1], [0], [0], [1], [0, 0, 1, 1], [], []>} : vector<16x16xf32>, vector<16x8xf32>, vector<16x8xf32> -> vector<16x8xf32>
    %234 = vector.extract_strided_slice %214 {offsets = [0, 8], sizes = [16, 8], strides = [1, 1]} : vector<16x96xf32> to vector<16x8xf32>
    %235 = vector.extract_strided_slice %214 {offsets = [0, 40], sizes = [16, 8], strides = [1, 1]} : vector<16x96xf32> to vector<16x8xf32>
    %236 = vector.extract_strided_slice %214 {offsets = [0, 72], sizes = [16, 8], strides = [1, 1]} : vector<16x96xf32> to vector<16x8xf32>
    %237 = tpu.transpose %235, [1, 0] : vector<16x8xf32> -> vector<8x16xf32>
    %cst_84 = arith.constant dense<0.000000e+00> : vector<16x16xf32>
    %238 = tpu.matmul %234, %237, %cst_84 {dimension_numbers = #tpu.dot_dimension_numbers<[1], [0], [0], [1], [0, 0, 1, 1], [], []>} : vector<16x8xf32>, vector<8x16xf32>, vector<16x16xf32> -> vector<16x16xf32>
    %cst_85 = arith.constant 0.353553385 : f32
    %239 = vector.broadcast %cst_85 : f32 to vector<16x16xf32>
    %240 = arith.mulf %238, %239 : vector<16x16xf32>
    %241 = arith.addf %240, %27 : vector<16x16xf32>
    %cst_86 = arith.constant dense<0xFF800000> : vector<16xf32>
    %242 = vector.multi_reduction <maximumf>, %241, %cst_86 [1] : vector<16x16xf32> to vector<16xf32>
    %243 = vector.shape_cast %242 : vector<16xf32> to vector<16x1xf32>
    %244 = vector.broadcast %243 : vector<16x1xf32> to vector<16x16xf32>
    %245 = arith.subf %241, %244 : vector<16x16xf32>
    %246 = math.exp %245 : vector<16x16xf32>
    %cst_87 = arith.constant dense<0.000000e+00> : vector<16xf32>
    %247 = vector.multi_reduction <add>, %246, %cst_87 [1] : vector<16x16xf32> to vector<16xf32>
    %248 = vector.shape_cast %247 : vector<16xf32> to vector<16x1xf32>
    %249 = tpu.reciprocal %248 {approx = true} : vector<16x1xf32> -> vector<16x1xf32>
    %250 = vector.broadcast %249 : vector<16x1xf32> to vector<16x16xf32>
    %251 = arith.mulf %246, %250 : vector<16x16xf32>
    %cst_88 = arith.constant dense<0.000000e+00> : vector<16x8xf32>
    %252 = tpu.matmul %251, %236, %cst_88 {dimension_numbers = #tpu.dot_dimension_numbers<[1], [0], [0], [1], [0, 0, 1, 1], [], []>} : vector<16x16xf32>, vector<16x8xf32>, vector<16x8xf32> -> vector<16x8xf32>
    %253 = vector.extract_strided_slice %214 {offsets = [0, 16], sizes = [16, 8], strides = [1, 1]} : vector<16x96xf32> to vector<16x8xf32>
    %254 = vector.extract_strided_slice %214 {offsets = [0, 48], sizes = [16, 8], strides = [1, 1]} : vector<16x96xf32> to vector<16x8xf32>
    %255 = vector.extract_strided_slice %214 {offsets = [0, 80], sizes = [16, 8], strides = [1, 1]} : vector<16x96xf32> to vector<16x8xf32>
    %256 = tpu.transpose %254, [1, 0] : vector<16x8xf32> -> vector<8x16xf32>
    %cst_89 = arith.constant dense<0.000000e+00> : vector<16x16xf32>
    %257 = tpu.matmul %253, %256, %cst_89 {dimension_numbers = #tpu.dot_dimension_numbers<[1], [0], [0], [1], [0, 0, 1, 1], [], []>} : vector<16x8xf32>, vector<8x16xf32>, vector<16x16xf32> -> vector<16x16xf32>
    %cst_90 = arith.constant 0.353553385 : f32
    %258 = vector.broadcast %cst_90 : f32 to vector<16x16xf32>
    %259 = arith.mulf %257, %258 : vector<16x16xf32>
    %260 = arith.addf %259, %27 : vector<16x16xf32>
    %cst_91 = arith.constant dense<0xFF800000> : vector<16xf32>
    %261 = vector.multi_reduction <maximumf>, %260, %cst_91 [1] : vector<16x16xf32> to vector<16xf32>
    %262 = vector.shape_cast %261 : vector<16xf32> to vector<16x1xf32>
    %263 = vector.broadcast %262 : vector<16x1xf32> to vector<16x16xf32>
    %264 = arith.subf %260, %263 : vector<16x16xf32>
    %265 = math.exp %264 : vector<16x16xf32>
    %cst_92 = arith.constant dense<0.000000e+00> : vector<16xf32>
    %266 = vector.multi_reduction <add>, %265, %cst_92 [1] : vector<16x16xf32> to vector<16xf32>
    %267 = vector.shape_cast %266 : vector<16xf32> to vector<16x1xf32>
    %268 = tpu.reciprocal %267 {approx = true} : vector<16x1xf32> -> vector<16x1xf32>
    %269 = vector.broadcast %268 : vector<16x1xf32> to vector<16x16xf32>
    %270 = arith.mulf %265, %269 : vector<16x16xf32>
    %cst_93 = arith.constant dense<0.000000e+00> : vector<16x8xf32>
    %271 = tpu.matmul %270, %255, %cst_93 {dimension_numbers = #tpu.dot_dimension_numbers<[1], [0], [0], [1], [0, 0, 1, 1], [], []>} : vector<16x16xf32>, vector<16x8xf32>, vector<16x8xf32> -> vector<16x8xf32>
    %272 = vector.extract_strided_slice %214 {offsets = [0, 24], sizes = [16, 8], strides = [1, 1]} : vector<16x96xf32> to vector<16x8xf32>
    %273 = vector.extract_strided_slice %214 {offsets = [0, 56], sizes = [16, 8], strides = [1, 1]} : vector<16x96xf32> to vector<16x8xf32>
    %274 = vector.extract_strided_slice %214 {offsets = [0, 88], sizes = [16, 8], strides = [1, 1]} : vector<16x96xf32> to vector<16x8xf32>
    %275 = tpu.transpose %273, [1, 0] : vector<16x8xf32> -> vector<8x16xf32>
    %cst_94 = arith.constant dense<0.000000e+00> : vector<16x16xf32>
    %276 = tpu.matmul %272, %275, %cst_94 {dimension_numbers = #tpu.dot_dimension_numbers<[1], [0], [0], [1], [0, 0, 1, 1], [], []>} : vector<16x8xf32>, vector<8x16xf32>, vector<16x16xf32> -> vector<16x16xf32>
    %cst_95 = arith.constant 0.353553385 : f32
    %277 = vector.broadcast %cst_95 : f32 to vector<16x16xf32>
    %278 = arith.mulf %276, %277 : vector<16x16xf32>
    %279 = arith.addf %278, %27 : vector<16x16xf32>
    %cst_96 = arith.constant dense<0xFF800000> : vector<16xf32>
    %280 = vector.multi_reduction <maximumf>, %279, %cst_96 [1] : vector<16x16xf32> to vector<16xf32>
    %281 = vector.shape_cast %280 : vector<16xf32> to vector<16x1xf32>
    %282 = vector.broadcast %281 : vector<16x1xf32> to vector<16x16xf32>
    %283 = arith.subf %279, %282 : vector<16x16xf32>
    %284 = math.exp %283 : vector<16x16xf32>
    %cst_97 = arith.constant dense<0.000000e+00> : vector<16xf32>
    %285 = vector.multi_reduction <add>, %284, %cst_97 [1] : vector<16x16xf32> to vector<16xf32>
    %286 = vector.shape_cast %285 : vector<16xf32> to vector<16x1xf32>
    %287 = tpu.reciprocal %286 {approx = true} : vector<16x1xf32> -> vector<16x1xf32>
    %288 = vector.broadcast %287 : vector<16x1xf32> to vector<16x16xf32>
    %289 = arith.mulf %284, %288 : vector<16x16xf32>
    %cst_98 = arith.constant dense<0.000000e+00> : vector<16x8xf32>
    %290 = tpu.matmul %289, %274, %cst_98 {dimension_numbers = #tpu.dot_dimension_numbers<[1], [0], [0], [1], [0, 0, 1, 1], [], []>} : vector<16x16xf32>, vector<16x8xf32>, vector<16x8xf32> -> vector<16x8xf32>
    %291 = tpu.concatenate %233, %252, %271, %290 in 1 : vector<16x8xf32>, vector<16x8xf32>, vector<16x8xf32>, vector<16x8xf32> -> vector<16x32xf32>
    %292 = arith.truncf %291 : vector<16x32xf32> to vector<16x32xbf16>
    %c1_99 = arith.constant 1 : index
    %c0_100 = arith.constant 0 : index
    %c0_101 = arith.constant 0 : index
    %293 = vector.load %arg4[%c1_99, %c0_100, %c0_101] : memref<2x32x32xbf16, #tpu.memory_space<vmem>>, vector<1x32x32xbf16>
    %294 = vector.shape_cast %293 : vector<1x32x32xbf16> to vector<32x32xbf16>
    %cst_102 = arith.constant dense<0.000000e+00> : vector<16x32xf32>
    %295 = tpu.matmul %292, %294, %cst_102 {dimension_numbers = #tpu.dot_dimension_numbers<[1], [0], [0], [1], [0, 0, 1, 1], [], []>} : vector<16x32xbf16>, vector<32x32xbf16>, vector<16x32xf32> -> vector<16x32xf32>
    %296 = vector.broadcast %184 : vector<1x32xf32> to vector<16x32xf32>
    %297 = arith.addf %295, %296 : vector<16x32xf32>
    %298 = arith.addf %181, %297 : vector<16x32xf32>
    %cst_103 = arith.constant dense<0.000000e+00> : vector<16xf32>
    %299 = vector.multi_reduction <add>, %298, %cst_103 [1] : vector<16x32xf32> to vector<16xf32>
    %300 = vector.shape_cast %299 : vector<16xf32> to vector<16x1xf32>
    %cst_104 = arith.constant 3.200000e+01 : f32
    %301 = vector.broadcast %cst_104 : f32 to vector<16x1xf32>
    %302 = arith.divf %300, %301 : vector<16x1xf32>
    %303 = vector.broadcast %302 : vector<16x1xf32> to vector<16x32xf32>
    %304 = arith.subf %298, %303 : vector<16x32xf32>
    %305 = arith.mulf %304, %304 : vector<16x32xf32>
    %cst_105 = arith.constant dense<0.000000e+00> : vector<16xf32>
    %306 = vector.multi_reduction <add>, %305, %cst_105 [1] : vector<16x32xf32> to vector<16xf32>
    %307 = vector.shape_cast %306 : vector<16xf32> to vector<16x1xf32>
    %cst_106 = arith.constant 3.200000e+01 : f32
    %308 = vector.broadcast %cst_106 : f32 to vector<16x1xf32>
    %309 = arith.divf %307, %308 : vector<16x1xf32>
    %310 = vector.broadcast %302 : vector<16x1xf32> to vector<16x32xf32>
    %311 = arith.subf %298, %310 : vector<16x32xf32>
    %cst_107 = arith.constant 9.99999974E-6 : f32
    %312 = vector.broadcast %cst_107 : f32 to vector<16x1xf32>
    %313 = arith.addf %309, %312 : vector<16x1xf32>
    %314 = math.rsqrt %313 : vector<16x1xf32>
    %315 = vector.broadcast %314 : vector<16x1xf32> to vector<16x32xf32>
    %316 = arith.mulf %311, %315 : vector<16x32xf32>
    %317 = vector.broadcast %185 : vector<1x32xf32> to vector<16x32xf32>
    %318 = arith.mulf %316, %317 : vector<16x32xf32>
    %319 = vector.broadcast %186 : vector<1x32xf32> to vector<16x32xf32>
    %320 = arith.addf %318, %319 : vector<16x32xf32>
    %321 = arith.truncf %320 : vector<16x32xf32> to vector<16x32xbf16>
    %c1_108 = arith.constant 1 : index
    %c0_109 = arith.constant 0 : index
    %c0_110 = arith.constant 0 : index
    %322 = vector.load %arg5[%c1_108, %c0_109, %c0_110] : memref<2x32x128xbf16, #tpu.memory_space<vmem>>, vector<1x32x128xbf16>
    %323 = vector.shape_cast %322 : vector<1x32x128xbf16> to vector<32x128xbf16>
    %cst_111 = arith.constant dense<0.000000e+00> : vector<16x128xf32>
    %324 = tpu.matmul %321, %323, %cst_111 {dimension_numbers = #tpu.dot_dimension_numbers<[1], [0], [0], [1], [0, 0, 1, 1], [], []>} : vector<16x32xbf16>, vector<32x128xbf16>, vector<16x128xf32> -> vector<16x128xf32>
    %325 = vector.broadcast %188 : vector<1x128xf32> to vector<16x128xf32>
    %326 = arith.addf %324, %325 : vector<16x128xf32>
    %cst_112 = arith.constant 0.000000e+00 : f32
    %327 = vector.broadcast %cst_112 : f32 to vector<16x128xf32>
    %328 = arith.maximumf %326, %327 : vector<16x128xf32>
    %329 = arith.truncf %328 : vector<16x128xf32> to vector<16x128xbf16>
    %c1_113 = arith.constant 1 : index
    %c0_114 = arith.constant 0 : index
    %c0_115 = arith.constant 0 : index
    %330 = vector.load %arg6[%c1_113, %c0_114, %c0_115] : memref<2x128x32xbf16, #tpu.memory_space<vmem>>, vector<1x128x32xbf16>
    %331 = vector.shape_cast %330 : vector<1x128x32xbf16> to vector<128x32xbf16>
    %cst_116 = arith.constant dense<0.000000e+00> : vector<16x32xf32>
    %332 = tpu.matmul %329, %331, %cst_116 {dimension_numbers = #tpu.dot_dimension_numbers<[1], [0], [0], [1], [0, 0, 1, 1], [], []>} : vector<16x128xbf16>, vector<128x32xbf16>, vector<16x32xf32> -> vector<16x32xf32>
    %333 = vector.broadcast %187 : vector<1x32xf32> to vector<16x32xf32>
    %334 = arith.addf %332, %333 : vector<16x32xf32>
    %335 = arith.addf %298, %334 : vector<16x32xf32>
    %c12 = arith.constant 12 : index
    %c0_117 = arith.constant 0 : index
    %336 = vector.load %arg7[%c12, %c0_117] : memref<14x32xf32, #tpu.memory_space<vmem>>, vector<1x32xf32>
    %c13 = arith.constant 13 : index
    %c0_118 = arith.constant 0 : index
    %337 = vector.load %arg7[%c13, %c0_118] : memref<14x32xf32, #tpu.memory_space<vmem>>, vector<1x32xf32>
    %cst_119 = arith.constant dense<0.000000e+00> : vector<16xf32>
    %338 = vector.multi_reduction <add>, %335, %cst_119 [1] : vector<16x32xf32> to vector<16xf32>
    %339 = vector.shape_cast %338 : vector<16xf32> to vector<16x1xf32>
    %cst_120 = arith.constant 3.200000e+01 : f32
    %340 = vector.broadcast %cst_120 : f32 to vector<16x1xf32>
    %341 = arith.divf %339, %340 : vector<16x1xf32>
    %342 = vector.broadcast %341 : vector<16x1xf32> to vector<16x32xf32>
    %343 = arith.subf %335, %342 : vector<16x32xf32>
    %344 = arith.mulf %343, %343 : vector<16x32xf32>
    %cst_121 = arith.constant dense<0.000000e+00> : vector<16xf32>
    %345 = vector.multi_reduction <add>, %344, %cst_121 [1] : vector<16x32xf32> to vector<16xf32>
    %346 = vector.shape_cast %345 : vector<16xf32> to vector<16x1xf32>
    %cst_122 = arith.constant 3.200000e+01 : f32
    %347 = vector.broadcast %cst_122 : f32 to vector<16x1xf32>
    %348 = arith.divf %346, %347 : vector<16x1xf32>
    %349 = vector.broadcast %341 : vector<16x1xf32> to vector<16x32xf32>
    %350 = arith.subf %335, %349 : vector<16x32xf32>
    %cst_123 = arith.constant 9.99999974E-6 : f32
    %351 = vector.broadcast %cst_123 : f32 to vector<16x1xf32>
    %352 = arith.addf %348, %351 : vector<16x1xf32>
    %353 = math.rsqrt %352 : vector<16x1xf32>
    %354 = vector.broadcast %353 : vector<16x1xf32> to vector<16x32xf32>
    %355 = arith.mulf %350, %354 : vector<16x32xf32>
    %356 = vector.broadcast %336 : vector<1x32xf32> to vector<16x32xf32>
    %357 = arith.mulf %355, %356 : vector<16x32xf32>
    %358 = vector.broadcast %337 : vector<1x32xf32> to vector<16x32xf32>
    %359 = arith.addf %357, %358 : vector<16x32xf32>
    %c0_124 = arith.constant 0 : index
    %c0_125 = arith.constant 0 : index
    %360 = vector.load %arg8[%c0_124, %c0_125] : memref<35x128xf32, #tpu.memory_space<vmem>>, vector<32x128xf32>
    %c32 = arith.constant 32 : index
    %c0_126 = arith.constant 0 : index
    %361 = vector.load %arg8[%c32, %c0_126] : memref<35x128xf32, #tpu.memory_space<vmem>>, vector<1x128xf32>
    %cst_127 = arith.constant dense<0.000000e+00> : vector<16x128xf32>
    %362 = tpu.matmul %359, %360, %cst_127 {dimension_numbers = #tpu.dot_dimension_numbers<[1], [0], [0], [1], [0, 0, 1, 1], [], []>} : vector<16x32xf32>, vector<32x128xf32>, vector<16x128xf32> -> vector<16x128xf32>
    %363 = vector.broadcast %361 : vector<1x128xf32> to vector<16x128xf32>
    %364 = arith.addf %362, %363 : vector<16x128xf32>
    %cst_128 = arith.constant dense<0xFF800000> : vector<16xf32>
    %365 = vector.multi_reduction <maximumf>, %364, %cst_128 [1] : vector<16x128xf32> to vector<16xf32>
    %366 = vector.shape_cast %365 : vector<16xf32> to vector<16x1xf32>
    %367 = vector.broadcast %366 : vector<16x1xf32> to vector<16x128xf32>
    %368 = arith.subf %364, %367 : vector<16x128xf32>
    %369 = math.exp %368 : vector<16x128xf32>
    %cst_129 = arith.constant dense<0.000000e+00> : vector<16xf32>
    %370 = vector.multi_reduction <add>, %369, %cst_129 [1] : vector<16x128xf32> to vector<16xf32>
    %371 = vector.shape_cast %370 : vector<16xf32> to vector<16x1xf32>
    %372 = math.log %371 : vector<16x1xf32>
    %373 = arith.addf %366, %372 : vector<16x1xf32>
    %374 = tpu.iota {dimensions = array<i32: 1>} : vector<16x128xi32>
    %375 = vector.broadcast %1 : vector<16x1xi32> to vector<16x128xi32>
    %376 = arith.cmpi eq, %374, %375 : vector<16x128xi32>
    %377 = arith.extui %376 : vector<16x128xi1> to vector<16x128xi32>
    %378 = arith.sitofp %377 : vector<16x128xi32> to vector<16x128xf32>
    %379 = arith.mulf %364, %378 : vector<16x128xf32>
    %cst_130 = arith.constant dense<0.000000e+00> : vector<16xf32>
    %380 = vector.multi_reduction <add>, %379, %cst_130 [1] : vector<16x128xf32> to vector<16xf32>
    %381 = vector.shape_cast %380 : vector<16xf32> to vector<16x1xf32>
    %382 = arith.subf %373, %381 : vector<16x1xf32>
    %383 = vector.shape_cast %382 : vector<16x1xf32> to vector<1x16x1xf32>
    %cst_131 = arith.constant dense<0.000000e+00> : vector<1xf32>
    %384 = vector.multi_reduction <add>, %383, %cst_131 [1, 2] : vector<1x16x1xf32> to vector<1xf32>
    %385 = vector.shape_cast %384 : vector<1xf32> to vector<1x1x1xf32>
    %386 = vector.extract %385[0, 0, 0] : f32 from vector<1x1x1xf32>
    %cst_132 = arith.constant 6.250000e-02 : f32
    %387 = arith.mulf %386, %cst_132 : f32
    %c0_133 = arith.constant 0 : index
    %c0_134 = arith.constant 0 : index
    %388 = vector.load %arg9[%c0_133, %c0_134] : memref<24x128xf32, #tpu.memory_space<vmem>>, vector<16x128xf32>
    tpu.vector_store %arg9[%c0_133, %c0_134], %364 {strides = array<i32>} : memref<24x128xf32, #tpu.memory_space<vmem>>, vector<16x128xf32>,
    %389 = vector.broadcast %387 : f32 to vector<8x128xf32>
    %c16 = arith.constant 16 : index
    %c0_135 = arith.constant 0 : index
    %390 = vector.load %arg9[%c16, %c0_135] : memref<24x128xf32, #tpu.memory_space<vmem>>, vector<8x128xf32>
    tpu.vector_store %arg9[%c16, %c0_135], %389 {strides = array<i32>} : memref<24x128xf32, #tpu.memory_space<vmem>>, vector<8x128xf32>,
    return
  }
}

</mosaic_0001>

<llo_original>
// kernel: model_forward.1
$region0: #{model_forward.1}
  #allocation0 [shape = 'u32[]', space=smem, size = 0x4, offset = 0x4, fixed_abs, tag = 'smem constant byte address 0x4 - core index']
  #allocation1 [shape = 'u32[144,128]{1,0:T(1,128)}', space=vmem, size = 0x12000, scoped, tag = 'internal scratch']
  %s0 = inlined_call_operand.vmem [shape: s32[16,1], index: 0, kind: input, shape index: {}]
  %s1 = inlined_call_operand.vmem [shape: s32[16,1], index: 1, kind: input, shape index: {}]
  %s2 = inlined_call_operand.vmem [shape: f32[24,32], index: 2, kind: input, shape index: {}]
  %s3 = inlined_call_operand.vmem [shape: bf16[2,32,96], index: 3, kind: input, shape index: {}]
  %s4 = inlined_call_operand.vmem [shape: bf16[2,32,32], index: 4, kind: input, shape index: {}]
  %s5 = inlined_call_operand.vmem [shape: bf16[2,32,128], index: 5, kind: input, shape index: {}]
  %s6 = inlined_call_operand.vmem [shape: bf16[2,128,32], index: 6, kind: input, shape index: {}]
  %s7 = inlined_call_operand.vmem [shape: f32[14,32], index: 7, kind: input, shape index: {}]
  %s8 = inlined_call_operand.vmem [shape: f32[35,128], index: 8, kind: input, shape index: {}]
  %s9 = inlined_call_operand.vmem [shape: f32[24,128], index: 9, kind: output, shape index: {}]
  %s10 = sld [smem:[#allocation0]]
  $region46: #{model_forward.1} parent=0
    _
  %s12 = ssub.s32 1, %s10
  %s13 = scalar_select 0, %s12, %s10
  // Predicated region
  $region2: #{model_forward.1} parent=0 // pred_check
    _
  $region3: #{model_forward.1} parent=0 // pred_check_branch
    %15 = sbr.rel (0) target = $region5
  $region4: #{model_forward.1} parent=0 // pred_region
    _
  $region5: #{model_forward.1} parent=0 // pred_fallthru
    _
  // Predicated region
  $region6: #{model_forward.1} parent=0 // pred_check
    _
  $region7: #{model_forward.1} parent=0 // pred_check_branch
    %17 = sbr.rel (0) target = $region9
  $region8: #{model_forward.1} parent=0 // pred_region
    _
  $region9: #{model_forward.1} parent=0 // pred_fallthru
    _
  // Predicated region
  $region10: #{model_forward.1} parent=0 // pred_check
    _
  $region11: #{model_forward.1} parent=0 // pred_check_branch
    %19 = sbr.rel (0) target = $region13
  $region12: #{model_forward.1} parent=0 // pred_region
    _
  $region13: #{model_forward.1} parent=0 // pred_fallthru
    _
  // Predicated region
  $region14: #{model_forward.1} parent=0 // pred_check
    _
  $region15: #{model_forward.1} parent=0 // pred_check_branch
    %21 = sbr.rel (0) target = $region17
  $region16: #{model_forward.1} parent=0 // pred_region
    _
  $region17: #{model_forward.1} parent=0 // pred_fallthru
    _
  // Predicated region
  $region18: #{model_forward.1} parent=0 // pred_check
    _
  $region19: #{model_forward.1} parent=0 // pred_check_branch
    %23 = sbr.rel (0) target = $region21
  $region20: #{model_forward.1} parent=0 // pred_region
    _
  $region21: #{model_forward.1} parent=0 // pred_fallthru
    _
  // Predicated region
  $region22: #{model_forward.1} parent=0 // pred_check
    _
  $region23: #{model_forward.1} parent=0 // pred_check_branch
    %25 = sbr.rel (0) target = $region25
  $region24: #{model_forward.1} parent=0 // pred_region
    _
  $region25: #{model_forward.1} parent=0 // pred_fallthru
    _
  // Predicated region
  $region26: #{model_forward.1} parent=0 // pred_check
    _
  $region27: #{model_forward.1} parent=0 // pred_check_branch
    %27 = sbr.rel (0) target = $region29
  $region28: #{model_forward.1} parent=0 // pred_region
    _
  $region29: #{model_forward.1} parent=0 // pred_fallthru
    _
  // Predicated region
  $region30: #{model_forward.1} parent=0 // pred_check
    _
  $region31: #{model_forward.1} parent=0 // pred_check_branch
    %29 = sbr.rel (0) target = $region33
  $region32: #{model_forward.1} parent=0 // pred_region
    _
  $region33: #{model_forward.1} parent=0 // pred_fallthru
    _
  // Predicated region
  $region34: #{model_forward.1} parent=0 // pred_check
    _
  $region35: #{model_forward.1} parent=0 // pred_check_branch
    %31 = sbr.rel (0) target = $region37
  $region36: #{model_forward.1} parent=0 // pred_region
    _
  $region37: #{model_forward.1} parent=0 // pred_fallthru
    _
  %v33 = vld [vmem:[%s0] sm:$0xff]
  %v34 = vld [vmem:[%s0 + $0x8] sm:$0xff]
  %v35 = vld [vmem:[%s1] sm:$0xff]
  %v36 = vld [vmem:[%s1 + $0x8] sm:$0xff]
  %v37 = vlaneseq
  %v38 = vand.u32 %v37, 127
  %v39 = vlaneseq
  %v40 = vshrl.u32 %v39, 7
  %v41 = vadd.s32 %v40, 8
  %v42 = vand.u32 %v40, 7
  %v43 = vand.u32 %v41, 7
  %44 = vset.pattern.permute.xlu0 0
  %45 = vperm.xlu0 %44, %v33
  %v46 = vpop.permute.xlu0 %45
  %47 = vset.pattern.permute.xlu0 0
  %48 = vperm.xlu0 %47, %v34
  %v49 = vpop.permute.xlu0 %48
  %vm50 = vcmp.eq.s32.totalorder %v38, %v46
  %vm51 = vcmp.eq.s32.totalorder %v38, %v49
  %v52 = vadd.s32 %v42, 16
  %v53 = vadd.s32 %v43, 16
  %vm54 = vcmp.eq.s32.totalorder %v38, %v52
  %vm55 = vcmp.eq.s32.totalorder %v38, %v53
  %vm56 = vmor %vm50, %vm54
  %vm57 = vmor %vm51, %vm55
  %v58 = vsel %vm56, 1, 0
  %v59 = vsel %vm57, 1, 0
  %v60 = vcvt.s32.f32 %v58
  %v61 = vcvt.s32.f32 %v59
  %v62 = vld [vmem:[%s2] sm:$0xff]
  %v63 = vld [vmem:[%s2 + $0x8] sm:$0xff]
  %v64 = vld [vmem:[%s2 + $0x10] sm:$0xff]
  %vm65 = vcmask 195584
  %v67 = vsel %vm65, %v60, 0
  %v70 = vsel %vm65, %v61, 0
  %72 = vmatprep.subr.mxu0 0.0
  %73 = vmatpush1.msra.mxu0 %v62
  %74 = vmatprep.subr.mxu0 0.0
  %75 = vmatpush1.msra.mxu0 %v63
  %76 = vmatprep.subr.mxu0 0.0
  %77 = vmatpush1.msra.mxu0 %v64
  %78 = vmatprep.subr.mxu0 0.0
  %79 = vmatpush1.msra.mxu0 0.0
  %80 = vmatprep.subr.mxu0 0.0
  %81 = vmatpush1.msra.mxu0 0.0
  %82 = vmatprep.subr.mxu0 0.0
  %83 = vmatpush1.msra.mxu0 0.0
  %84 = vmatprep.subr.mxu0 0.0
  %85 = vmatpush1.msra.mxu0 0.0
  %86 = vmatprep.subr.mxu0 0.0
  %87 = vmatpush1.msra.mxu0 0.0
  %88 = vmatprep.subr.mxu0 0.0
  %89 = vmatpush1.msra.mxu0 0.0
  %90 = vmatprep.subr.mxu0 0.0
  %91 = vmatpush1.msra.mxu0 0.0
  %92 = vmatprep.subr.mxu0 0.0
  %93 = vmatpush1.msra.mxu0 0.0
  %94 = vmatprep.subr.mxu0 0.0
  %95 = vmatpush1.msra.mxu0 0.0
  %96 = vmatprep.subr.mxu0 0.0
  %97 = vmatpush1.msra.mxu0 0.0
  %98 = vmatprep.subr.mxu0 0.0
  %99 = vmatpush1.msra.mxu0 0.0
  %100 = vmatprep.subr.mxu0 0.0
  %101 = vmatpush1.msra.mxu0 0.0
  %102 = vmatprep.subr.mxu0 0.0
  %103 = vmatpush1.msra.mxu0 0.0
  %104 = vmatprep.subr.mxu0 0.0
  %105 = vmatpush1.msra.mxu0 0.0
  %106 = vmatprep.subr.mxu0 0.0
  %107 = vmatpush1.msra.mxu0 0.0
  %108 = vmatprep.subr.mxu0 0.0
  %109 = vmatpush1.msra.mxu0 0.0
  %110 = vmatprep.subr.mxu0 0.0
  %111 = vmatpush1.msra.mxu0 0.0
  %112 = vmatprep.subr.mxu0 0.0
  %113 = vmatpush1.msra.mxu0 0.0
  %114 = vmatprep.subr.mxu0 0.0
  %115 = vmatpush1.msra.mxu0 0.0
  %116 = vmatprep.subr.mxu0 0.0
  %117 = vmatpush1.msra.mxu0 0.0
  %118 = vmatprep.subr.mxu0 0.0
  %119 = vmatpush1.msra.mxu0 0.0
  %120 = vmatprep.subr.mxu0 0.0
  %121 = vmatpush1.msra.mxu0 0.0
  %122 = vmatprep.subr.mxu0 0.0
  %123 = vmatpush1.msra.mxu0 0.0
  %124 = vmatprep.subr.mxu0 0.0
  %125 = vmatpush1.msra.mxu0 0.0
  %126 = vmatprep.subr.mxu0 0.0
  %127 = vmatpush1.msra.mxu0 0.0
  %128 = vmatprep.subr.mxu0 0.0
  %129 = vmatpush1.msra.mxu0 0.0
  %130 = vmatprep.subr.mxu0 0.0
  %131 = vmatpush1.msra.mxu0 0.0
  %132 = vmatprep.subr.mxu0 0.0
  %133 = vmatpush1.msra.mxu0 0.0
  %134 = vmatprep.subr.mxu0 0.0
  %135 = vmatpush1.msra.mxu0 0.0
  %136 = vmatprep.mubr.f32.mxu0 0.0
  %137 = vmatmul.mubr.f32.gmra.mrb[0].mxu0 %v67
  %v138 = vpop.f32.mrb[0].mxu0
  %v139 = vadd.f32 0.0, %v138
  %v140 = vpop.f32.mrb[0].mxu0
  %141 = vmatprep.mubr.f32.mxu0 0.0
  %142 = vmatmul.mubr.f32.gmra.mrb[0].mxu0 %v70
  %v143 = vpop.f32.mrb[0].mxu0
  %v144 = vadd.f32 0.0, %v143
  %v145 = vpop.f32.mrb[0].mxu0
  %146 = vdwg.mxu0
  %v147 = vshra.s32 %v40, 3
  %v148 = vshra.s32 %v41, 3
  %v149 = vshra.s32 %v38, 3
  %vm150 = vcmp.eq.s32.totalorder %v147, %v149
  %vm151 = vcmp.eq.s32.totalorder %v148, %v149
  %vm152 = vcmp.le.s32.totalorder %v38, %v40
  %vm153 = vcmp.le.s32.totalorder %v38, %v41
  %vm154 = vmand %vm150, %vm152
  %vm155 = vmand %vm151, %vm153
  %v156 = vsel %vm154, 0.0, -1e+30
  %v157 = vsel %vm155, 0.0, -1e+30
  %v158 = vld [vmem:[%s7] sm:$0x1]
  %v159 = vld [vmem:[%s7 + $0x1] sm:$0x1]
  %v160 = vld [vmem:[%s7 + $0x2] sm:$0x1]
  %v161 = vld [vmem:[%s7 + $0x3] sm:$0x1]
  %v162 = vld [vmem:[%s7 + $0x4] sm:$0x1]
  %v163 = vld [vmem:[%s7 + $0x5] sm:$0x1]
  %v164 = vld [vmem:[%s8 + $0x21] sm:$0x1]
  %vm165 = vcmask 261120
  %v166 = vsel %vm165, %v139, 0.0
  %167 = vadd.xlane.f32.xlu0 %v166
  %v168 = vpop.xlane.xlu0 %167
  %v169 = vsel %vm165, %v144, 0.0
  %170 = vadd.xlane.f32.xlu0 %v169
  %v171 = vpop.xlane.xlu0 %170
  %v172 = vrcp.pop 32.0
  %v173 = vmul.f32 %v168, %v172
  %v174 = vmul.f32 %v171, %v172
  %v175 = vsub.f32 %v139, %v173
  %v176 = vsub.f32 %v144, %v174
  %v177 = vmul.f32 %v175, %v175
  %v178 = vmul.f32 %v176, %v176
  %v179 = vsel %vm165, %v177, 0.0
  %180 = vadd.xlane.f32.xlu0 %v179
  %v181 = vpop.xlane.xlu0 %180
  %v182 = vsel %vm165, %v178, 0.0
  %183 = vadd.xlane.f32.xlu0 %v182
  %v184 = vpop.xlane.xlu0 %183
  %v185 = vmul.f32 %v181, %v172
  %v186 = vmul.f32 %v184, %v172
  %v187 = vadd.f32 %v185, 1e-05
  %v188 = vadd.f32 %v186, 1e-05
  %v189 = vrsqrt.pop %v187
  %v190 = vrsqrt.pop %v188
  %v191 = vmul.f32 %v175, %v189
  %v192 = vmul.f32 %v176, %v190
  %v193 = vlaneseq
  %v194 = vshrl.u32 %v193, 7
  %v195 = vsub.s32 0, %v194
  %v196 = vrot.slane %v158, %v195
  %v197 = vmul.f32 %v191, %v196
  %v198 = vmul.f32 %v192, %v196
  %v199 = vlaneseq
  %v200 = vshrl.u32 %v199, 7
  %v201 = vsub.s32 0, %v200
  %v202 = vrot.slane %v159, %v201
  %v203 = vadd.f32 %v197, %v202
  %v204 = vadd.f32 %v198, %v202
  %v205 = vpack.c.bf16 %v204, %v203
  %v206 = vld [vmem:[%s3] sm:$0xf]
  %v207 = vld [vmem:[%s3 + $0x4] sm:$0xf]
  %v208 = vld [vmem:[%s3 + $0x8] sm:$0xf]
  %v209 = vld [vmem:[%s3 + $0xc] sm:$0xf]
  %v214 = vunpack.c.l.b16 %v206
  %v215 = vunpack.c.l.b16 %v207
  %v216 = vunpack.c.l.b16 %v208
  %v217 = vunpack.c.l.b16 %v209
  %v218 = vpack.c.b16 %v215, %v214
  %v219 = vpack.c.b16 %v217, %v216
  %v223 = vsel %vm165, %v205, 0
  %225 = vmatprep.subr.bf16.mxu0 0
  %226 = vmatpush1.bf16.msra.mxu0 %v218
  %227 = vmatprep.subr.bf16.mxu0 0
  %228 = vmatpush1.bf16.msra.mxu0 %v219
  %229 = vmatprep.subr.bf16.mxu0 0
  %230 = vmatpush1.bf16.msra.mxu0 0
  %231 = vmatprep.subr.bf16.mxu0 0
  %232 = vmatpush1.bf16.msra.mxu0 0
  %233 = vmatprep.subr.bf16.mxu0 0
  %234 = vmatpush1.bf16.msra.mxu0 0
  %235 = vmatprep.subr.bf16.mxu0 0
  %236 = vmatpush1.bf16.msra.mxu0 0
  %237 = vmatprep.subr.bf16.mxu0 0
  %238 = vmatpush1.bf16.msra.mxu0 0
  %239 = vmatprep.subr.bf16.mxu0 0
  %240 = vmatpush1.bf16.msra.mxu0 0
  %241 = vmatprep.subr.bf16.mxu0 0
  %242 = vmatpush1.bf16.msra.mxu0 0
  %243 = vmatprep.subr.bf16.mxu0 0
  %244 = vmatpush1.bf16.msra.mxu0 0
  %245 = vmatprep.subr.bf16.mxu0 0
  %246 = vmatpush1.bf16.msra.mxu0 0
  %247 = vmatprep.subr.bf16.mxu0 0
  %248 = vmatpush1.bf16.msra.mxu0 0
  %249 = vmatprep.subr.bf16.mxu0 0
  %250 = vmatpush1.bf16.msra.mxu0 0
  %251 = vmatprep.subr.bf16.mxu0 0
  %252 = vmatpush1.bf16.msra.mxu0 0
  %253 = vmatprep.subr.bf16.mxu0 0
  %254 = vmatpush1.bf16.msra.mxu0 0
  %255 = vmatprep.subr.bf16.mxu0 0
  %256 = vmatpush1.bf16.msra.mxu0 0
  %257 = vmatprep.mubr.bf16.mxu0 0
  %258 = vmatmul.mubr.bf16.gmra.mrb[0].mxu0 %v223
  %v259 = vpop.f32.mrb[0].mxu0
  %v260 = vadd.f32 0.0, %v259
  %v261 = vpop.f32.mrb[0].mxu0
  %v262 = vpop.f32.mrb[0].mxu0
  %v263 = vadd.f32 0.0, %v262
  %v264 = vpop.f32.mrb[0].mxu0
  %265 = vdwg.mxu0
  %268 = vrot.lane.b32.xlu0 %v260, 96
  %v269 = vpop.permute.xlu0 %268
  %270 = vrot.lane.b32.xlu0 %v263, 96
  %v271 = vpop.permute.xlu0 %270
  %vm272 = vcmask 64512
  %v273 = vsel %vm272, %v260, 0
  %v275 = vsel %vm272, %v263, 0
  %v277 = vsel %vm272, %v269, 0
  %v279 = vsel %vm272, %v271, 0
  %281 = vmatprep.subr.mxu0 0.0
  %282 = vmatpush1.xpose.msra.mxu0 %v277
  %283 = vmatprep.subr.mxu0 0.0
  %284 = vmatpush1.xpose.msra.mxu0 %v279
  %285 = vmatprep.subr.mxu0 0.0
  %286 = vmatpush1.xpose.msra.mxu0 0.0
  %287 = vmatprep.subr.mxu0 0.0
  %288 = vmatpush1.xpose.msra.mxu0 0.0
  %289 = vmatprep.subr.mxu0 0.0
  %290 = vmatpush1.xpose.msra.mxu0 0.0
  %291 = vmatprep.subr.mxu0 0.0
  %292 = vmatpush1.xpose.msra.mxu0 0.0
  %293 = vmatprep.subr.mxu0 0.0
  %294 = vmatpush1.xpose.msra.mxu0 0.0
  %295 = vmatprep.subr.mxu0 0.0
  %296 = vmatpush1.xpose.msra.mxu0 0.0
  %297 = vmatprep.subr.mxu0 0.0
  %298 = vmatpush1.xpose.msra.mxu0 0.0
  %299 = vmatprep.subr.mxu0 0.0
  %300 = vmatpush1.xpose.msra.mxu0 0.0
  %301 = vmatprep.subr.mxu0 0.0
  %302 = vmatpush1.xpose.msra.mxu0 0.0
  %303 = vmatprep.subr.mxu0 0.0
  %304 = vmatpush1.xpose.msra.mxu0 0.0
  %305 = vmatprep.subr.mxu0 0.0
  %306 = vmatpush1.xpose.msra.mxu0 0.0
  %307 = vmatprep.subr.mxu0 0.0
  %308 = vmatpush1.xpose.msra.mxu0 0.0
  %309 = vmatprep.subr.mxu0 0.0
  %310 = vmatpush1.xpose.msra.mxu0 0.0
  %311 = vmatprep.subr.mxu0 0.0
  %312 = vmatpush1.xpose.msra.mxu0 0.0
  %313 = vmatprep.subr.mxu0 0.0
  %314 = vmatpush1.xpose.msra.mxu0 0.0
  %315 = vmatprep.subr.mxu0 0.0
  %316 = vmatpush1.xpose.msra.mxu0 0.0
  %317 = vmatprep.subr.mxu0 0.0
  %318 = vmatpush1.xpose.msra.mxu0 0.0
  %319 = vmatprep.subr.mxu0 0.0
  %320 = vmatpush1.xpose.msra.mxu0 0.0
  %321 = vmatprep.subr.mxu0 0.0
  %322 = vmatpush1.xpose.msra.mxu0 0.0
  %323 = vmatprep.subr.mxu0 0.0
  %324 = vmatpush1.xpose.msra.mxu0 0.0
  %325 = vmatprep.subr.mxu0 0.0
  %326 = vmatpush1.xpose.msra.mxu0 0.0
  %327 = vmatprep.subr.mxu0 0.0
  %328 = vmatpush1.xpose.msra.mxu0 0.0
  %329 = vmatprep.subr.mxu0 0.0
  %330 = vmatpush1.xpose.msra.mxu0 0.0
  %331 = vmatprep.subr.mxu0 0.0
  %332 = vmatpush1.xpose.msra.mxu0 0.0
  %333 = vmatprep.subr.mxu0 0.0
  %334 = vmatpush1.xpose.msra.mxu0 0.0
  %335 = vmatprep.subr.mxu0 0.0
  %336 = vmatpush1.xpose.msra.mxu0 0.0
  %337 = vmatprep.subr.mxu0 0.0
  %338 = vmatpush1.xpose.msra.mxu0 0.0
  %339 = vmatprep.subr.mxu0 0.0
  %340 = vmatpush1.xpose.msra.mxu0 0.0
  %341 = vmatprep.subr.mxu0 0.0
  %342 = vmatpush1.xpose.msra.mxu0 0.0
  %343 = vmatprep.subr.mxu0 0.0
  %344 = vmatpush1.xpose.msra.mxu0 0.0
  %345 = vmatprep.mubr.f32.mxu0 0.0
  %346 = vmatmul.mubr.f32.gmra.mrb[0].mxu0 %v273
  %v347 = vpop.f32.mrb[0].mxu0
  %v348 = vadd.f32 0.0, %v347
  %v349 = vpop.f32.mrb[0].mxu0
  %350 = vmatprep.mubr.f32.mxu0 0.0
  %351 = vmatmul.mubr.f32.gmra.mrb[0].mxu0 %v275
  %v352 = vpop.f32.mrb[0].mxu0
  %v353 = vadd.f32 0.0, %v352
  %v354 = vpop.f32.mrb[0].mxu0
  %355 = vdwg.mxu0
  %v356 = vmul.f32 %v348, 0.35355338
  %v357 = vmul.f32 %v353, 0.35355338
  %v358 = vadd.f32 %v356, %v156
  %v359 = vadd.f32 %v357, %v157
  %vm360 = vcmask 130048
  %v361 = vsel %vm360, %v358, -inf
  %362 = vmax.xlane.f32.xlu0 %v361
  %v363 = vpop.xlane.xlu0 %362
  %v364 = vsel %vm360, %v359, -inf
  %365 = vmax.xlane.f32.xlu0 %v364
  %v366 = vpop.xlane.xlu0 %365
  %v367 = vsub.f32 %v358, %v363
  %v368 = vsub.f32 %v359, %v366
  %v369 = vmul.f32 %v367, 1.442695
  %v370 = vpow.pop %v369
  %v371 = vmul.f32 %v368, 1.442695
  %v372 = vpow.pop %v371
  %v373 = vsel %vm360, %v370, 0.0
  %374 = vadd.xlane.f32.xlu0 %v373
  %v375 = vpop.xlane.xlu0 %374
  %v376 = vsel %vm360, %v372, 0.0
  %377 = vadd.xlane.f32.xlu0 %v376
  %v378 = vpop.xlane.xlu0 %377
  %v379 = vrcp.pop %v375
  %v380 = vrcp.pop %v378
  %v381 = vmul.f32 %v370, %v379
  %v382 = vmul.f32 %v372, %v380
  %383 = vrot.lane.b32.xlu0 %v260, 64
  %v384 = vpop.permute.xlu0 %383
  %385 = vrot.lane.b32.xlu0 %v263, 64
  %v386 = vpop.permute.xlu0 %385
  %v390 = vsel %vm360, %v381, 0
  %v393 = vsel %vm360, %v382, 0
  %395 = vmatprep.subr.mxu0 0.0
  %396 = vmatpush1.msra.mxu0 %v384
  %397 = vmatprep.subr.mxu0 0.0
  %398 = vmatpush1.msra.mxu0 %v386
  %399 = vmatprep.subr.mxu0 0.0
  %400 = vmatpush1.msra.mxu0 0.0
  %401 = vmatprep.subr.mxu0 0.0
  %402 = vmatpush1.msra.mxu0 0.0
  %403 = vmatprep.subr.mxu0 0.0
  %404 = vmatpush1.msra.mxu0 0.0
  %405 = vmatprep.subr.mxu0 0.0
  %406 = vmatpush1.msra.mxu0 0.0
  %407 = vmatprep.subr.mxu0 0.0
  %408 = vmatpush1.msra.mxu0 0.0
  %409 = vmatprep.subr.mxu0 0.0
  %410 = vmatpush1.msra.mxu0 0.0
  %411 = vmatprep.subr.mxu0 0.0
  %412 = vmatpush1.msra.mxu0 0.0
  %413 = vmatprep.subr.mxu0 0.0
  %414 = vmatpush1.msra.mxu0 0.0
  %415 = vmatprep.subr.mxu0 0.0
  %416 = vmatpush1.msra.mxu0 0.0
  %417 = vmatprep.subr.mxu0 0.0
  %418 = vmatpush1.msra.mxu0 0.0
  %419 = vmatprep.subr.mxu0 0.0
  %420 = vmatpush1.msra.mxu0 0.0
  %421 = vmatprep.subr.mxu0 0.0
  %422 = vmatpush1.msra.mxu0 0.0
  %423 = vmatprep.subr.mxu0 0.0
  %424 = vmatpush1.msra.mxu0 0.0
  %425 = vmatprep.subr.mxu0 0.0
  %426 = vmatpush1.msra.mxu0 0.0
  %427 = vmatprep.subr.mxu0 0.0
  %428 = vmatpush1.msra.mxu0 0.0
  %429 = vmatprep.subr.mxu0 0.0
  %430 = vmatpush1.msra.mxu0 0.0
  %431 = vmatprep.subr.mxu0 0.0
  %432 = vmatpush1.msra.mxu0 0.0
  %433 = vmatprep.subr.mxu0 0.0
  %434 = vmatpush1.msra.mxu0 0.0
  %435 = vmatprep.subr.mxu0 0.0
  %436 = vmatpush1.msra.mxu0 0.0
  %437 = vmatprep.subr.mxu0 0.0
  %438 = vmatpush1.msra.mxu0 0.0
  %439 = vmatprep.subr.mxu0 0.0
  %440 = vmatpush1.msra.mxu0 0.0
  %441 = vmatprep.subr.mxu0 0.0
  %442 = vmatpush1.msra.mxu0 0.0
  %443 = vmatprep.subr.mxu0 0.0
  %444 = vmatpush1.msra.mxu0 0.0
  %445 = vmatprep.subr.mxu0 0.0
  %446 = vmatpush1.msra.mxu0 0.0
  %447 = vmatprep.subr.mxu0 0.0
  %448 = vmatpush1.msra.mxu0 0.0
  %449 = vmatprep.subr.mxu0 0.0
  %450 = vmatpush1.msra.mxu0 0.0
  %451 = vmatprep.subr.mxu0 0.0
  %452 = vmatpush1.msra.mxu0 0.0
  %453 = vmatprep.subr.mxu0 0.0
  %454 = vmatpush1.msra.mxu0 0.0
  %455 = vmatprep.subr.mxu0 0.0
  %456 = vmatpush1.msra.mxu0 0.0
  %457 = vmatprep.subr.mxu0 0.0
  %458 = vmatpush1.msra.mxu0 0.0
  %459 = vmatprep.mubr.f32.mxu0 0.0
  %460 = vmatmul.mubr.f32.gmra.mrb[0].mxu0 %v390
  %v461 = vpop.f32.mrb[0].mxu0
  %v462 = vadd.f32 0.0, %v461
  %v463 = vpop.f32.mrb[0].mxu0
  %464 = vmatprep.mubr.f32.mxu0 0.0
  %465 = vmatmul.mubr.f32.gmra.mrb[0].mxu0 %v393
  %v466 = vpop.f32.mrb[0].mxu0
  %v467 = vadd.f32 0.0, %v466
  %v468 = vpop.f32.mrb[0].mxu0
  %469 = vdwg.mxu0
  %470 = vrot.lane.b32.xlu0 %v260, 120
  %v471 = vpop.permute.xlu0 %470
  %472 = vrot.lane.b32.xlu0 %v263, 120
  %v473 = vpop.permute.xlu0 %472
  %474 = vrot.lane.b32.xlu0 %v260, 88
  %v475 = vpop.permute.xlu0 %474
  %476 = vrot.lane.b32.xlu0 %v263, 88
  %v477 = vpop.permute.xlu0 %476
  %v478 = vsel %vm272, %v471, 0
  %v480 = vsel %vm272, %v473, 0
  %v482 = vsel %vm272, %v475, 0
  %v484 = vsel %vm272, %v477, 0
  %486 = vmatprep.subr.mxu0 0.0
  %487 = vmatpush1.xpose.msra.mxu0 %v482
  %488 = vmatprep.subr.mxu0 0.0
  %489 = vmatpush1.xpose.msra.mxu0 %v484
  %490 = vmatprep.subr.mxu0 0.0
  %491 = vmatpush1.xpose.msra.mxu0 0.0
  %492 = vmatprep.subr.mxu0 0.0
  %493 = vmatpush1.xpose.msra.mxu0 0.0
  %494 = vmatprep.subr.mxu0 0.0
  %495 = vmatpush1.xpose.msra.mxu0 0.0
  %496 = vmatprep.subr.mxu0 0.0
  %497 = vmatpush1.xpose.msra.mxu0 0.0
  %498 = vmatprep.subr.mxu0 0.0
  %499 = vmatpush1.xpose.msra.mxu0 0.0
  %500 = vmatprep.subr.mxu0 0.0
  %501 = vmatpush1.xpose.msra.mxu0 0.0
  %502 = vmatprep.subr.mxu0 0.0
  %503 = vmatpush1.xpose.msra.mxu0 0.0
  %504 = vmatprep.subr.mxu0 0.0
  %505 = vmatpush1.xpose.msra.mxu0 0.0
  %506 = vmatprep.subr.mxu0 0.0
  %507 = vmatpush1.xpose.msra.mxu0 0.0
  %508 = vmatprep.subr.mxu0 0.0
  %509 = vmatpush1.xpose.msra.mxu0 0.0
  %510 = vmatprep.subr.mxu0 0.0
  %511 = vmatpush1.xpose.msra.mxu0 0.0
  %512 = vmatprep.subr.mxu0 0.0
  %513 = vmatpush1.xpose.msra.mxu0 0.0
  %514 = vmatprep.subr.mxu0 0.0
  %515 = vmatpush1.xpose.msra.mxu0 0.0
  %516 = vmatprep.subr.mxu0 0.0
  %517 = vmatpush1.xpose.msra.mxu0 0.0
  %518 = vmatprep.subr.mxu0 0.0
  %519 = vmatpush1.xpose.msra.mxu0 0.0
  %520 = vmatprep.subr.mxu0 0.0
  %521 = vmatpush1.xpose.msra.mxu0 0.0
  %522 = vmatprep.subr.mxu0 0.0
  %523 = vmatpush1.xpose.msra.mxu0 0.0
  %524 = vmatprep.subr.mxu0 0.0
  %525 = vmatpush1.xpose.msra.mxu0 0.0
  %526 = vmatprep.subr.mxu0 0.0
  %527 = vmatpush1.xpose.msra.mxu0 0.0
  %528 = vmatprep.subr.mxu0 0.0
  %529 = vmatpush1.xpose.msra.mxu0 0.0
  %530 = vmatprep.subr.mxu0 0.0
  %531 = vmatpush1.xpose.msra.mxu0 0.0
  %532 = vmatprep.subr.mxu0 0.0
  %533 = vmatpush1.xpose.msra.mxu0 0.0
  %534 = vmatprep.subr.mxu0 0.0
  %535 = vmatpush1.xpose.msra.mxu0 0.0
  %536 = vmatprep.subr.mxu0 0.0
  %537 = vmatpush1.xpose.msra.mxu0 0.0
  %538 = vmatprep.subr.mxu0 0.0
  %539 = vmatpush1.xpose.msra.mxu0 0.0
  %540 = vmatprep.subr.mxu0 0.0
  %541 = vmatpush1.xpose.msra.mxu0 0.0
  %542 = vmatprep.subr.mxu0 0.0
  %543 = vmatpush1.xpose.msra.mxu0 0.0
  %544 = vmatprep.subr.mxu0 0.0
  %545 = vmatpush1.xpose.msra.mxu0 0.0
  %546 = vmatprep.subr.mxu0 0.0
  %547 = vmatpush1.xpose.msra.mxu0 0.0
  %548 = vmatprep.subr.mxu0 0.0
  %549 = vmatpush1.xpose.msra.mxu0 0.0
  %550 = vmatprep.mubr.f32.mxu0 0.0
  %551 = vmatmul.mubr.f32.gmra.mrb[0].mxu0 %v478
  %v552 = vpop.f32.mrb[0].mxu0
  %v553 = vadd.f32 0.0, %v552
  %v554 = vpop.f32.mrb[0].mxu0
  %555 = vmatprep.mubr.f32.mxu0 0.0
  %556 = vmatmul.mubr.f32.gmra.mrb[0].mxu0 %v480
  %v557 = vpop.f32.mrb[0].mxu0
  %v558 = vadd.f32 0.0, %v557
  %v559 = vpop.f32.mrb[0].mxu0
  %560 = vdwg.mxu0
  %v561 = vmul.f32 %v553, 0.35355338
  %v562 = vmul.f32 %v558, 0.35355338
  %v563 = vadd.f32 %v561, %v156
  %v564 = vadd.f32 %v562, %v157
  %v565 = vsel %vm360, %v563, -inf
  %566 = vmax.xlane.f32.xlu0 %v565
  %v567 = vpop.xlane.xlu0 %566
  %v568 = vsel %vm360, %v564, -inf
  %569 = vmax.xlane.f32.xlu0 %v568
  %v570 = vpop.xlane.xlu0 %569
  %v571 = vsub.f32 %v563, %v567
  %v572 = vsub.f32 %v564, %v570
  %v573 = vmul.f32 %v571, 1.442695
  %v574 = vpow.pop %v573
  %v575 = vmul.f32 %v572, 1.442695
  %v576 = vpow.pop %v575
  %v577 = vsel %vm360, %v574, 0.0
  %578 = vadd.xlane.f32.xlu0 %v577
  %v579 = vpop.xlane.xlu0 %578
  %v580 = vsel %vm360, %v576, 0.0
  %581 = vadd.xlane.f32.xlu0 %v580
  %v582 = vpop.xlane.xlu0 %581
  %v583 = vrcp.pop %v579
  %v584 = vrcp.pop %v582
  %v585 = vmul.f32 %v574, %v583
  %v586 = vmul.f32 %v576, %v584
  %587 = vrot.lane.b32.xlu0 %v260, 56
  %v588 = vpop.permute.xlu0 %587
  %589 = vrot.lane.b32.xlu0 %v263, 56
  %v590 = vpop.permute.xlu0 %589
  %v594 = vsel %vm360, %v585, 0
  %v597 = vsel %vm360, %v586, 0
  %599 = vmatprep.subr.mxu0 0.0
  %600 = vmatpush1.msra.mxu0 %v588
  %601 = vmatprep.subr.mxu0 0.0
  %602 = vmatpush1.msra.mxu0 %v590
  %603 = vmatprep.subr.mxu0 0.0
  %604 = vmatpush1.msra.mxu0 0.0
  %605 = vmatprep.subr.mxu0 0.0
  %606 = vmatpush1.msra.mxu0 0.0
  %607 = vmatprep.subr.mxu0 0.0
  %608 = vmatpush1.msra.mxu0 0.0
  %609 = vmatprep.subr.mxu0 0.0
  %610 = vmatpush1.msra.mxu0 0.0
  %611 = vmatprep.subr.mxu0 0.0
  %612 = vmatpush1.msra.mxu0 0.0
  %613 = vmatprep.subr.mxu0 0.0
  %614 = vmatpush1.msra.mxu0 0.0
  %615 = vmatprep.subr.mxu0 0.0
  %616 = vmatpush1.msra.mxu0 0.0
  %617 = vmatprep.subr.mxu0 0.0
  %618 = vmatpush1.msra.mxu0 0.0
  %619 = vmatprep.subr.mxu0 0.0
  %620 = vmatpush1.msra.mxu0 0.0
  %621 = vmatprep.subr.mxu0 0.0
  %622 = vmatpush1.msra.mxu0 0.0
  %623 = vmatprep.subr.mxu0 0.0
  %624 = vmatpush1.msra.mxu0 0.0
  %625 = vmatprep.subr.mxu0 0.0
  %626 = vmatpush1.msra.mxu0 0.0
  %627 = vmatprep.subr.mxu0 0.0
  %628 = vmatpush1.msra.mxu0 0.0
  %629 = vmatprep.subr.mxu0 0.0
  %630 = vmatpush1.msra.mxu0 0.0
  %631 = vmatprep.subr.mxu0 0.0
  %632 = vmatpush1.msra.mxu0 0.0
  %633 = vmatprep.subr.mxu0 0.0
  %634 = vmatpush1.msra.mxu0 0.0
  %635 = vmatprep.subr.mxu0 0.0
  %636 = vmatpush1.msra.mxu0 0.0
  %637 = vmatprep.subr.mxu0 0.0
  %638 = vmatpush1.msra.mxu0 0.0
  %639 = vmatprep.subr.mxu0 0.0
  %640 = vmatpush1.msra.mxu0 0.0
  %641 = vmatprep.subr.mxu0 0.0
  %642 = vmatpush1.msra.mxu0 0.0
  %643 = vmatprep.subr.mxu0 0.0
  %644 = vmatpush1.msra.mxu0 0.0
  %645 = vmatprep.subr.mxu0 0.0
  %646 = vmatpush1.msra.mxu0 0.0
  %647 = vmatprep.subr.mxu0 0.0
  %648 = vmatpush1.msra.mxu0 0.0
  %649 = vmatprep.subr.mxu0 0.0
  %650 = vmatpush1.msra.mxu0 0.0
  %651 = vmatprep.subr.mxu0 0.0
  %652 = vmatpush1.msra.mxu0 0.0
  %653 = vmatprep.subr.mxu0 0.0
  %654 = vmatpush1.msra.mxu0 0.0
  %655 = vmatprep.subr.mxu0 0.0
  %656 = vmatpush1.msra.mxu0 0.0
  %657 = vmatprep.subr.mxu0 0.0
  %658 = vmatpush1.msra.mxu0 0.0
  %659 = vmatprep.subr.mxu0 0.0
  %660 = vmatpush1.msra.mxu0 0.0
  %661 = vmatprep.subr.mxu0 0.0
  %662 = vmatpush1.msra.mxu0 0.0
  %663 = vmatprep.mubr.f32.mxu0 0.0
  %664 = vmatmul.mubr.f32.gmra.mrb[0].mxu0 %v594
  %v665 = vpop.f32.mrb[0].mxu0
  %v666 = vadd.f32 0.0, %v665
  %v667 = vpop.f32.mrb[0].mxu0
  %668 = vmatprep.mubr.f32.mxu0 0.0
  %669 = vmatmul.mubr.f32.gmra.mrb[0].mxu0 %v597
  %v670 = vpop.f32.mrb[0].mxu0
  %v671 = vadd.f32 0.0, %v670
  %v672 = vpop.f32.mrb[0].mxu0
  %673 = vdwg.mxu0
  %674 = vrot.lane.b32.xlu0 %v260, 112
  %v675 = vpop.permute.xlu0 %674
  %676 = vrot.lane.b32.xlu0 %v263, 112
  %v677 = vpop.permute.xlu0 %676
  %678 = vrot.lane.b32.xlu0 %v260, 80
  %v679 = vpop.permute.xlu0 %678
  %680 = vrot.lane.b32.xlu0 %v263, 80
  %v681 = vpop.permute.xlu0 %680
  %v682 = vsel %vm272, %v675, 0
  %v684 = vsel %vm272, %v677, 0
  %v686 = vsel %vm272, %v679, 0
  %v688 = vsel %vm272, %v681, 0
  %690 = vmatprep.subr.mxu0 0.0
  %691 = vmatpush1.xpose.msra.mxu0 %v686
  %692 = vmatprep.subr.mxu0 0.0
  %693 = vmatpush1.xpose.msra.mxu0 %v688
  %694 = vmatprep.subr.mxu0 0.0
  %695 = vmatpush1.xpose.msra.mxu0 0.0
  %696 = vmatprep.subr.mxu0 0.0
  %697 = vmatpush1.xpose.msra.mxu0 0.0
  %698 = vmatprep.subr.mxu0 0.0
  %699 = vmatpush1.xpose.msra.mxu0 0.0
  %700 = vmatprep.subr.mxu0 0.0
  %701 = vmatpush1.xpose.msra.mxu0 0.0
  %702 = vmatprep.subr.mxu0 0.0
  %703 = vmatpush1.xpose.msra.mxu0 0.0
  %704 = vmatprep.subr.mxu0 0.0
  %705 = vmatpush1.xpose.msra.mxu0 0.0
  %706 = vmatprep.subr.mxu0 0.0
  %707 = vmatpush1.xpose.msra.mxu0 0.0
  %708 = vmatprep.subr.mxu0 0.0
  %709 = vmatpush1.xpose.msra.mxu0 0.0
  %710 = vmatprep.subr.mxu0 0.0
  %711 = vmatpush1.xpose.msra.mxu0 0.0
  %712 = vmatprep.subr.mxu0 0.0
  %713 = vmatpush1.xpose.msra.mxu0 0.0
  %714 = vmatprep.subr.mxu0 0.0
  %715 = vmatpush1.xpose.msra.mxu0 0.0
  %716 = vmatprep.subr.mxu0 0.0
  %717 = vmatpush1.xpose.msra.mxu0 0.0
  %718 = vmatprep.subr.mxu0 0.0
  %719 = vmatpush1.xpose.msra.mxu0 0.0
  %720 = vmatprep.subr.mxu0 0.0
  %721 = vmatpush1.xpose.msra.mxu0 0.0
  %722 = vmatprep.subr.mxu0 0.0
  %723 = vmatpush1.xpose.msra.mxu0 0.0
  %724 = vmatprep.subr.mxu0 0.0
  %725 = vmatpush1.xpose.msra.mxu0 0.0
  %726 = vmatprep.subr.mxu0 0.0
  %727 = vmatpush1.xpose.msra.mxu0 0.0
  %728 = vmatprep.subr.mxu0 0.0
  %729 = vmatpush1.xpose.msra.mxu0 0.0
  %730 = vmatprep.subr.mxu0 0.0
  %731 = vmatpush1.xpose.msra.mxu0 0.0
  %732 = vmatprep.subr.mxu0 0.0
  %733 = vmatpush1.xpose.msra.mxu0 0.0
  %734 = vmatprep.subr.mxu0 0.0
  %735 = vmatpush1.xpose.msra.mxu0 0.0
  %736 = vmatprep.subr.mxu0 0.0
  %737 = vmatpush1.xpose.msra.mxu0 0.0
  %738 = vmatprep.subr.mxu0 0.0
  %739 = vmatpush1.xpose.msra.mxu0 0.0
  %740 = vmatprep.subr.mxu0 0.0
  %741 = vmatpush1.xpose.msra.mxu0 0.0
  %742 = vmatprep.subr.mxu0 0.0
  %743 = vmatpush1.xpose.msra.mxu0 0.0
  %744 = vmatprep.subr.mxu0 0.0
  %745 = vmatpush1.xpose.msra.mxu0 0.0
  %746 = vmatprep.subr.mxu0 0.0
  %747 = vmatpush1.xpose.msra.mxu0 0.0
  %748 = vmatprep.subr.mxu0 0.0
  %749 = vmatpush1.xpose.msra.mxu0 0.0
  %750 = vmatprep.subr.mxu0 0.0
  %751 = vmatpush1.xpose.msra.mxu0 0.0
  %752 = vmatprep.subr.mxu0 0.0
  %753 = vmatpush1.xpose.msra.mxu0 0.0
  %754 = vmatprep.mubr.f32.mxu0 0.0
  %755 = vmatmul.mubr.f32.gmra.mrb[0].mxu0 %v682
  %v756 = vpop.f32.mrb[0].mxu0
  %v757 = vadd.f32 0.0, %v756
  %v758 = vpop.f32.mrb[0].mxu0
  %759 = vmatprep.mubr.f32.mxu0 0.0
  %760 = vmatmul.mubr.f32.gmra.mrb[0].mxu0 %v684
  %v761 = vpop.f32.mrb[0].mxu0
  %v762 = vadd.f32 0.0, %v761
  %v763 = vpop.f32.mrb[0].mxu0
  %764 = vdwg.mxu0
  %v765 = vmul.f32 %v757, 0.35355338
  %v766 = vmul.f32 %v762, 0.35355338
  %v767 = vadd.f32 %v765, %v156
  %v768 = vadd.f32 %v766, %v157
  %v769 = vsel %vm360, %v767, -inf
  %770 = vmax.xlane.f32.xlu0 %v769
  %v771 = vpop.xlane.xlu0 %770
  %v772 = vsel %vm360, %v768, -inf
  %773 = vmax.xlane.f32.xlu0 %v772
  %v774 = vpop.xlane.xlu0 %773
  %v775 = vsub.f32 %v767, %v771
  %v776 = vsub.f32 %v768, %v774
  %v777 = vmul.f32 %v775, 1.442695
  %v778 = vpow.pop %v777
  %v779 = vmul.f32 %v776, 1.442695
  %v780 = vpow.pop %v779
  %v781 = vsel %vm360, %v778, 0.0
  %782 = vadd.xlane.f32.xlu0 %v781
  %v783 = vpop.xlane.xlu0 %782
  %v784 = vsel %vm360, %v780, 0.0
  %785 = vadd.xlane.f32.xlu0 %v784
  %v786 = vpop.xlane.xlu0 %785
  %v787 = vrcp.pop %v783
  %v788 = vrcp.pop %v786
  %v789 = vmul.f32 %v778, %v787
  %v790 = vmul.f32 %v780, %v788
  %791 = vrot.lane.b32.xlu0 %v260, 48
  %v792 = vpop.permute.xlu0 %791
  %793 = vrot.lane.b32.xlu0 %v263, 48
  %v794 = vpop.permute.xlu0 %793
  %v798 = vsel %vm360, %v789, 0
  %v801 = vsel %vm360, %v790, 0
  %803 = vmatprep.subr.mxu0 0.0
  %804 = vmatpush1.msra.mxu0 %v792
  %805 = vmatprep.subr.mxu0 0.0
  %806 = vmatpush1.msra.mxu0 %v794
  %807 = vmatprep.subr.mxu0 0.0
  %808 = vmatpush1.msra.mxu0 0.0
  %809 = vmatprep.subr.mxu0 0.0
  %810 = vmatpush1.msra.mxu0 0.0
  %811 = vmatprep.subr.mxu0 0.0
  %812 = vmatpush1.msra.mxu0 0.0
  %813 = vmatprep.subr.mxu0 0.0
  %814 = vmatpush1.msra.mxu0 0.0
  %815 = vmatprep.subr.mxu0 0.0
  %816 = vmatpush1.msra.mxu0 0.0
  %817 = vmatprep.subr.mxu0 0.0
  %818 = vmatpush1.msra.mxu0 0.0
  %819 = vmatprep.subr.mxu0 0.0
  %820 = vmatpush1.msra.mxu0 0.0
  %821 = vmatprep.subr.mxu0 0.0
  %822 = vmatpush1.msra.mxu0 0.0
  %823 = vmatprep.subr.mxu0 0.0
  %824 = vmatpush1.msra.mxu0 0.0
  %825 = vmatprep.subr.mxu0 0.0
  %826 = vmatpush1.msra.mxu0 0.0
  %827 = vmatprep.subr.mxu0 0.0
  %828 = vmatpush1.msra.mxu0 0.0
  %829 = vmatprep.subr.mxu0 0.0
  %830 = vmatpush1.msra.mxu0 0.0
  %831 = vmatprep.subr.mxu0 0.0
  %832 = vmatpush1.msra.mxu0 0.0
  %833 = vmatprep.subr.mxu0 0.0
  %834 = vmatpush1.msra.mxu0 0.0
  %835 = vmatprep.subr.mxu0 0.0
  %836 = vmatpush1.msra.mxu0 0.0
  %837 = vmatprep.subr.mxu0 0.0
  %838 = vmatpush1.msra.mxu0 0.0
  %839 = vmatprep.subr.mxu0 0.0
  %840 = vmatpush1.msra.mxu0 0.0
  %841 = vmatprep.subr.mxu0 0.0
  %842 = vmatpush1.msra.mxu0 0.0
  %843 = vmatprep.subr.mxu0 0.0
  %844 = vmatpush1.msra.mxu0 0.0
  %845 = vmatprep.subr.mxu0 0.0
  %846 = vmatpush1.msra.mxu0 0.0
  %847 = vmatprep.subr.mxu0 0.0
  %848 = vmatpush1.msra.mxu0 0.0
  %849 = vmatprep.subr.mxu0 0.0
  %850 = vmatpush1.msra.mxu0 0.0
  %851 = vmatprep.subr.mxu0 0.0
  %852 = vmatpush1.msra.mxu0 0.0
  %853 = vmatprep.subr.mxu0 0.0
  %854 = vmatpush1.msra.mxu0 0.0
  %855 = vmatprep.subr.mxu0 0.0
  %856 = vmatpush1.msra.mxu0 0.0
  %857 = vmatprep.subr.mxu0 0.0
  %858 = vmatpush1.msra.mxu0 0.0
  %859 = vmatprep.subr.mxu0 0.0
  %860 = vmatpush1.msra.mxu0 0.0
  %861 = vmatprep.subr.mxu0 0.0
  %862 = vmatpush1.msra.mxu0 0.0
  %863 = vmatprep.subr.mxu0 0.0
  %864 = vmatpush1.msra.mxu0 0.0
  %865 = vmatprep.subr.mxu0 0.0
  %866 = vmatpush1.msra.mxu0 0.0
  %867 = vmatprep.mubr.f32.mxu0 0.0
  %868 = vmatmul.mubr.f32.gmra.mrb[0].mxu0 %v798
  %v869 = vpop.f32.mrb[0].mxu0
  %v870 = vadd.f32 0.0, %v869
  %v871 = vpop.f32.mrb[0].mxu0
  %872 = vmatprep.mubr.f32.mxu0 0.0
  %873 = vmatmul.mubr.f32.gmra.mrb[0].mxu0 %v801
  %v874 = vpop.f32.mrb[0].mxu0
  %v875 = vadd.f32 0.0, %v874
  %v876 = vpop.f32.mrb[0].mxu0
  %877 = vdwg.mxu0
  %878 = vrot.lane.b32.xlu0 %v260, 104
  %v879 = vpop.permute.xlu0 %878
  %880 = vrot.lane.b32.xlu0 %v263, 104
  %v881 = vpop.permute.xlu0 %880
  %882 = vrot.lane.b32.xlu0 %v260, 72
  %v883 = vpop.permute.xlu0 %882
  %884 = vrot.lane.b32.xlu0 %v263, 72
  %v885 = vpop.permute.xlu0 %884
  %v886 = vsel %vm272, %v879, 0
  %v888 = vsel %vm272, %v881, 0
  %v890 = vsel %vm272, %v883, 0
  %v892 = vsel %vm272, %v885, 0
  %894 = vmatprep.subr.mxu0 0.0
  %895 = vmatpush1.xpose.msra.mxu0 %v890
  %896 = vmatprep.subr.mxu0 0.0
  %897 = vmatpush1.xpose.msra.mxu0 %v892
  %898 = vmatprep.subr.mxu0 0.0
  %899 = vmatpush1.xpose.msra.mxu0 0.0
  %900 = vmatprep.subr.mxu0 0.0
  %901 = vmatpush1.xpose.msra.mxu0 0.0
  %902 = vmatprep.subr.mxu0 0.0
  %903 = vmatpush1.xpose.msra.mxu0 0.0
  %904 = vmatprep.subr.mxu0 0.0
  %905 = vmatpush1.xpose.msra.mxu0 0.0
  %906 = vmatprep.subr.mxu0 0.0
  %907 = vmatpush1.xpose.msra.mxu0 0.0
  %908 = vmatprep.subr.mxu0 0.0
  %909 = vmatpush1.xpose.msra.mxu0 0.0
  %910 = vmatprep.subr.mxu0 0.0
  %911 = vmatpush1.xpose.msra.mxu0 0.0
  %912 = vmatprep.subr.mxu0 0.0
  %913 = vmatpush1.xpose.msra.mxu0 0.0
  %914 = vmatprep.subr.mxu0 0.0
  %915 = vmatpush1.xpose.msra.mxu0 0.0
  %916 = vmatprep.subr.mxu0 0.0
  %917 = vmatpush1.xpose.msra.mxu0 0.0
  %918 = vmatprep.subr.mxu0 0.0
  %919 = vmatpush1.xpose.msra.mxu0 0.0
  %920 = vmatprep.subr.mxu0 0.0
  %921 = vmatpush1.xpose.msra.mxu0 0.0
  %922 = vmatprep.subr.mxu0 0.0
  %923 = vmatpush1.xpose.msra.mxu0 0.0
  %924 = vmatprep.subr.mxu0 0.0
  %925 = vmatpush1.xpose.msra.mxu0 0.0
  %926 = vmatprep.subr.mxu0 0.0
  %927 = vmatpush1.xpose.msra.mxu0 0.0
  %928 = vmatprep.subr.mxu0 0.0
  %929 = vmatpush1.xpose.msra.mxu0 0.0
  %930 = vmatprep.subr.mxu0 0.0
  %931 = vmatpush1.xpose.msra.mxu0 0.0
  %932 = vmatprep.subr.mxu0 0.0
  %933 = vmatpush1.xpose.msra.mxu0 0.0
  %934 = vmatprep.subr.mxu0 0.0
  %935 = vmatpush1.xpose.msra.mxu0 0.0
  %936 = vmatprep.subr.mxu0 0.0
  %937 = vmatpush1.xpose.msra.mxu0 0.0
  %938 = vmatprep.subr.mxu0 0.0
  %939 = vmatpush1.xpose.msra.mxu0 0.0
  %940 = vmatprep.subr.mxu0 0.0
  %941 = vmatpush1.xpose.msra.mxu0 0.0
  %942 = vmatprep.subr.mxu0 0.0
  %943 = vmatpush1.xpose.msra.mxu0 0.0
  %944 = vmatprep.subr.mxu0 0.0
  %945 = vmatpush1.xpose.msra.mxu0 0.0
  %946 = vmatprep.subr.mxu0 0.0
  %947 = vmatpush1.xpose.msra.mxu0 0.0
  %948 = vmatprep.subr.mxu0 0.0
  %949 = vmatpush1.xpose.msra.mxu0 0.0
  %950 = vmatprep.subr.mxu0 0.0
  %951 = vmatpush1.xpose.msra.mxu0 0.0
  %952 = vmatprep.subr.mxu0 0.0
  %953 = vmatpush1.xpose.msra.mxu0 0.0
  %954 = vmatprep.subr.mxu0 0.0
  %955 = vmatpush1.xpose.msra.mxu0 0.0
  %956 = vmatprep.subr.mxu0 0.0
  %957 = vmatpush1.xpose.msra.mxu0 0.0
  %958 = vmatprep.mubr.f32.mxu0 0.0
  %959 = vmatmul.mubr.f32.gmra.mrb[0].mxu0 %v886
  %v960 = vpop.f32.mrb[0].mxu0
  %v961 = vadd.f32 0.0, %v960
  %v962 = vpop.f32.mrb[0].mxu0
  %963 = vmatprep.mubr.f32.mxu0 0.0
  %964 = vmatmul.mubr.f32.gmra.mrb[0].mxu0 %v888
  %v965 = vpop.f32.mrb[0].mxu0
  %v966 = vadd.f32 0.0, %v965
  %v967 = vpop.f32.mrb[0].mxu0
  %968 = vdwg.mxu0
  %v969 = vmul.f32 %v961, 0.35355338
  %v970 = vmul.f32 %v966, 0.35355338
  %v971 = vadd.f32 %v969, %v156
  %v972 = vadd.f32 %v970, %v157
  %v973 = vsel %vm360, %v971, -inf
  %974 = vmax.xlane.f32.xlu0 %v973
  %v975 = vpop.xlane.xlu0 %974
  %v976 = vsel %vm360, %v972, -inf
  %977 = vmax.xlane.f32.xlu0 %v976
  %v978 = vpop.xlane.xlu0 %977
  %v979 = vsub.f32 %v971, %v975
  %v980 = vsub.f32 %v972, %v978
  %v981 = vmul.f32 %v979, 1.442695
  %v982 = vpow.pop %v981
  %v983 = vmul.f32 %v980, 1.442695
  %v984 = vpow.pop %v983
  %v985 = vsel %vm360, %v982, 0.0
  %986 = vadd.xlane.f32.xlu0 %v985
  %v987 = vpop.xlane.xlu0 %986
  %v988 = vsel %vm360, %v984, 0.0
  %989 = vadd.xlane.f32.xlu0 %v988
  %v990 = vpop.xlane.xlu0 %989
  %v991 = vrcp.pop %v987
  %v992 = vrcp.pop %v990
  %v993 = vmul.f32 %v982, %v991
  %v994 = vmul.f32 %v984, %v992
  %995 = vrot.lane.b32.xlu0 %v260, 40
  %v996 = vpop.permute.xlu0 %995
  %997 = vrot.lane.b32.xlu0 %v263, 40
  %v998 = vpop.permute.xlu0 %997
  %v1002 = vsel %vm360, %v993, 0
  %v1005 = vsel %vm360, %v994, 0
  %1007 = vmatprep.subr.mxu0 0.0
  %1008 = vmatpush1.msra.mxu0 %v996
  %1009 = vmatprep.subr.mxu0 0.0
  %1010 = vmatpush1.msra.mxu0 %v998
  %1011 = vmatprep.subr.mxu0 0.0
  %1012 = vmatpush1.msra.mxu0 0.0
  %1013 = vmatprep.subr.mxu0 0.0
  %1014 = vmatpush1.msra.mxu0 0.0
  %1015 = vmatprep.subr.mxu0 0.0
  %1016 = vmatpush1.msra.mxu0 0.0
  %1017 = vmatprep.subr.mxu0 0.0
  %1018 = vmatpush1.msra.mxu0 0.0
  %1019 = vmatprep.subr.mxu0 0.0
  %1020 = vmatpush1.msra.mxu0 0.0
  %1021 = vmatprep.subr.mxu0 0.0
  %1022 = vmatpush1.msra.mxu0 0.0
  %1023 = vmatprep.subr.mxu0 0.0
  %1024 = vmatpush1.msra.mxu0 0.0
  %1025 = vmatprep.subr.mxu0 0.0
  %1026 = vmatpush1.msra.mxu0 0.0
  %1027 = vmatprep.subr.mxu0 0.0
  %1028 = vmatpush1.msra.mxu0 0.0
  %1029 = vmatprep.subr.mxu0 0.0
  %1030 = vmatpush1.msra.mxu0 0.0
  %1031 = vmatprep.subr.mxu0 0.0
  %1032 = vmatpush1.msra.mxu0 0.0
  %1033 = vmatprep.subr.mxu0 0.0
  %1034 = vmatpush1.msra.mxu0 0.0
  %1035 = vmatprep.subr.mxu0 0.0
  %1036 = vmatpush1.msra.mxu0 0.0
  %1037 = vmatprep.subr.mxu0 0.0
  %1038 = vmatpush1.msra.mxu0 0.0
  %1039 = vmatprep.subr.mxu0 0.0
  %1040 = vmatpush1.msra.mxu0 0.0
  %1041 = vmatprep.subr.mxu0 0.0
  %1042 = vmatpush1.msra.mxu0 0.0
  %1043 = vmatprep.subr.mxu0 0.0
  %1044 = vmatpush1.msra.mxu0 0.0
  %1045 = vmatprep.subr.mxu0 0.0
  %1046 = vmatpush1.msra.mxu0 0.0
  %1047 = vmatprep.subr.mxu0 0.0
  %1048 = vmatpush1.msra.mxu0 0.0
  %1049 = vmatprep.subr.mxu0 0.0
  %1050 = vmatpush1.msra.mxu0 0.0
  %1051 = vmatprep.subr.mxu0 0.0
  %1052 = vmatpush1.msra.mxu0 0.0
  %1053 = vmatprep.subr.mxu0 0.0
  %1054 = vmatpush1.msra.mxu0 0.0
  %1055 = vmatprep.subr.mxu0 0.0
  %1056 = vmatpush1.msra.mxu0 0.0
  %1057 = vmatprep.subr.mxu0 0.0
  %1058 = vmatpush1.msra.mxu0 0.0
  %1059 = vmatprep.subr.mxu0 0.0
  %1060 = vmatpush1.msra.mxu0 0.0
  %1061 = vmatprep.subr.mxu0 0.0
  %1062 = vmatpush1.msra.mxu0 0.0
  %1063 = vmatprep.subr.mxu0 0.0
  %1064 = vmatpush1.msra.mxu0 0.0
  %1065 = vmatprep.subr.mxu0 0.0
  %1066 = vmatpush1.msra.mxu0 0.0
  %1067 = vmatprep.subr.mxu0 0.0
  %1068 = vmatpush1.msra.mxu0 0.0
  %1069 = vmatprep.subr.mxu0 0.0
  %1070 = vmatpush1.msra.mxu0 0.0
  %1071 = vmatprep.mubr.f32.mxu0 0.0
  %1072 = vmatmul.mubr.f32.gmra.mrb[0].mxu0 %v1002
  %v1073 = vpop.f32.mrb[0].mxu0
  %v1074 = vadd.f32 0.0, %v1073
  %v1075 = vpop.f32.mrb[0].mxu0
  %1076 = vmatprep.mubr.f32.mxu0 0.0
  %1077 = vmatmul.mubr.f32.gmra.mrb[0].mxu0 %v1005
  %v1078 = vpop.f32.mrb[0].mxu0
  %v1079 = vadd.f32 0.0, %v1078
  %v1080 = vpop.f32.mrb[0].mxu0
  %1081 = vdwg.mxu0
  %1084 = vrot.lane.b32.xlu0 %v666, 8
  %v1085 = vpop.permute.xlu0 %1084
  %1086 = vrot.lane.b32.xlu0 %v671, 8
  %v1087 = vpop.permute.xlu0 %1086
  %1092 = vrot.lane.b32.xlu0 %v870, 16
  %v1093 = vpop.permute.xlu0 %1092
  %1094 = vrot.lane.b32.xlu0 %v875, 16
  %v1095 = vpop.permute.xlu0 %1094
  %1100 = vrot.lane.b32.xlu0 %v1074, 24
  %v1101 = vpop.permute.xlu0 %1100
  %1102 = vrot.lane.b32.xlu0 %v1079, 24
  %v1103 = vpop.permute.xlu0 %1102
  %v1106 = vsel %vm272, %v462, %v1085
  %v1107 = vsel %vm272, %v467, %v1087
  %v1108 = vsel %vm360, %v1106, %v1093
  %v1109 = vsel %vm360, %v1107, %v1095
  %v1110 = vsel %vm65, %v1108, %v1101
  %v1111 = vsel %vm65, %v1109, %v1103
  %v1112 = vpack.c.bf16 %v1111, %v1110
  %v1113 = vld [vmem:[%s4] sm:$0xf]
  %v1114 = vld [vmem:[%s4 + $0x4] sm:$0xf]
  %v1115 = vld [vmem:[%s4 + $0x8] sm:$0xf]
  %v1116 = vld [vmem:[%s4 + $0xc] sm:$0xf]
  %v1117 = vlaneseq
  %v1118 = vshrl.u32 %v1117, 7
  %v1119 = vsub.s32 0, %v1118
  %v1120 = vrot.slane %v160, %v1119
  %v1125 = vunpack.c.l.b16 %v1113
  %v1126 = vunpack.c.l.b16 %v1114
  %v1127 = vunpack.c.l.b16 %v1115
  %v1128 = vunpack.c.l.b16 %v1116
  %v1129 = vpack.c.b16 %v1126, %v1125
  %v1130 = vpack.c.b16 %v1128, %v1127
  %v1134 = vsel %vm165, %v1112, 0
  %1136 = vmatprep.subr.bf16.mxu0 0
  %1137 = vmatpush1.bf16.msra.mxu0 %v1129
  %1138 = vmatprep.subr.bf16.mxu0 0
  %1139 = vmatpush1.bf16.msra.mxu0 %v1130
  %1140 = vmatprep.subr.bf16.mxu0 0
  %1141 = vmatpush1.bf16.msra.mxu0 0
  %1142 = vmatprep.subr.bf16.mxu0 0
  %1143 = vmatpush1.bf16.msra.mxu0 0
  %1144 = vmatprep.subr.bf16.mxu0 0
  %1145 = vmatpush1.bf16.msra.mxu0 0
  %1146 = vmatprep.subr.bf16.mxu0 0
  %1147 = vmatpush1.bf16.msra.mxu0 0
  %1148 = vmatprep.subr.bf16.mxu0 0
  %1149 = vmatpush1.bf16.msra.mxu0 0
  %1150 = vmatprep.subr.bf16.mxu0 0
  %1151 = vmatpush1.bf16.msra.mxu0 0
  %1152 = vmatprep.subr.bf16.mxu0 0
  %1153 = vmatpush1.bf16.msra.mxu0 0
  %1154 = vmatprep.subr.bf16.mxu0 0
  %1155 = vmatpush1.bf16.msra.mxu0 0
  %1156 = vmatprep.subr.bf16.mxu0 0
  %1157 = vmatpush1.bf16.msra.mxu0 0
  %1158 = vmatprep.subr.bf16.mxu0 0
  %1159 = vmatpush1.bf16.msra.mxu0 0
  %1160 = vmatprep.subr.bf16.mxu0 0
  %1161 = vmatpush1.bf16.msra.mxu0 0
  %1162 = vmatprep.subr.bf16.mxu0 0
  %1163 = vmatpush1.bf16.msra.mxu0 0
  %1164 = vmatprep.subr.bf16.mxu0 0
  %1165 = vmatpush1.bf16.msra.mxu0 0
  %1166 = vmatprep.subr.bf16.mxu0 0
  %1167 = vmatpush1.bf16.msra.mxu0 0
  %1168 = vmatprep.mubr.bf16.mxu0 0
  %1169 = vmatmul.mubr.bf16.gmra.mrb[0].mxu0 %v1134
  %v1170 = vpop.f32.mrb[0].mxu0
  %v1171 = vadd.f32 %v1120, %v1170
  %v1172 = vpop.f32.mrb[0].mxu0
  %v1173 = vpop.f32.mrb[0].mxu0
  %v1174 = vadd.f32 %v1120, %v1173
  %v1175 = vpop.f32.mrb[0].mxu0
  %1176 = vdwg.mxu0
  %v1177 = vadd.f32 %v139, %v1171
  %v1178 = vadd.f32 %v144, %v1174
  %v1179 = vsel %vm165, %v1177, 0.0
  %1180 = vadd.xlane.f32.xlu0 %v1179
  %v1181 = vpop.xlane.xlu0 %1180
  %v1182 = vsel %vm165, %v1178, 0.0
  %1183 = vadd.xlane.f32.xlu0 %v1182
  %v1184 = vpop.xlane.xlu0 %1183
  %v1185 = vmul.f32 %v1181, %v172
  %v1186 = vmul.f32 %v1184, %v172
  %v1187 = vsub.f32 %v1177, %v1185
  %v1188 = vsub.f32 %v1178, %v1186
  %v1189 = vmul.f32 %v1187, %v1187
  %v1190 = vmul.f32 %v1188, %v1188
  %v1191 = vsel %vm165, %v1189, 0.0
  %1192 = vadd.xlane.f32.xlu0 %v1191
  %v1193 = vpop.xlane.xlu0 %1192
  %v1194 = vsel %vm165, %v1190, 0.0
  %1195 = vadd.xlane.f32.xlu0 %v1194
  %v1196 = vpop.xlane.xlu0 %1195
  %v1197 = vmul.f32 %v1193, %v172
  %v1198 = vmul.f32 %v1196, %v172
  %v1199 = vadd.f32 %v1197, 1e-05
  %v1200 = vadd.f32 %v1198, 1e-05
  %v1201 = vrsqrt.pop %v1199
  %v1202 = vrsqrt.pop %v1200
  %v1203 = vmul.f32 %v1187, %v1201
  %v1204 = vmul.f32 %v1188, %v1202
  %v1205 = vlaneseq
  %v1206 = vshrl.u32 %v1205, 7
  %v1207 = vsub.s32 0, %v1206
  %v1208 = vrot.slane %v161, %v1207
  %v1209 = vmul.f32 %v1203, %v1208
  %v1210 = vmul.f32 %v1204, %v1208
  %v1211 = vlaneseq
  %v1212 = vshrl.u32 %v1211, 7
  %v1213 = vsub.s32 0, %v1212
  %v1214 = vrot.slane %v162, %v1213
  %v1215 = vadd.f32 %v1209, %v1214
  %v1216 = vadd.f32 %v1210, %v1214
  %v1217 = vpack.c.bf16 %v1216, %v1215
  %v1218 = vld [vmem:[%s5] sm:$0xf]
  %v1219 = vld [vmem:[%s5 + $0x4] sm:$0xf]
  %v1220 = vld [vmem:[%s5 + $0x8] sm:$0xf]
  %v1221 = vld [vmem:[%s5 + $0xc] sm:$0xf]
  %v1222 = vlaneseq
  %v1223 = vshrl.u32 %v1222, 7
  %v1224 = vsub.s32 0, %v1223
  %v1225 = vrot.slane %v164, %v1224
  %v1230 = vunpack.c.l.b16 %v1218
  %v1231 = vunpack.c.l.b16 %v1219
  %v1232 = vunpack.c.l.b16 %v1220
  %v1233 = vunpack.c.l.b16 %v1221
  %v1234 = vpack.c.b16 %v1231, %v1230
  %v1235 = vpack.c.b16 %v1233, %v1232
  %v1239 = vsel %vm165, %v1217, 0
  %1241 = vmatprep.subr.bf16.mxu0 0
  %1242 = vmatpush1.bf16.msra.mxu0 %v1234
  %1243 = vmatprep.subr.bf16.mxu0 0
  %1244 = vmatpush1.bf16.msra.mxu0 %v1235
  %1245 = vmatprep.subr.bf16.mxu0 0
  %1246 = vmatpush1.bf16.msra.mxu0 0
  %1247 = vmatprep.subr.bf16.mxu0 0
  %1248 = vmatpush1.bf16.msra.mxu0 0
  %1249 = vmatprep.subr.bf16.mxu0 0
  %1250 = vmatpush1.bf16.msra.mxu0 0
  %1251 = vmatprep.subr.bf16.mxu0 0
  %1252 = vmatpush1.bf16.msra.mxu0 0
  %1253 = vmatprep.subr.bf16.mxu0 0
  %1254 = vmatpush1.bf16.msra.mxu0 0
  %1255 = vmatprep.subr.bf16.mxu0 0
  %1256 = vmatpush1.bf16.msra.mxu0 0
  %1257 = vmatprep.subr.bf16.mxu0 0
  %1258 = vmatpush1.bf16.msra.mxu0 0
  %1259 = vmatprep.subr.bf16.mxu0 0
  %1260 = vmatpush1.bf16.msra.mxu0 0
  %1261 = vmatprep.subr.bf16.mxu0 0
  %1262 = vmatpush1.bf16.msra.mxu0 0
  %1263 = vmatprep.subr.bf16.mxu0 0
  %1264 = vmatpush1.bf16.msra.mxu0 0
  %1265 = vmatprep.subr.bf16.mxu0 0
  %1266 = vmatpush1.bf16.msra.mxu0 0
  %1267 = vmatprep.subr.bf16.mxu0 0
  %1268 = vmatpush1.bf16.msra.mxu0 0
  %1269 = vmatprep.subr.bf16.mxu0 0
  %1270 = vmatpush1.bf16.msra.mxu0 0
  %1271 = vmatprep.subr.bf16.mxu0 0
  %1272 = vmatpush1.bf16.msra.mxu0 0
  %1273 = vmatprep.mubr.bf16.mxu0 0
  %1274 = vmatmul.mubr.bf16.gmra.mrb[0].mxu0 %v1239
  %v1275 = vpop.f32.mrb[0].mxu0
  %v1276 = vadd.f32 %v1225, %v1275
  %v1277 = vpop.f32.mrb[0].mxu0
  %v1278 = vpop.f32.mrb[0].mxu0
  %v1279 = vadd.f32 %v1225, %v1278
  %v1280 = vpop.f32.mrb[0].mxu0
  %1281 = vdwg.mxu0
  %v1282 = vmax.f32 %v1276, 0.0
  %v1283 = vmax.f32 %v1279, 0.0
  %v1284 = vpack.c.bf16 %v1283, %v1282
  %v1285 = vld [vmem:[%s6] sm:$0xf]
  %v1286 = vld [vmem:[%s6 + $0x4] sm:$0xf]
  %v1287 = vld [vmem:[%s6 + $0x8] sm:$0xf]
  %v1288 = vld [vmem:[%s6 + $0xc] sm:$0xf]
  %v1289 = vld [vmem:[%s6 + $0x10] sm:$0xf]
  %v1290 = vld [vmem:[%s6 + $0x14] sm:$0xf]
  %v1291 = vld [vmem:[%s6 + $0x18] sm:$0xf]
  %v1292 = vld [vmem:[%s6 + $0x1c] sm:$0xf]
  %v1293 = vld [vmem:[%s6 + $0x20] sm:$0xf]
  %v1294 = vld [vmem:[%s6 + $0x24] sm:$0xf]
  %v1295 = vld [vmem:[%s6 + $0x28] sm:$0xf]
  %v1296 = vld [vmem:[%s6 + $0x2c] sm:$0xf]
  %v1297 = vld [vmem:[%s6 + $0x30] sm:$0xf]
  %v1298 = vld [vmem:[%s6 + $0x34] sm:$0xf]
  %v1299 = vld [vmem:[%s6 + $0x38] sm:$0xf]
  %v1300 = vld [vmem:[%s6 + $0x3c] sm:$0xf]
  %v1301 = vlaneseq
  %v1302 = vshrl.u32 %v1301, 7
  %v1303 = vsub.s32 0, %v1302
  %v1304 = vrot.slane %v163, %v1303
  %v1321 = vunpack.c.l.b16 %v1285
  %v1322 = vunpack.c.l.b16 %v1286
  %v1323 = vunpack.c.l.b16 %v1287
  %v1324 = vunpack.c.l.b16 %v1288
  %v1325 = vunpack.c.l.b16 %v1289
  %v1326 = vunpack.c.l.b16 %v1290
  %v1327 = vunpack.c.l.b16 %v1291
  %v1328 = vunpack.c.l.b16 %v1292
  %v1329 = vunpack.c.l.b16 %v1293
  %v1330 = vunpack.c.l.b16 %v1294
  %v1331 = vunpack.c.l.b16 %v1295
  %v1332 = vunpack.c.l.b16 %v1296
  %v1333 = vunpack.c.l.b16 %v1297
  %v1334 = vunpack.c.l.b16 %v1298
  %v1335 = vunpack.c.l.b16 %v1299
  %v1336 = vunpack.c.l.b16 %v1300
  %v1337 = vpack.c.b16 %v1322, %v1321
  %v1338 = vpack.c.b16 %v1324, %v1323
  %v1339 = vpack.c.b16 %v1326, %v1325
  %v1340 = vpack.c.b16 %v1328, %v1327
  %v1341 = vpack.c.b16 %v1330, %v1329
  %v1342 = vpack.c.b16 %v1332, %v1331
  %v1343 = vpack.c.b16 %v1334, %v1333
  %v1344 = vpack.c.b16 %v1336, %v1335
  %1353 = vmatprep.subr.bf16.mxu0 0
  %1354 = vmatpush1.bf16.msra.mxu0 %v1337
  %1355 = vmatprep.subr.bf16.mxu0 0
  %1356 = vmatpush1.bf16.msra.mxu0 %v1338
  %1357 = vmatprep.subr.bf16.mxu0 0
  %1358 = vmatpush1.bf16.msra.mxu0 %v1339
  %1359 = vmatprep.subr.bf16.mxu0 0
  %1360 = vmatpush1.bf16.msra.mxu0 %v1340
  %1361 = vmatprep.subr.bf16.mxu0 0
  %1362 = vmatpush1.bf16.msra.mxu0 %v1341
  %1363 = vmatprep.subr.bf16.mxu0 0
  %1364 = vmatpush1.bf16.msra.mxu0 %v1342
  %1365 = vmatprep.subr.bf16.mxu0 0
  %1366 = vmatpush1.bf16.msra.mxu0 %v1343
  %1367 = vmatprep.subr.bf16.mxu0 0
  %1368 = vmatpush1.bf16.msra.mxu0 %v1344
  %1369 = vmatprep.subr.bf16.mxu0 0
  %1370 = vmatpush1.bf16.msra.mxu0 0
  %1371 = vmatprep.subr.bf16.mxu0 0
  %1372 = vmatpush1.bf16.msra.mxu0 0
  %1373 = vmatprep.subr.bf16.mxu0 0
  %1374 = vmatpush1.bf16.msra.mxu0 0
  %1375 = vmatprep.subr.bf16.mxu0 0
  %1376 = vmatpush1.bf16.msra.mxu0 0
  %1377 = vmatprep.subr.bf16.mxu0 0
  %1378 = vmatpush1.bf16.msra.mxu0 0
  %1379 = vmatprep.subr.bf16.mxu0 0
  %1380 = vmatpush1.bf16.msra.mxu0 0
  %1381 = vmatprep.subr.bf16.mxu0 0
  %1382 = vmatpush1.bf16.msra.mxu0 0
  %1383 = vmatprep.subr.bf16.mxu0 0
  %1384 = vmatpush1.bf16.msra.mxu0 0
  %1385 = vmatprep.mubr.bf16.mxu0 0
  %1386 = vmatmul.mubr.bf16.gmra.mrb[0].mxu0 %v1284
  %v1387 = vpop.f32.mrb[0].mxu0
  %v1388 = vadd.f32 %v1304, %v1387
  %v1389 = vpop.f32.mrb[0].mxu0
  %v1390 = vpop.f32.mrb[0].mxu0
  %v1391 = vadd.f32 %v1304, %v1390
  %v1392 = vpop.f32.mrb[0].mxu0
  %1393 = vdwg.mxu0
  %v1394 = vadd.f32 %v1177, %v1388
  %v1395 = vadd.f32 %v1178, %v1391
  %v1396 = vld [vmem:[%s7 + $0x6] sm:$0x1]
  %v1397 = vld [vmem:[%s7 + $0x7] sm:$0x1]
  %v1398 = vld [vmem:[%s7 + $0x8] sm:$0x1]
  %v1399 = vld [vmem:[%s7 + $0x9] sm:$0x1]
  %v1400 = vld [vmem:[%s7 + $0xa] sm:$0x1]
  %v1401 = vld [vmem:[%s7 + $0xb] sm:$0x1]
  %v1402 = vld [vmem:[%s8 + $0x22] sm:$0x1]
  %v1403 = vsel %vm165, %v1394, 0.0
  %1404 = vadd.xlane.f32.xlu0 %v1403
  %v1405 = vpop.xlane.xlu0 %1404
  %v1406 = vsel %vm165, %v1395, 0.0
  %1407 = vadd.xlane.f32.xlu0 %v1406
  %v1408 = vpop.xlane.xlu0 %1407
  %v1409 = vmul.f32 %v1405, %v172
  %v1410 = vmul.f32 %v1408, %v172
  %v1411 = vsub.f32 %v1394, %v1409
  %v1412 = vsub.f32 %v1395, %v1410
  %v1413 = vmul.f32 %v1411, %v1411
  %v1414 = vmul.f32 %v1412, %v1412
  %v1415 = vsel %vm165, %v1413, 0.0
  %1416 = vadd.xlane.f32.xlu0 %v1415
  %v1417 = vpop.xlane.xlu0 %1416
  %v1418 = vsel %vm165, %v1414, 0.0
  %1419 = vadd.xlane.f32.xlu0 %v1418
  %v1420 = vpop.xlane.xlu0 %1419
  %v1421 = vmul.f32 %v1417, %v172
  %v1422 = vmul.f32 %v1420, %v172
  %v1423 = vadd.f32 %v1421, 1e-05
  %v1424 = vadd.f32 %v1422, 1e-05
  %v1425 = vrsqrt.pop %v1423
  %v1426 = vrsqrt.pop %v1424
  %v1427 = vmul.f32 %v1411, %v1425
  %v1428 = vmul.f32 %v1412, %v1426
  %v1429 = vlaneseq
  %v1430 = vshrl.u32 %v1429, 7
  %v1431 = vsub.s32 0, %v1430
  %v1432 = vrot.slane %v1396, %v1431
  %v1433 = vmul.f32 %v1427, %v1432
  %v1434 = vmul.f32 %v1428, %v1432
  %v1435 = vlaneseq
  %v1436 = vshrl.u32 %v1435, 7
  %v1437 = vsub.s32 0, %v1436
  %v1438 = vrot.slane %v1397, %v1437
  %v1439 = vadd.f32 %v1433, %v1438
  %v1440 = vadd.f32 %v1434, %v1438
  %v1441 = vpack.c.bf16 %v1440, %v1439
  %s1442 = scalar_lea.vmem %s3, 16
  %v1443 = vld [vmem:[%s1442] sm:$0xf]
  %v1444 = vld [vmem:[%s1442 + $0x4] sm:$0xf]
  %v1445 = vld [vmem:[%s1442 + $0x8] sm:$0xf]
  %v1446 = vld [vmem:[%s1442 + $0xc] sm:$0xf]
  %v1451 = vunpack.c.l.b16 %v1443
  %v1452 = vunpack.c.l.b16 %v1444
  %v1453 = vunpack.c.l.b16 %v1445
  %v1454 = vunpack.c.l.b16 %v1446
  %v1455 = vpack.c.b16 %v1452, %v1451
  %v1456 = vpack.c.b16 %v1454, %v1453
  %v1460 = vsel %vm165, %v1441, 0
  %1462 = vmatprep.subr.bf16.mxu0 0
  %1463 = vmatpush1.bf16.msra.mxu0 %v1455
  %1464 = vmatprep.subr.bf16.mxu0 0
  %1465 = vmatpush1.bf16.msra.mxu0 %v1456
  %1466 = vmatprep.subr.bf16.mxu0 0
  %1467 = vmatpush1.bf16.msra.mxu0 0
  %1468 = vmatprep.subr.bf16.mxu0 0
  %1469 = vmatpush1.bf16.msra.mxu0 0
  %1470 = vmatprep.subr.bf16.mxu0 0
  %1471 = vmatpush1.bf16.msra.mxu0 0
  %1472 = vmatprep.subr.bf16.mxu0 0
  %1473 = vmatpush1.bf16.msra.mxu0 0
  %1474 = vmatprep.subr.bf16.mxu0 0
  %1475 = vmatpush1.bf16.msra.mxu0 0
  %1476 = vmatprep.subr.bf16.mxu0 0
  %1477 = vmatpush1.bf16.msra.mxu0 0
  %1478 = vmatprep.subr.bf16.mxu0 0
  %1479 = vmatpush1.bf16.msra.mxu0 0
  %1480 = vmatprep.subr.bf16.mxu0 0
  %1481 = vmatpush1.bf16.msra.mxu0 0
  %1482 = vmatprep.subr.bf16.mxu0 0
  %1483 = vmatpush1.bf16.msra.mxu0 0
  %1484 = vmatprep.subr.bf16.mxu0 0
  %1485 = vmatpush1.bf16.msra.mxu0 0
  %1486 = vmatprep.subr.bf16.mxu0 0
  %1487 = vmatpush1.bf16.msra.mxu0 0
  %1488 = vmatprep.subr.bf16.mxu0 0
  %1489 = vmatpush1.bf16.msra.mxu0 0
  %1490 = vmatprep.subr.bf16.mxu0 0
  %1491 = vmatpush1.bf16.msra.mxu0 0
  %1492 = vmatprep.subr.bf16.mxu0 0
  %1493 = vmatpush1.bf16.msra.mxu0 0
  %1494 = vmatprep.mubr.bf16.mxu0 0
  %1495 = vmatmul.mubr.bf16.gmra.mrb[0].mxu0 %v1460
  %v1496 = vpop.f32.mrb[0].mxu0
  %v1497 = vadd.f32 0.0, %v1496
  %v1498 = vpop.f32.mrb[0].mxu0
  %v1499 = vpop.f32.mrb[0].mxu0
  %v1500 = vadd.f32 0.0, %v1499
  %v1501 = vpop.f32.mrb[0].mxu0
  %1502 = vdwg.mxu0
  %1505 = vrot.lane.b32.xlu0 %v1497, 96
  %v1506 = vpop.permute.xlu0 %1505
  %1507 = vrot.lane.b32.xlu0 %v1500, 96
  %v1508 = vpop.permute.xlu0 %1507
  %v1509 = vsel %vm272, %v1497, 0
  %v1511 = vsel %vm272, %v1500, 0
  %v1513 = vsel %vm272, %v1506, 0
  %v1515 = vsel %vm272, %v1508, 0
  %1517 = vmatprep.subr.mxu0 0.0
  %1518 = vmatpush1.xpose.msra.mxu0 %v1513
  %1519 = vmatprep.subr.mxu0 0.0
  %1520 = vmatpush1.xpose.msra.mxu0 %v1515
  %1521 = vmatprep.subr.mxu0 0.0
  %1522 = vmatpush1.xpose.msra.mxu0 0.0
  %1523 = vmatprep.subr.mxu0 0.0
  %1524 = vmatpush1.xpose.msra.mxu0 0.0
  %1525 = vmatprep.subr.mxu0 0.0
  %1526 = vmatpush1.xpose.msra.mxu0 0.0
  %1527 = vmatprep.subr.mxu0 0.0
  %1528 = vmatpush1.xpose.msra.mxu0 0.0
  %1529 = vmatprep.subr.mxu0 0.0
  %1530 = vmatpush1.xpose.msra.mxu0 0.0
  %1531 = vmatprep.subr.mxu0 0.0
  %1532 = vmatpush1.xpose.msra.mxu0 0.0
  %1533 = vmatprep.subr.mxu0 0.0
  %1534 = vmatpush1.xpose.msra.mxu0 0.0
  %1535 = vmatprep.subr.mxu0 0.0
  %1536 = vmatpush1.xpose.msra.mxu0 0.0
  %1537 = vmatprep.subr.mxu0 0.0
  %1538 = vmatpush1.xpose.msra.mxu0 0.0
  %1539 = vmatprep.subr.mxu0 0.0
  %1540 = vmatpush1.xpose.msra.mxu0 0.0
  %1541 = vmatprep.subr.mxu0 0.0
  %1542 = vmatpush1.xpose.msra.mxu0 0.0
  %1543 = vmatprep.subr.mxu0 0.0
  %1544 = vmatpush1.xpose.msra.mxu0 0.0
  %1545 = vmatprep.subr.mxu0 0.0
  %1546 = vmatpush1.xpose.msra.mxu0 0.0
  %1547 = vmatprep.subr.mxu0 0.0
  %1548 = vmatpush1.xpose.msra.mxu0 0.0
  %1549 = vmatprep.subr.mxu0 0.0
  %1550 = vmatpush1.xpose.msra.mxu0 0.0
  %1551 = vmatprep.subr.mxu0 0.0
  %1552 = vmatpush1.xpose.msra.mxu0 0.0
  %1553 = vmatprep.subr.mxu0 0.0
  %1554 = vmatpush1.xpose.msra.mxu0 0.0
  %1555 = vmatprep.subr.mxu0 0.0
  %1556 = vmatpush1.xpose.msra.mxu0 0.0
  %1557 = vmatprep.subr.mxu0 0.0
  %1558 = vmatpush1.xpose.msra.mxu0 0.0
  %1559 = vmatprep.subr.mxu0 0.0
  %1560 = vmatpush1.xpose.msra.mxu0 0.0
  %1561 = vmatprep.subr.mxu0 0.0
  %1562 = vmatpush1.xpose.msra.mxu0 0.0
  %1563 = vmatprep.subr.mxu0 0.0
  %1564 = vmatpush1.xpose.msra.mxu0 0.0
  %1565 = vmatprep.subr.mxu0 0.0
  %1566 = vmatpush1.xpose.msra.mxu0 0.0
  %1567 = vmatprep.subr.mxu0 0.0
  %1568 = vmatpush1.xpose.msra.mxu0 0.0
  %1569 = vmatprep.subr.mxu0 0.0
  %1570 = vmatpush1.xpose.msra.mxu0 0.0
  %1571 = vmatprep.subr.mxu0 0.0
  %1572 = vmatpush1.xpose.msra.mxu0 0.0
  %1573 = vmatprep.subr.mxu0 0.0
  %1574 = vmatpush1.xpose.msra.mxu0 0.0
  %1575 = vmatprep.subr.mxu0 0.0
  %1576 = vmatpush1.xpose.msra.mxu0 0.0
  %1577 = vmatprep.subr.mxu0 0.0
  %1578 = vmatpush1.xpose.msra.mxu0 0.0
  %1579 = vmatprep.subr.mxu0 0.0
  %1580 = vmatpush1.xpose.msra.mxu0 0.0
  %1581 = vmatprep.mubr.f32.mxu0 0.0
  %1582 = vmatmul.mubr.f32.gmra.mrb[0].mxu0 %v1509
  %v1583 = vpop.f32.mrb[0].mxu0
  %v1584 = vadd.f32 0.0, %v1583
  %v1585 = vpop.f32.mrb[0].mxu0
  %1586 = vmatprep.mubr.f32.mxu0 0.0
  %1587 = vmatmul.mubr.f32.gmra.mrb[0].mxu0 %v1511
  %v1588 = vpop.f32.mrb[0].mxu0
  %v1589 = vadd.f32 0.0, %v1588
  %v1590 = vpop.f32.mrb[0].mxu0
  %1591 = vdwg.mxu0
  %v1592 = vmul.f32 %v1584, 0.35355338
  %v1593 = vmul.f32 %v1589, 0.35355338
  %v1594 = vadd.f32 %v1592, %v156
  %v1595 = vadd.f32 %v1593, %v157
  %v1596 = vsel %vm360, %v1594, -inf
  %1597 = vmax.xlane.f32.xlu0 %v1596
  %v1598 = vpop.xlane.xlu0 %1597
  %v1599 = vsel %vm360, %v1595, -inf
  %1600 = vmax.xlane.f32.xlu0 %v1599
  %v1601 = vpop.xlane.xlu0 %1600
  %v1602 = vsub.f32 %v1594, %v1598
  %v1603 = vsub.f32 %v1595, %v1601
  %v1604 = vmul.f32 %v1602, 1.442695
  %v1605 = vpow.pop %v1604
  %v1606 = vmul.f32 %v1603, 1.442695
  %v1607 = vpow.pop %v1606
  %v1608 = vsel %vm360, %v1605, 0.0
  %1609 = vadd.xlane.f32.xlu0 %v1608
  %v1610 = vpop.xlane.xlu0 %1609
  %v1611 = vsel %vm360, %v1607, 0.0
  %1612 = vadd.xlane.f32.xlu0 %v1611
  %v1613 = vpop.xlane.xlu0 %1612
  %v1614 = vrcp.pop %v1610
  %v1615 = vrcp.pop %v1613
  %v1616 = vmul.f32 %v1605, %v1614
  %v1617 = vmul.f32 %v1607, %v1615
  %1618 = vrot.lane.b32.xlu0 %v1497, 64
  %v1619 = vpop.permute.xlu0 %1618
  %1620 = vrot.lane.b32.xlu0 %v1500, 64
  %v1621 = vpop.permute.xlu0 %1620
  %v1625 = vsel %vm360, %v1616, 0
  %v1628 = vsel %vm360, %v1617, 0
  %1630 = vmatprep.subr.mxu0 0.0
  %1631 = vmatpush1.msra.mxu0 %v1619
  %1632 = vmatprep.subr.mxu0 0.0
  %1633 = vmatpush1.msra.mxu0 %v1621
  %1634 = vmatprep.subr.mxu0 0.0
  %1635 = vmatpush1.msra.mxu0 0.0
  %1636 = vmatprep.subr.mxu0 0.0
  %1637 = vmatpush1.msra.mxu0 0.0
  %1638 = vmatprep.subr.mxu0 0.0
  %1639 = vmatpush1.msra.mxu0 0.0
  %1640 = vmatprep.subr.mxu0 0.0
  %1641 = vmatpush1.msra.mxu0 0.0
  %1642 = vmatprep.subr.mxu0 0.0
  %1643 = vmatpush1.msra.mxu0 0.0
  %1644 = vmatprep.subr.mxu0 0.0
  %1645 = vmatpush1.msra.mxu0 0.0
  %1646 = vmatprep.subr.mxu0 0.0
  %1647 = vmatpush1.msra.mxu0 0.0
  %1648 = vmatprep.subr.mxu0 0.0
  %1649 = vmatpush1.msra.mxu0 0.0
  %1650 = vmatprep.subr.mxu0 0.0
  %1651 = vmatpush1.msra.mxu0 0.0
  %1652 = vmatprep.subr.mxu0 0.0
  %1653 = vmatpush1.msra.mxu0 0.0
  %1654 = vmatprep.subr.mxu0 0.0
  %1655 = vmatpush1.msra.mxu0 0.0
  %1656 = vmatprep.subr.mxu0 0.0
  %1657 = vmatpush1.msra.mxu0 0.0
  %1658 = vmatprep.subr.mxu0 0.0
  %1659 = vmatpush1.msra.mxu0 0.0
  %1660 = vmatprep.subr.mxu0 0.0
  %1661 = vmatpush1.msra.mxu0 0.0
  %1662 = vmatprep.subr.mxu0 0.0
  %1663 = vmatpush1.msra.mxu0 0.0
  %1664 = vmatprep.subr.mxu0 0.0
  %1665 = vmatpush1.msra.mxu0 0.0
  %1666 = vmatprep.subr.mxu0 0.0
  %1667 = vmatpush1.msra.mxu0 0.0
  %1668 = vmatprep.subr.mxu0 0.0
  %1669 = vmatpush1.msra.mxu0 0.0
  %1670 = vmatprep.subr.mxu0 0.0
  %1671 = vmatpush1.msra.mxu0 0.0
  %1672 = vmatprep.subr.mxu0 0.0
  %1673 = vmatpush1.msra.mxu0 0.0
  %1674 = vmatprep.subr.mxu0 0.0
  %1675 = vmatpush1.msra.mxu0 0.0
  %1676 = vmatprep.subr.mxu0 0.0
  %1677 = vmatpush1.msra.mxu0 0.0
  %1678 = vmatprep.subr.mxu0 0.0
  %1679 = vmatpush1.msra.mxu0 0.0
  %1680 = vmatprep.subr.mxu0 0.0
  %1681 = vmatpush1.msra.mxu0 0.0
  %1682 = vmatprep.subr.mxu0 0.0
  %1683 = vmatpush1.msra.mxu0 0.0
  %1684 = vmatprep.subr.mxu0 0.0
  %1685 = vmatpush1.msra.mxu0 0.0
  %1686 = vmatprep.subr.mxu0 0.0
  %1687 = vmatpush1.msra.mxu0 0.0
  %1688 = vmatprep.subr.mxu0 0.0
  %1689 = vmatpush1.msra.mxu0 0.0
  %1690 = vmatprep.subr.mxu0 0.0
  %1691 = vmatpush1.msra.mxu0 0.0
  %1692 = vmatprep.subr.mxu0 0.0
  %1693 = vmatpush1.msra.mxu0 0.0
  %1694 = vmatprep.mubr.f32.mxu0 0.0
  %1695 = vmatmul.mubr.f32.gmra.mrb[0].mxu0 %v1625
  %v1696 = vpop.f32.mrb[0].mxu0
  %v1697 = vadd.f32 0.0, %v1696
  %v1698 = vpop.f32.mrb[0].mxu0
  %1699 = vmatprep.mubr.f32.mxu0 0.0
  %1700 = vmatmul.mubr.f32.gmra.mrb[0].mxu0 %v1628
  %v1701 = vpop.f32.mrb[0].mxu0
  %v1702 = vadd.f32 0.0, %v1701
  %v1703 = vpop.f32.mrb[0].mxu0
  %1704 = vdwg.mxu0
  %1705 = vrot.lane.b32.xlu0 %v1497, 120
  %v1706 = vpop.permute.xlu0 %1705
  %1707 = vrot.lane.b32.xlu0 %v1500, 120
  %v1708 = vpop.permute.xlu0 %1707
  %1709 = vrot.lane.b32.xlu0 %v1497, 88
  %v1710 = vpop.permute.xlu0 %1709
  %1711 = vrot.lane.b32.xlu0 %v1500, 88
  %v1712 = vpop.permute.xlu0 %1711
  %v1713 = vsel %vm272, %v1706, 0
  %v1715 = vsel %vm272, %v1708, 0
  %v1717 = vsel %vm272, %v1710, 0
  %v1719 = vsel %vm272, %v1712, 0
  %1721 = vmatprep.subr.mxu0 0.0
  %1722 = vmatpush1.xpose.msra.mxu0 %v1717
  %1723 = vmatprep.subr.mxu0 0.0
  %1724 = vmatpush1.xpose.msra.mxu0 %v1719
  %1725 = vmatprep.subr.mxu0 0.0
  %1726 = vmatpush1.xpose.msra.mxu0 0.0
  %1727 = vmatprep.subr.mxu0 0.0
  %1728 = vmatpush1.xpose.msra.mxu0 0.0
  %1729 = vmatprep.subr.mxu0 0.0
  %1730 = vmatpush1.xpose.msra.mxu0 0.0
  %1731 = vmatprep.subr.mxu0 0.0
  %1732 = vmatpush1.xpose.msra.mxu0 0.0
  %1733 = vmatprep.subr.mxu0 0.0
  %1734 = vmatpush1.xpose.msra.mxu0 0.0
  %1735 = vmatprep.subr.mxu0 0.0
  %1736 = vmatpush1.xpose.msra.mxu0 0.0
  %1737 = vmatprep.subr.mxu0 0.0
  %1738 = vmatpush1.xpose.msra.mxu0 0.0
  %1739 = vmatprep.subr.mxu0 0.0
  %1740 = vmatpush1.xpose.msra.mxu0 0.0
  %1741 = vmatprep.subr.mxu0 0.0
  %1742 = vmatpush1.xpose.msra.mxu0 0.0
  %1743 = vmatprep.subr.mxu0 0.0
  %1744 = vmatpush1.xpose.msra.mxu0 0.0
  %1745 = vmatprep.subr.mxu0 0.0
  %1746 = vmatpush1.xpose.msra.mxu0 0.0
  %1747 = vmatprep.subr.mxu0 0.0
  %1748 = vmatpush1.xpose.msra.mxu0 0.0
  %1749 = vmatprep.subr.mxu0 0.0
  %1750 = vmatpush1.xpose.msra.mxu0 0.0
  %1751 = vmatprep.subr.mxu0 0.0
  %1752 = vmatpush1.xpose.msra.mxu0 0.0
  %1753 = vmatprep.subr.mxu0 0.0
  %1754 = vmatpush1.xpose.msra.mxu0 0.0
  %1755 = vmatprep.subr.mxu0 0.0
  %1756 = vmatpush1.xpose.msra.mxu0 0.0
  %1757 = vmatprep.subr.mxu0 0.0
  %1758 = vmatpush1.xpose.msra.mxu0 0.0
  %1759 = vmatprep.subr.mxu0 0.0
  %1760 = vmatpush1.xpose.msra.mxu0 0.0
  %1761 = vmatprep.subr.mxu0 0.0
  %1762 = vmatpush1.xpose.msra.mxu0 0.0
  %1763 = vmatprep.subr.mxu0 0.0
  %1764 = vmatpush1.xpose.msra.mxu0 0.0
  %1765 = vmatprep.subr.mxu0 0.0
  %1766 = vmatpush1.xpose.msra.mxu0 0.0
  %1767 = vmatprep.subr.mxu0 0.0
  %1768 = vmatpush1.xpose.msra.mxu0 0.0
  %1769 = vmatprep.subr.mxu0 0.0
  %1770 = vmatpush1.xpose.msra.mxu0 0.0
  %1771 = vmatprep.subr.mxu0 0.0
  %1772 = vmatpush1.xpose.msra.mxu0 0.0
  %1773 = vmatprep.subr.mxu0 0.0
  %1774 = vmatpush1.xpose.msra.mxu0 0.0
  %1775 = vmatprep.subr.mxu0 0.0
  %1776 = vmatpush1.xpose.msra.mxu0 0.0
  %1777 = vmatprep.subr.mxu0 0.0
  %1778 = vmatpush1.xpose.msra.mxu0 0.0
  %1779 = vmatprep.subr.mxu0 0.0
  %1780 = vmatpush1.xpose.msra.mxu0 0.0
  %1781 = vmatprep.subr.mxu0 0.0
  %1782 = vmatpush1.xpose.msra.mxu0 0.0
  %1783 = vmatprep.subr.mxu0 0.0
  %1784 = vmatpush1.xpose.msra.mxu0 0.0
  %1785 = vmatprep.mubr.f32.mxu0 0.0
  %1786 = vmatmul.mubr.f32.gmra.mrb[0].mxu0 %v1713
  %v1787 = vpop.f32.mrb[0].mxu0
  %v1788 = vadd.f32 0.0, %v1787
  %v1789 = vpop.f32.mrb[0].mxu0
  %1790 = vmatprep.mubr.f32.mxu0 0.0
  %1791 = vmatmul.mubr.f32.gmra.mrb[0].mxu0 %v1715
  %v1792 = vpop.f32.mrb[0].mxu0
  %v1793 = vadd.f32 0.0, %v1792
  %v1794 = vpop.f32.mrb[0].mxu0
  %1795 = vdwg.mxu0
  %v1796 = vmul.f32 %v1788, 0.35355338
  %v1797 = vmul.f32 %v1793, 0.35355338
  %v1798 = vadd.f32 %v1796, %v156
  %v1799 = vadd.f32 %v1797, %v157
  %v1800 = vsel %vm360, %v1798, -inf
  %1801 = vmax.xlane.f32.xlu0 %v1800
  %v1802 = vpop.xlane.xlu0 %1801
  %v1803 = vsel %vm360, %v1799, -inf
  %1804 = vmax.xlane.f32.xlu0 %v1803
  %v1805 = vpop.xlane.xlu0 %1804
  %v1806 = vsub.f32 %v1798, %v1802
  %v1807 = vsub.f32 %v1799, %v1805
  %v1808 = vmul.f32 %v1806, 1.442695
  %v1809 = vpow.pop %v1808
  %v1810 = vmul.f32 %v1807, 1.442695
  %v1811 = vpow.pop %v1810
  %v1812 = vsel %vm360, %v1809, 0.0
  %1813 = vadd.xlane.f32.xlu0 %v1812
  %v1814 = vpop.xlane.xlu0 %1813
  %v1815 = vsel %vm360, %v1811, 0.0
  %1816 = vadd.xlane.f32.xlu0 %v1815
  %v1817 = vpop.xlane.xlu0 %1816
  %v1818 = vrcp.pop %v1814
  %v1819 = vrcp.pop %v1817
  %v1820 = vmul.f32 %v1809, %v1818
  %v1821 = vmul.f32 %v1811, %v1819
  %1822 = vrot.lane.b32.xlu0 %v1497, 56
  %v1823 = vpop.permute.xlu0 %1822
  %1824 = vrot.lane.b32.xlu0 %v1500, 56
  %v1825 = vpop.permute.xlu0 %1824
  %v1829 = vsel %vm360, %v1820, 0
  %v1832 = vsel %vm360, %v1821, 0
  %1834 = vmatprep.subr.mxu0 0.0
  %1835 = vmatpush1.msra.mxu0 %v1823
  %1836 = vmatprep.subr.mxu0 0.0
  %1837 = vmatpush1.msra.mxu0 %v1825
  %1838 = vmatprep.subr.mxu0 0.0
  %1839 = vmatpush1.msra.mxu0 0.0
  %1840 = vmatprep.subr.mxu0 0.0
  %1841 = vmatpush1.msra.mxu0 0.0
  %1842 = vmatprep.subr.mxu0 0.0
  %1843 = vmatpush1.msra.mxu0 0.0
  %1844 = vmatprep.subr.mxu0 0.0
  %1845 = vmatpush1.msra.mxu0 0.0
  %1846 = vmatprep.subr.mxu0 0.0
  %1847 = vmatpush1.msra.mxu0 0.0
  %1848 = vmatprep.subr.mxu0 0.0
  %1849 = vmatpush1.msra.mxu0 0.0
  %1850 = vmatprep.subr.mxu0 0.0
  %1851 = vmatpush1.msra.mxu0 0.0
  %1852 = vmatprep.subr.mxu0 0.0
  %1853 = vmatpush1.msra.mxu0 0.0
  %1854 = vmatprep.subr.mxu0 0.0
  %1855 = vmatpush1.msra.mxu0 0.0
  %1856 = vmatprep.subr.mxu0 0.0
  %1857 = vmatpush1.msra.mxu0 0.0
  %1858 = vmatprep.subr.mxu0 0.0
  %1859 = vmatpush1.msra.mxu0 0.0
  %1860 = vmatprep.subr.mxu0 0.0
  %1861 = vmatpush1.msra.mxu0 0.0
  %1862 = vmatprep.subr.mxu0 0.0
  %1863 = vmatpush1.msra.mxu0 0.0
  %1864 = vmatprep.subr.mxu0 0.0
  %1865 = vmatpush1.msra.mxu0 0.0
  %1866 = vmatprep.subr.mxu0 0.0
  %1867 = vmatpush1.msra.mxu0 0.0
  %1868 = vmatprep.subr.mxu0 0.0
  %1869 = vmatpush1.msra.mxu0 0.0
  %1870 = vmatprep.subr.mxu0 0.0
  %1871 = vmatpush1.msra.mxu0 0.0
  %1872 = vmatprep.subr.mxu0 0.0
  %1873 = vmatpush1.msra.mxu0 0.0
  %1874 = vmatprep.subr.mxu0 0.0
  %1875 = vmatpush1.msra.mxu0 0.0
  %1876 = vmatprep.subr.mxu0 0.0
  %1877 = vmatpush1.msra.mxu0 0.0
  %1878 = vmatprep.subr.mxu0 0.0
  %1879 = vmatpush1.msra.mxu0 0.0
  %1880 = vmatprep.subr.mxu0 0.0
  %1881 = vmatpush1.msra.mxu0 0.0
  %1882 = vmatprep.subr.mxu0 0.0
  %1883 = vmatpush1.msra.mxu0 0.0
  %1884 = vmatprep.subr.mxu0 0.0
  %1885 = vmatpush1.msra.mxu0 0.0
  %1886 = vmatprep.subr.mxu0 0.0
  %1887 = vmatpush1.msra.mxu0 0.0
  %1888 = vmatprep.subr.mxu0 0.0
  %1889 = vmatpush1.msra.mxu0 0.0
  %1890 = vmatprep.subr.mxu0 0.0
  %1891 = vmatpush1.msra.mxu0 0.0
  %1892 = vmatprep.subr.mxu0 0.0
  %1893 = vmatpush1.msra.mxu0 0.0
  %1894 = vmatprep.subr.mxu0 0.0
  %1895 = vmatpush1.msra.mxu0 0.0
  %1896 = vmatprep.subr.mxu0 0.0
  %1897 = vmatpush1.msra.mxu0 0.0
  %1898 = vmatprep.mubr.f32.mxu0 0.0
  %1899 = vmatmul.mubr.f32.gmra.mrb[0].mxu0 %v1829
  %v1900 = vpop.f32.mrb[0].mxu0
  %v1901 = vadd.f32 0.0, %v1900
  %v1902 = vpop.f32.mrb[0].mxu0
  %1903 = vmatprep.mubr.f32.mxu0 0.0
  %1904 = vmatmul.mubr.f32.gmra.mrb[0].mxu0 %v1832
  %v1905 = vpop.f32.mrb[0].mxu0
  %v1906 = vadd.f32 0.0, %v1905
  %v1907 = vpop.f32.mrb[0].mxu0
  %1908 = vdwg.mxu0
  %1909 = vrot.lane.b32.xlu0 %v1497, 112
  %v1910 = vpop.permute.xlu0 %1909
  %1911 = vrot.lane.b32.xlu0 %v1500, 112
  %v1912 = vpop.permute.xlu0 %1911
  %1913 = vrot.lane.b32.xlu0 %v1497, 80
  %v1914 = vpop.permute.xlu0 %1913
  %1915 = vrot.lane.b32.xlu0 %v1500, 80
  %v1916 = vpop.permute.xlu0 %1915
  %v1917 = vsel %vm272, %v1910, 0
  %v1919 = vsel %vm272, %v1912, 0
  %v1921 = vsel %vm272, %v1914, 0
  %v1923 = vsel %vm272, %v1916, 0
  %1925 = vmatprep.subr.mxu0 0.0
  %1926 = vmatpush1.xpose.msra.mxu0 %v1921
  %1927 = vmatprep.subr.mxu0 0.0
  %1928 = vmatpush1.xpose.msra.mxu0 %v1923
  %1929 = vmatprep.subr.mxu0 0.0
  %1930 = vmatpush1.xpose.msra.mxu0 0.0
  %1931 = vmatprep.subr.mxu0 0.0
  %1932 = vmatpush1.xpose.msra.mxu0 0.0
  %1933 = vmatprep.subr.mxu0 0.0
  %1934 = vmatpush1.xpose.msra.mxu0 0.0
  %1935 = vmatprep.subr.mxu0 0.0
  %1936 = vmatpush1.xpose.msra.mxu0 0.0
  %1937 = vmatprep.subr.mxu0 0.0
  %1938 = vmatpush1.xpose.msra.mxu0 0.0
  %1939 = vmatprep.subr.mxu0 0.0
  %1940 = vmatpush1.xpose.msra.mxu0 0.0
  %1941 = vmatprep.subr.mxu0 0.0
  %1942 = vmatpush1.xpose.msra.mxu0 0.0
  %1943 = vmatprep.subr.mxu0 0.0
  %1944 = vmatpush1.xpose.msra.mxu0 0.0
  %1945 = vmatprep.subr.mxu0 0.0
  %1946 = vmatpush1.xpose.msra.mxu0 0.0
  %1947 = vmatprep.subr.mxu0 0.0
  %1948 = vmatpush1.xpose.msra.mxu0 0.0
  %1949 = vmatprep.subr.mxu0 0.0
  %1950 = vmatpush1.xpose.msra.mxu0 0.0
  %1951 = vmatprep.subr.mxu0 0.0
  %1952 = vmatpush1.xpose.msra.mxu0 0.0
  %1953 = vmatprep.subr.mxu0 0.0
  %1954 = vmatpush1.xpose.msra.mxu0 0.0
  %1955 = vmatprep.subr.mxu0 0.0
  %1956 = vmatpush1.xpose.msra.mxu0 0.0
  %1957 = vmatprep.subr.mxu0 0.0
  %1958 = vmatpush1.xpose.msra.mxu0 0.0
  %1959 = vmatprep.subr.mxu0 0.0
  %1960 = vmatpush1.xpose.msra.mxu0 0.0
  %1961 = vmatprep.subr.mxu0 0.0
  %1962 = vmatpush1.xpose.msra.mxu0 0.0
  %1963 = vmatprep.subr.mxu0 0.0
  %1964 = vmatpush1.xpose.msra.mxu0 0.0
  %1965 = vmatprep.subr.mxu0 0.0
  %1966 = vmatpush1.xpose.msra.mxu0 0.0
  %1967 = vmatprep.subr.mxu0 0.0
  %1968 = vmatpush1.xpose.msra.mxu0 0.0
  %1969 = vmatprep.subr.mxu0 0.0
  %1970 = vmatpush1.xpose.msra.mxu0 0.0
  %1971 = vmatprep.subr.mxu0 0.0
  %1972 = vmatpush1.xpose.msra.mxu0 0.0
  %1973 = vmatprep.subr.mxu0 0.0
  %1974 = vmatpush1.xpose.msra.mxu0 0.0
  %1975 = vmatprep.subr.mxu0 0.0
  %1976 = vmatpush1.xpose.msra.mxu0 0.0
  %1977 = vmatprep.subr.mxu0 0.0
  %1978 = vmatpush1.xpose.msra.mxu0 0.0
  %1979 = vmatprep.subr.mxu0 0.0
  %1980 = vmatpush1.xpose.msra.mxu0 0.0
  %1981 = vmatprep.subr.mxu0 0.0
  %1982 = vmatpush1.xpose.msra.mxu0 0.0
  %1983 = vmatprep.subr.mxu0 0.0
  %1984 = vmatpush1.xpose.msra.mxu0 0.0
  %1985 = vmatprep.subr.mxu0 0.0
  %1986 = vmatpush1.xpose.msra.mxu0 0.0
  %1987 = vmatprep.subr.mxu0 0.0
  %1988 = vmatpush1.xpose.msra.mxu0 0.0
  %1989 = vmatprep.mubr.f32.mxu0 0.0
  %1990 = vmatmul.mubr.f32.gmra.mrb[0].mxu0 %v1917
  %v1991 = vpop.f32.mrb[0].mxu0
  %v1992 = vadd.f32 0.0, %v1991
  %v1993 = vpop.f32.mrb[0].mxu0
  %1994 = vmatprep.mubr.f32.mxu0 0.0
  %1995 = vmatmul.mubr.f32.gmra.mrb[0].mxu0 %v1919
  %v1996 = vpop.f32.mrb[0].mxu0
  %v1997 = vadd.f32 0.0, %v1996
  %v1998 = vpop.f32.mrb[0].mxu0
  %1999 = vdwg.mxu0
  %v2000 = vmul.f32 %v1992, 0.35355338
  %v2001 = vmul.f32 %v1997, 0.35355338
  %v2002 = vadd.f32 %v2000, %v156
  %v2003 = vadd.f32 %v2001, %v157
  %v2004 = vsel %vm360, %v2002, -inf
  %2005 = vmax.xlane.f32.xlu0 %v2004
  %v2006 = vpop.xlane.xlu0 %2005
  %v2007 = vsel %vm360, %v2003, -inf
  %2008 = vmax.xlane.f32.xlu0 %v2007
  %v2009 = vpop.xlane.xlu0 %2008
  %v2010 = vsub.f32 %v2002, %v2006
  %v2011 = vsub.f32 %v2003, %v2009
  %v2012 = vmul.f32 %v2010, 1.442695
  %v2013 = vpow.pop %v2012
  %v2014 = vmul.f32 %v2011, 1.442695
  %v2015 = vpow.pop %v2014
  %v2016 = vsel %vm360, %v2013, 0.0
  %2017 = vadd.xlane.f32.xlu0 %v2016
  %v2018 = vpop.xlane.xlu0 %2017
  %v2019 = vsel %vm360, %v2015, 0.0
  %2020 = vadd.xlane.f32.xlu0 %v2019
  %v2021 = vpop.xlane.xlu0 %2020
  %v2022 = vrcp.pop %v2018
  %v2023 = vrcp.pop %v2021
  %v2024 = vmul.f32 %v2013, %v2022
  %v2025 = vmul.f32 %v2015, %v2023
  %2026 = vrot.lane.b32.xlu0 %v1497, 48
  %v2027 = vpop.permute.xlu0 %2026
  %2028 = vrot.lane.b32.xlu0 %v1500, 48
  %v2029 = vpop.permute.xlu0 %2028
  %v2033 = vsel %vm360, %v2024, 0
  %v2036 = vsel %vm360, %v2025, 0
  %2038 = vmatprep.subr.mxu0 0.0
  %2039 = vmatpush1.msra.mxu0 %v2027
  %2040 = vmatprep.subr.mxu0 0.0
  %2041 = vmatpush1.msra.mxu0 %v2029
  %2042 = vmatprep.subr.mxu0 0.0
  %2043 = vmatpush1.msra.mxu0 0.0
  %2044 = vmatprep.subr.mxu0 0.0
  %2045 = vmatpush1.msra.mxu0 0.0
  %2046 = vmatprep.subr.mxu0 0.0
  %2047 = vmatpush1.msra.mxu0 0.0
  %2048 = vmatprep.subr.mxu0 0.0
  %2049 = vmatpush1.msra.mxu0 0.0
  %2050 = vmatprep.subr.mxu0 0.0
  %2051 = vmatpush1.msra.mxu0 0.0
  %2052 = vmatprep.subr.mxu0 0.0
  %2053 = vmatpush1.msra.mxu0 0.0
  %2054 = vmatprep.subr.mxu0 0.0
  %2055 = vmatpush1.msra.mxu0 0.0
  %2056 = vmatprep.subr.mxu0 0.0
  %2057 = vmatpush1.msra.mxu0 0.0
  %2058 = vmatprep.subr.mxu0 0.0
  %2059 = vmatpush1.msra.mxu0 0.0
  %2060 = vmatprep.subr.mxu0 0.0
  %2061 = vmatpush1.msra.mxu0 0.0
  %2062 = vmatprep.subr.mxu0 0.0
  %2063 = vmatpush1.msra.mxu0 0.0
  %2064 = vmatprep.subr.mxu0 0.0
  %2065 = vmatpush1.msra.mxu0 0.0
  %2066 = vmatprep.subr.mxu0 0.0
  %2067 = vmatpush1.msra.mxu0 0.0
  %2068 = vmatprep.subr.mxu0 0.0
  %2069 = vmatpush1.msra.mxu0 0.0
  %2070 = vmatprep.subr.mxu0 0.0
  %2071 = vmatpush1.msra.mxu0 0.0
  %2072 = vmatprep.subr.mxu0 0.0
  %2073 = vmatpush1.msra.mxu0 0.0
  %2074 = vmatprep.subr.mxu0 0.0
  %2075 = vmatpush1.msra.mxu0 0.0
  %2076 = vmatprep.subr.mxu0 0.0
  %2077 = vmatpush1.msra.mxu0 0.0
  %2078 = vmatprep.subr.mxu0 0.0
  %2079 = vmatpush1.msra.mxu0 0.0
  %2080 = vmatprep.subr.mxu0 0.0
  %2081 = vmatpush1.msra.mxu0 0.0
  %2082 = vmatprep.subr.mxu0 0.0
  %2083 = vmatpush1.msra.mxu0 0.0
  %2084 = vmatprep.subr.mxu0 0.0
  %2085 = vmatpush1.msra.mxu0 0.0
  %2086 = vmatprep.subr.mxu0 0.0
  %2087 = vmatpush1.msra.mxu0 0.0
  %2088 = vmatprep.subr.mxu0 0.0
  %2089 = vmatpush1.msra.mxu0 0.0
  %2090 = vmatprep.subr.mxu0 0.0
  %2091 = vmatpush1.msra.mxu0 0.0
  %2092 = vmatprep.subr.mxu0 0.0
  %2093 = vmatpush1.msra.mxu0 0.0
  %2094 = vmatprep.subr.mxu0 0.0
  %2095 = vmatpush1.msra.mxu0 0.0
  %2096 = vmatprep.subr.mxu0 0.0
  %2097 = vmatpush1.msra.mxu0 0.0
  %2098 = vmatprep.subr.mxu0 0.0
  %2099 = vmatpush1.msra.mxu0 0.0
  %2100 = vmatprep.subr.mxu0 0.0
  %2101 = vmatpush1.msra.mxu0 0.0
  %2102 = vmatprep.mubr.f32.mxu0 0.0
  %2103 = vmatmul.mubr.f32.gmra.mrb[0].mxu0 %v2033
  %v2104 = vpop.f32.mrb[0].mxu0
  %v2105 = vadd.f32 0.0, %v2104
  %v2106 = vpop.f32.mrb[0].mxu0
  %2107 = vmatprep.mubr.f32.mxu0 0.0
  %2108 = vmatmul.mubr.f32.gmra.mrb[0].mxu0 %v2036
  %v2109 = vpop.f32.mrb[0].mxu0
  %v2110 = vadd.f32 0.0, %v2109
  %v2111 = vpop.f32.mrb[0].mxu0
  %2112 = vdwg.mxu0
  %2113 = vrot.lane.b32.xlu0 %v1497, 104
  %v2114 = vpop.permute.xlu0 %2113
  %2115 = vrot.lane.b32.xlu0 %v1500, 104
  %v2116 = vpop.permute.xlu0 %2115
  %2117 = vrot.lane.b32.xlu0 %v1497, 72
  %v2118 = vpop.permute.xlu0 %2117
  %2119 = vrot.lane.b32.xlu0 %v1500, 72
  %v2120 = vpop.permute.xlu0 %2119
  %v2121 = vsel %vm272, %v2114, 0
  %v2123 = vsel %vm272, %v2116, 0
  %v2125 = vsel %vm272, %v2118, 0
  %v2127 = vsel %vm272, %v2120, 0
  %2129 = vmatprep.subr.mxu0 0.0
  %2130 = vmatpush1.xpose.msra.mxu0 %v2125
  %2131 = vmatprep.subr.mxu0 0.0
  %2132 = vmatpush1.xpose.msra.mxu0 %v2127
  %2133 = vmatprep.subr.mxu0 0.0
  %2134 = vmatpush1.xpose.msra.mxu0 0.0
  %2135 = vmatprep.subr.mxu0 0.0
  %2136 = vmatpush1.xpose.msra.mxu0 0.0
  %2137 = vmatprep.subr.mxu0 0.0
  %2138 = vmatpush1.xpose.msra.mxu0 0.0
  %2139 = vmatprep.subr.mxu0 0.0
  %2140 = vmatpush1.xpose.msra.mxu0 0.0
  %2141 = vmatprep.subr.mxu0 0.0
  %2142 = vmatpush1.xpose.msra.mxu0 0.0
  %2143 = vmatprep.subr.mxu0 0.0
  %2144 = vmatpush1.xpose.msra.mxu0 0.0
  %2145 = vmatprep.subr.mxu0 0.0
  %2146 = vmatpush1.xpose.msra.mxu0 0.0
  %2147 = vmatprep.subr.mxu0 0.0
  %2148 = vmatpush1.xpose.msra.mxu0 0.0
  %2149 = vmatprep.subr.mxu0 0.0
  %2150 = vmatpush1.xpose.msra.mxu0 0.0
  %2151 = vmatprep.subr.mxu0 0.0
  %2152 = vmatpush1.xpose.msra.mxu0 0.0
  %2153 = vmatprep.subr.mxu0 0.0
  %2154 = vmatpush1.xpose.msra.mxu0 0.0
  %2155 = vmatprep.subr.mxu0 0.0
  %2156 = vmatpush1.xpose.msra.mxu0 0.0
  %2157 = vmatprep.subr.mxu0 0.0
  %2158 = vmatpush1.xpose.msra.mxu0 0.0
  %2159 = vmatprep.subr.mxu0 0.0
  %2160 = vmatpush1.xpose.msra.mxu0 0.0
  %2161 = vmatprep.subr.mxu0 0.0
  %2162 = vmatpush1.xpose.msra.mxu0 0.0
  %2163 = vmatprep.subr.mxu0 0.0
  %2164 = vmatpush1.xpose.msra.mxu0 0.0
  %2165 = vmatprep.subr.mxu0 0.0
  %2166 = vmatpush1.xpose.msra.mxu0 0.0
  %2167 = vmatprep.subr.mxu0 0.0
  %2168 = vmatpush1.xpose.msra.mxu0 0.0
  %2169 = vmatprep.subr.mxu0 0.0
  %2170 = vmatpush1.xpose.msra.mxu0 0.0
  %2171 = vmatprep.subr.mxu0 0.0
  %2172 = vmatpush1.xpose.msra.mxu0 0.0
  %2173 = vmatprep.subr.mxu0 0.0
  %2174 = vmatpush1.xpose.msra.mxu0 0.0
  %2175 = vmatprep.subr.mxu0 0.0
  %2176 = vmatpush1.xpose.msra.mxu0 0.0
  %2177 = vmatprep.subr.mxu0 0.0
  %2178 = vmatpush1.xpose.msra.mxu0 0.0
  %2179 = vmatprep.subr.mxu0 0.0
  %2180 = vmatpush1.xpose.msra.mxu0 0.0
  %2181 = vmatprep.subr.mxu0 0.0
  %2182 = vmatpush1.xpose.msra.mxu0 0.0
  %2183 = vmatprep.subr.mxu0 0.0
  %2184 = vmatpush1.xpose.msra.mxu0 0.0
  %2185 = vmatprep.subr.mxu0 0.0
  %2186 = vmatpush1.xpose.msra.mxu0 0.0
  %2187 = vmatprep.subr.mxu0 0.0
  %2188 = vmatpush1.xpose.msra.mxu0 0.0
  %2189 = vmatprep.subr.mxu0 0.0
  %2190 = vmatpush1.xpose.msra.mxu0 0.0
  %2191 = vmatprep.subr.mxu0 0.0
  %2192 = vmatpush1.xpose.msra.mxu0 0.0
  %2193 = vmatprep.mubr.f32.mxu0 0.0
  %2194 = vmatmul.mubr.f32.gmra.mrb[0].mxu0 %v2121
  %v2195 = vpop.f32.mrb[0].mxu0
  %v2196 = vadd.f32 0.0, %v2195
  %v2197 = vpop.f32.mrb[0].mxu0
  %2198 = vmatprep.mubr.f32.mxu0 0.0
  %2199 = vmatmul.mubr.f32.gmra.mrb[0].mxu0 %v2123
  %v2200 = vpop.f32.mrb[0].mxu0
  %v2201 = vadd.f32 0.0, %v2200
  %v2202 = vpop.f32.mrb[0].mxu0
  %2203 = vdwg.mxu0
  %v2204 = vmul.f32 %v2196, 0.35355338
  %v2205 = vmul.f32 %v2201, 0.35355338
  %v2206 = vadd.f32 %v2204, %v156
  %v2207 = vadd.f32 %v2205, %v157
  %v2208 = vsel %vm360, %v2206, -inf
  %2209 = vmax.xlane.f32.xlu0 %v2208
  %v2210 = vpop.xlane.xlu0 %2209
  %v2211 = vsel %vm360, %v2207, -inf
  %2212 = vmax.xlane.f32.xlu0 %v2211
  %v2213 = vpop.xlane.xlu0 %2212
  %v2214 = vsub.f32 %v2206, %v2210
  %v2215 = vsub.f32 %v2207, %v2213
  %v2216 = vmul.f32 %v2214, 1.442695
  %v2217 = vpow.pop %v2216
  %v2218 = vmul.f32 %v2215, 1.442695
  %v2219 = vpow.pop %v2218
  %v2220 = vsel %vm360, %v2217, 0.0
  %2221 = vadd.xlane.f32.xlu0 %v2220
  %v2222 = vpop.xlane.xlu0 %2221
  %v2223 = vsel %vm360, %v2219, 0.0
  %2224 = vadd.xlane.f32.xlu0 %v2223
  %v2225 = vpop.xlane.xlu0 %2224
  %v2226 = vrcp.pop %v2222
  %v2227 = vrcp.pop %v2225
  %v2228 = vmul.f32 %v2217, %v2226
  %v2229 = vmul.f32 %v2219, %v2227
  %2230 = vrot.lane.b32.xlu0 %v1497, 40
  %v2231 = vpop.permute.xlu0 %2230
  %2232 = vrot.lane.b32.xlu0 %v1500, 40
  %v2233 = vpop.permute.xlu0 %2232
  %v2237 = vsel %vm360, %v2228, 0
  %v2240 = vsel %vm360, %v2229, 0
  %2242 = vmatprep.subr.mxu0 0.0
  %2243 = vmatpush1.msra.mxu0 %v2231
  %2244 = vmatprep.subr.mxu0 0.0
  %2245 = vmatpush1.msra.mxu0 %v2233
  %2246 = vmatprep.subr.mxu0 0.0
  %2247 = vmatpush1.msra.mxu0 0.0
  %2248 = vmatprep.subr.mxu0 0.0
  %2249 = vmatpush1.msra.mxu0 0.0
  %2250 = vmatprep.subr.mxu0 0.0
  %2251 = vmatpush1.msra.mxu0 0.0
  %2252 = vmatprep.subr.mxu0 0.0
  %2253 = vmatpush1.msra.mxu0 0.0
  %2254 = vmatprep.subr.mxu0 0.0
  %2255 = vmatpush1.msra.mxu0 0.0
  %2256 = vmatprep.subr.mxu0 0.0
  %2257 = vmatpush1.msra.mxu0 0.0
  %2258 = vmatprep.subr.mxu0 0.0
  %2259 = vmatpush1.msra.mxu0 0.0
  %2260 = vmatprep.subr.mxu0 0.0
  %2261 = vmatpush1.msra.mxu0 0.0
  %2262 = vmatprep.subr.mxu0 0.0
  %2263 = vmatpush1.msra.mxu0 0.0
  %2264 = vmatprep.subr.mxu0 0.0
  %2265 = vmatpush1.msra.mxu0 0.0
  %2266 = vmatprep.subr.mxu0 0.0
  %2267 = vmatpush1.msra.mxu0 0.0
  %2268 = vmatprep.subr.mxu0 0.0
  %2269 = vmatpush1.msra.mxu0 0.0
  %2270 = vmatprep.subr.mxu0 0.0
  %2271 = vmatpush1.msra.mxu0 0.0
  %2272 = vmatprep.subr.mxu0 0.0
  %2273 = vmatpush1.msra.mxu0 0.0
  %2274 = vmatprep.subr.mxu0 0.0
  %2275 = vmatpush1.msra.mxu0 0.0
  %2276 = vmatprep.subr.mxu0 0.0
  %2277 = vmatpush1.msra.mxu0 0.0
  %2278 = vmatprep.subr.mxu0 0.0
  %2279 = vmatpush1.msra.mxu0 0.0
  %2280 = vmatprep.subr.mxu0 0.0
  %2281 = vmatpush1.msra.mxu0 0.0
  %2282 = vmatprep.subr.mxu0 0.0
  %2283 = vmatpush1.msra.mxu0 0.0
  %2284 = vmatprep.subr.mxu0 0.0
  %2285 = vmatpush1.msra.mxu0 0.0
  %2286 = vmatprep.subr.mxu0 0.0
  %2287 = vmatpush1.msra.mxu0 0.0
  %2288 = vmatprep.subr.mxu0 0.0
  %2289 = vmatpush1.msra.mxu0 0.0
  %2290 = vmatprep.subr.mxu0 0.0
  %2291 = vmatpush1.msra.mxu0 0.0
  %2292 = vmatprep.subr.mxu0 0.0
  %2293 = vmatpush1.msra.mxu0 0.0
  %2294 = vmatprep.subr.mxu0 0.0
  %2295 = vmatpush1.msra.mxu0 0.0
  %2296 = vmatprep.subr.mxu0 0.0
  %2297 = vmatpush1.msra.mxu0 0.0
  %2298 = vmatprep.subr.mxu0 0.0
  %2299 = vmatpush1.msra.mxu0 0.0
  %2300 = vmatprep.subr.mxu0 0.0
  %2301 = vmatpush1.msra.mxu0 0.0
  %2302 = vmatprep.subr.mxu0 0.0
  %2303 = vmatpush1.msra.mxu0 0.0
  %2304 = vmatprep.subr.mxu0 0.0
  %2305 = vmatpush1.msra.mxu0 0.0
  %2306 = vmatprep.mubr.f32.mxu0 0.0
  %2307 = vmatmul.mubr.f32.gmra.mrb[0].mxu0 %v2237
  %v2308 = vpop.f32.mrb[0].mxu0
  %v2309 = vadd.f32 0.0, %v2308
  %v2310 = vpop.f32.mrb[0].mxu0
  %2311 = vmatprep.mubr.f32.mxu0 0.0
  %2312 = vmatmul.mubr.f32.gmra.mrb[0].mxu0 %v2240
  %v2313 = vpop.f32.mrb[0].mxu0
  %v2314 = vadd.f32 0.0, %v2313
  %v2315 = vpop.f32.mrb[0].mxu0
  %2316 = vdwg.mxu0
  %2319 = vrot.lane.b32.xlu0 %v1901, 8
  %v2320 = vpop.permute.xlu0 %2319
  %2321 = vrot.lane.b32.xlu0 %v1906, 8
  %v2322 = vpop.permute.xlu0 %2321
  %2327 = vrot.lane.b32.xlu0 %v2105, 16
  %v2328 = vpop.permute.xlu0 %2327
  %2329 = vrot.lane.b32.xlu0 %v2110, 16
  %v2330 = vpop.permute.xlu0 %2329
  %2335 = vrot.lane.b32.xlu0 %v2309, 24
  %v2336 = vpop.permute.xlu0 %2335
  %2337 = vrot.lane.b32.xlu0 %v2314, 24
  %v2338 = vpop.permute.xlu0 %2337
  %v2341 = vsel %vm272, %v1697, %v2320
  %v2342 = vsel %vm272, %v1702, %v2322
  %v2343 = vsel %vm360, %v2341, %v2328
  %v2344 = vsel %vm360, %v2342, %v2330
  %v2345 = vsel %vm65, %v2343, %v2336
  %v2346 = vsel %vm65, %v2344, %v2338
  %v2347 = vpack.c.bf16 %v2346, %v2345
  %s2348 = scalar_lea.vmem %s4, 16
  %v2349 = vld [vmem:[%s2348] sm:$0xf]
  %v2350 = vld [vmem:[%s2348 + $0x4] sm:$0xf]
  %v2351 = vld [vmem:[%s2348 + $0x8] sm:$0xf]
  %v2352 = vld [vmem:[%s2348 + $0xc] sm:$0xf]
  %v2353 = vlaneseq
  %v2354 = vshrl.u32 %v2353, 7
  %v2355 = vsub.s32 0, %v2354
  %v2356 = vrot.slane %v1398, %v2355
  %v2361 = vunpack.c.l.b16 %v2349
  %v2362 = vunpack.c.l.b16 %v2350
  %v2363 = vunpack.c.l.b16 %v2351
  %v2364 = vunpack.c.l.b16 %v2352
  %v2365 = vpack.c.b16 %v2362, %v2361
  %v2366 = vpack.c.b16 %v2364, %v2363
  %v2370 = vsel %vm165, %v2347, 0
  %2372 = vmatprep.subr.bf16.mxu0 0
  %2373 = vmatpush1.bf16.msra.mxu0 %v2365
  %2374 = vmatprep.subr.bf16.mxu0 0
  %2375 = vmatpush1.bf16.msra.mxu0 %v2366
  %2376 = vmatprep.subr.bf16.mxu0 0
  %2377 = vmatpush1.bf16.msra.mxu0 0
  %2378 = vmatprep.subr.bf16.mxu0 0
  %2379 = vmatpush1.bf16.msra.mxu0 0
  %2380 = vmatprep.subr.bf16.mxu0 0
  %2381 = vmatpush1.bf16.msra.mxu0 0
  %2382 = vmatprep.subr.bf16.mxu0 0
  %2383 = vmatpush1.bf16.msra.mxu0 0
  %2384 = vmatprep.subr.bf16.mxu0 0
  %2385 = vmatpush1.bf16.msra.mxu0 0
  %2386 = vmatprep.subr.bf16.mxu0 0
  %2387 = vmatpush1.bf16.msra.mxu0 0
  %2388 = vmatprep.subr.bf16.mxu0 0
  %2389 = vmatpush1.bf16.msra.mxu0 0
  %2390 = vmatprep.subr.bf16.mxu0 0
  %2391 = vmatpush1.bf16.msra.mxu0 0
  %2392 = vmatprep.subr.bf16.mxu0 0
  %2393 = vmatpush1.bf16.msra.mxu0 0
  %2394 = vmatprep.subr.bf16.mxu0 0
  %2395 = vmatpush1.bf16.msra.mxu0 0
  %2396 = vmatprep.subr.bf16.mxu0 0
  %2397 = vmatpush1.bf16.msra.mxu0 0
  %2398 = vmatprep.subr.bf16.mxu0 0
  %2399 = vmatpush1.bf16.msra.mxu0 0
  %2400 = vmatprep.subr.bf16.mxu0 0
  %2401 = vmatpush1.bf16.msra.mxu0 0
  %2402 = vmatprep.subr.bf16.mxu0 0
  %2403 = vmatpush1.bf16.msra.mxu0 0
  %2404 = vmatprep.mubr.bf16.mxu0 0
  %2405 = vmatmul.mubr.bf16.gmra.mrb[0].mxu0 %v2370
  %v2406 = vpop.f32.mrb[0].mxu0
  %v2407 = vadd.f32 %v2356, %v2406
  %v2408 = vpop.f32.mrb[0].mxu0
  %v2409 = vpop.f32.mrb[0].mxu0
  %v2410 = vadd.f32 %v2356, %v2409
  %v2411 = vpop.f32.mrb[0].mxu0
  %2412 = vdwg.mxu0
  %v2413 = vadd.f32 %v1394, %v2407
  %v2414 = vadd.f32 %v1395, %v2410
  %v2415 = vsel %vm165, %v2413, 0.0
  %2416 = vadd.xlane.f32.xlu0 %v2415
  %v2417 = vpop.xlane.xlu0 %2416
  %v2418 = vsel %vm165, %v2414, 0.0
  %2419 = vadd.xlane.f32.xlu0 %v2418
  %v2420 = vpop.xlane.xlu0 %2419
  %v2421 = vmul.f32 %v2417, %v172
  %v2422 = vmul.f32 %v2420, %v172
  %v2423 = vsub.f32 %v2413, %v2421
  %v2424 = vsub.f32 %v2414, %v2422
  %v2425 = vmul.f32 %v2423, %v2423
  %v2426 = vmul.f32 %v2424, %v2424
  %v2427 = vsel %vm165, %v2425, 0.0
  %2428 = vadd.xlane.f32.xlu0 %v2427
  %v2429 = vpop.xlane.xlu0 %2428
  %v2430 = vsel %vm165, %v2426, 0.0
  %2431 = vadd.xlane.f32.xlu0 %v2430
  %v2432 = vpop.xlane.xlu0 %2431
  %v2433 = vmul.f32 %v2429, %v172
  %v2434 = vmul.f32 %v2432, %v172
  %v2435 = vadd.f32 %v2433, 1e-05
  %v2436 = vadd.f32 %v2434, 1e-05
  %v2437 = vrsqrt.pop %v2435
  %v2438 = vrsqrt.pop %v2436
  %v2439 = vmul.f32 %v2423, %v2437
  %v2440 = vmul.f32 %v2424, %v2438
  %v2441 = vlaneseq
  %v2442 = vshrl.u32 %v2441, 7
  %v2443 = vsub.s32 0, %v2442
  %v2444 = vrot.slane %v1399, %v2443
  %v2445 = vmul.f32 %v2439, %v2444
  %v2446 = vmul.f32 %v2440, %v2444
  %v2447 = vlaneseq
  %v2448 = vshrl.u32 %v2447, 7
  %v2449 = vsub.s32 0, %v2448
  %v2450 = vrot.slane %v1400, %v2449
  %v2451 = vadd.f32 %v2445, %v2450
  %v2452 = vadd.f32 %v2446, %v2450
  %v2453 = vpack.c.bf16 %v2452, %v2451
  %s2454 = scalar_lea.vmem %s5, 16
  %v2455 = vld [vmem:[%s2454] sm:$0xf]
  %v2456 = vld [vmem:[%s2454 + $0x4] sm:$0xf]
  %v2457 = vld [vmem:[%s2454 + $0x8] sm:$0xf]
  %v2458 = vld [vmem:[%s2454 + $0xc] sm:$0xf]
  %v2459 = vlaneseq
  %v2460 = vshrl.u32 %v2459, 7
  %v2461 = vsub.s32 0, %v2460
  %v2462 = vrot.slane %v1402, %v2461
  %v2467 = vunpack.c.l.b16 %v2455
  %v2468 = vunpack.c.l.b16 %v2456
  %v2469 = vunpack.c.l.b16 %v2457
  %v2470 = vunpack.c.l.b16 %v2458
  %v2471 = vpack.c.b16 %v2468, %v2467
  %v2472 = vpack.c.b16 %v2470, %v2469
  %v2476 = vsel %vm165, %v2453, 0
  %2478 = vmatprep.subr.bf16.mxu0 0
  %2479 = vmatpush1.bf16.msra.mxu0 %v2471
  %2480 = vmatprep.subr.bf16.mxu0 0
  %2481 = vmatpush1.bf16.msra.mxu0 %v2472
  %2482 = vmatprep.subr.bf16.mxu0 0
  %2483 = vmatpush1.bf16.msra.mxu0 0
  %2484 = vmatprep.subr.bf16.mxu0 0
  %2485 = vmatpush1.bf16.msra.mxu0 0
  %2486 = vmatprep.subr.bf16.mxu0 0
  %2487 = vmatpush1.bf16.msra.mxu0 0
  %2488 = vmatprep.subr.bf16.mxu0 0
  %2489 = vmatpush1.bf16.msra.mxu0 0
  %2490 = vmatprep.subr.bf16.mxu0 0
  %2491 = vmatpush1.bf16.msra.mxu0 0
  %2492 = vmatprep.subr.bf16.mxu0 0
  %2493 = vmatpush1.bf16.msra.mxu0 0
  %2494 = vmatprep.subr.bf16.mxu0 0
  %2495 = vmatpush1.bf16.msra.mxu0 0
  %2496 = vmatprep.subr.bf16.mxu0 0
  %2497 = vmatpush1.bf16.msra.mxu0 0
  %2498 = vmatprep.subr.bf16.mxu0 0
  %2499 = vmatpush1.bf16.msra.mxu0 0
  %2500 = vmatprep.subr.bf16.mxu0 0
  %2501 = vmatpush1.bf16.msra.mxu0 0
  %2502 = vmatprep.subr.bf16.mxu0 0
  %2503 = vmatpush1.bf16.msra.mxu0 0
  %2504 = vmatprep.subr.bf16.mxu0 0
  %2505 = vmatpush1.bf16.msra.mxu0 0
  %2506 = vmatprep.subr.bf16.mxu0 0
  %2507 = vmatpush1.bf16.msra.mxu0 0
  %2508 = vmatprep.subr.bf16.mxu0 0
  %2509 = vmatpush1.bf16.msra.mxu0 0
  %2510 = vmatprep.mubr.bf16.mxu0 0
  %2511 = vmatmul.mubr.bf16.gmra.mrb[0].mxu0 %v2476
  %v2512 = vpop.f32.mrb[0].mxu0
  %v2513 = vadd.f32 %v2462, %v2512
  %v2514 = vpop.f32.mrb[0].mxu0
  %v2515 = vpop.f32.mrb[0].mxu0
  %v2516 = vadd.f32 %v2462, %v2515
  %v2517 = vpop.f32.mrb[0].mxu0
  %2518 = vdwg.mxu0
  %v2519 = vmax.f32 %v2513, 0.0
  %v2520 = vmax.f32 %v2516, 0.0
  %v2521 = vpack.c.bf16 %v2520, %v2519
  %s2522 = scalar_lea.vmem %s6, 64
  %v2523 = vld [vmem:[%s2522] sm:$0xf]
  %v2524 = vld [vmem:[%s2522 + $0x4] sm:$0xf]
  %v2525 = vld [vmem:[%s2522 + $0x8] sm:$0xf]
  %v2526 = vld [vmem:[%s2522 + $0xc] sm:$0xf]
  %v2527 = vld [vmem:[%s2522 + $0x10] sm:$0xf]
  %v2528 = vld [vmem:[%s2522 + $0x14] sm:$0xf]
  %v2529 = vld [vmem:[%s2522 + $0x18] sm:$0xf]
  %v2530 = vld [vmem:[%s2522 + $0x1c] sm:$0xf]
  %v2531 = vld [vmem:[%s2522 + $0x20] sm:$0xf]
  %v2532 = vld [vmem:[%s2522 + $0x24] sm:$0xf]
  %v2533 = vld [vmem:[%s2522 + $0x28] sm:$0xf]
  %v2534 = vld [vmem:[%s2522 + $0x2c] sm:$0xf]
  %v2535 = vld [vmem:[%s2522 + $0x30] sm:$0xf]
  %v2536 = vld [vmem:[%s2522 + $0x34] sm:$0xf]
  %v2537 = vld [vmem:[%s2522 + $0x38] sm:$0xf]
  %v2538 = vld [vmem:[%s2522 + $0x3c] sm:$0xf]
  %v2539 = vlaneseq
  %v2540 = vshrl.u32 %v2539, 7
  %v2541 = vsub.s32 0, %v2540
  %v2542 = vrot.slane %v1401, %v2541
  %v2559 = vunpack.c.l.b16 %v2523
  %v2560 = vunpack.c.l.b16 %v2524
  %v2561 = vunpack.c.l.b16 %v2525
  %v2562 = vunpack.c.l.b16 %v2526
  %v2563 = vunpack.c.l.b16 %v2527
  %v2564 = vunpack.c.l.b16 %v2528
  %v2565 = vunpack.c.l.b16 %v2529
  %v2566 = vunpack.c.l.b16 %v2530
  %v2567 = vunpack.c.l.b16 %v2531
  %v2568 = vunpack.c.l.b16 %v2532
  %v2569 = vunpack.c.l.b16 %v2533
  %v2570 = vunpack.c.l.b16 %v2534
  %v2571 = vunpack.c.l.b16 %v2535
  %v2572 = vunpack.c.l.b16 %v2536
  %v2573 = vunpack.c.l.b16 %v2537
  %v2574 = vunpack.c.l.b16 %v2538
  %v2575 = vpack.c.b16 %v2560, %v2559
  %v2576 = vpack.c.b16 %v2562, %v2561
  %v2577 = vpack.c.b16 %v2564, %v2563
  %v2578 = vpack.c.b16 %v2566, %v2565
  %v2579 = vpack.c.b16 %v2568, %v2567
  %v2580 = vpack.c.b16 %v2570, %v2569
  %v2581 = vpack.c.b16 %v2572, %v2571
  %v2582 = vpack.c.b16 %v2574, %v2573
  %2591 = vmatprep.subr.bf16.mxu0 0
  %2592 = vmatpush1.bf16.msra.mxu0 %v2575
  %2593 = vmatprep.subr.bf16.mxu0 0
  %2594 = vmatpush1.bf16.msra.mxu0 %v2576
  %2595 = vmatprep.subr.bf16.mxu0 0
  %2596 = vmatpush1.bf16.msra.mxu0 %v2577
  %2597 = vmatprep.subr.bf16.mxu0 0
  %2598 = vmatpush1.bf16.msra.mxu0 %v2578
  %2599 = vmatprep.subr.bf16.mxu0 0
  %2600 = vmatpush1.bf16.msra.mxu0 %v2579
  %2601 = vmatprep.subr.bf16.mxu0 0
  %2602 = vmatpush1.bf16.msra.mxu0 %v2580
  %2603 = vmatprep.subr.bf16.mxu0 0
  %2604 = vmatpush1.bf16.msra.mxu0 %v2581
  %2605 = vmatprep.subr.bf16.mxu0 0
  %2606 = vmatpush1.bf16.msra.mxu0 %v2582
  %2607 = vmatprep.subr.bf16.mxu0 0
  %2608 = vmatpush1.bf16.msra.mxu0 0
  %2609 = vmatprep.subr.bf16.mxu0 0
  %2610 = vmatpush1.bf16.msra.mxu0 0
  %2611 = vmatprep.subr.bf16.mxu0 0
  %2612 = vmatpush1.bf16.msra.mxu0 0
  %2613 = vmatprep.subr.bf16.mxu0 0
  %2614 = vmatpush1.bf16.msra.mxu0 0
  %2615 = vmatprep.subr.bf16.mxu0 0
  %2616 = vmatpush1.bf16.msra.mxu0 0
  %2617 = vmatprep.subr.bf16.mxu0 0
  %2618 = vmatpush1.bf16.msra.mxu0 0
  %2619 = vmatprep.subr.bf16.mxu0 0
  %2620 = vmatpush1.bf16.msra.mxu0 0
  %2621 = vmatprep.subr.bf16.mxu0 0
  %2622 = vmatpush1.bf16.msra.mxu0 0
  %2623 = vmatprep.mubr.bf16.mxu0 0
  %2624 = vmatmul.mubr.bf16.gmra.mrb[0].mxu0 %v2521
  %v2625 = vpop.f32.mrb[0].mxu0
  %v2626 = vadd.f32 %v2542, %v2625
  %v2627 = vpop.f32.mrb[0].mxu0
  %v2628 = vpop.f32.mrb[0].mxu0
  %v2629 = vadd.f32 %v2542, %v2628
  %v2630 = vpop.f32.mrb[0].mxu0
  %2631 = vdwg.mxu0
  %v2632 = vadd.f32 %v2413, %v2626
  %v2633 = vadd.f32 %v2414, %v2629
  %v2634 = vld [vmem:[%s7 + $0xc] sm:$0x1]
  %v2635 = vld [vmem:[%s7 + $0xd] sm:$0x1]
  %v2636 = vsel %vm165, %v2632, 0.0
  %2637 = vadd.xlane.f32.xlu0 %v2636
  %v2638 = vpop.xlane.xlu0 %2637
  %v2639 = vsel %vm165, %v2633, 0.0
  %2640 = vadd.xlane.f32.xlu0 %v2639
  %v2641 = vpop.xlane.xlu0 %2640
  %v2642 = vmul.f32 %v2638, %v172
  %v2643 = vmul.f32 %v2641, %v172
  %v2644 = vsub.f32 %v2632, %v2642
  %v2645 = vsub.f32 %v2633, %v2643
  %v2646 = vmul.f32 %v2644, %v2644
  %v2647 = vmul.f32 %v2645, %v2645
  %v2648 = vsel %vm165, %v2646, 0.0
  %2649 = vadd.xlane.f32.xlu0 %v2648
  %v2650 = vpop.xlane.xlu0 %2649
  %v2651 = vsel %vm165, %v2647, 0.0
  %2652 = vadd.xlane.f32.xlu0 %v2651
  %v2653 = vpop.xlane.xlu0 %2652
  %v2654 = vmul.f32 %v2650, %v172
  %v2655 = vmul.f32 %v2653, %v172
  %v2656 = vadd.f32 %v2654, 1e-05
  %v2657 = vadd.f32 %v2655, 1e-05
  %v2658 = vrsqrt.pop %v2656
  %v2659 = vrsqrt.pop %v2657
  %v2660 = vmul.f32 %v2644, %v2658
  %v2661 = vmul.f32 %v2645, %v2659
  %v2662 = vlaneseq
  %v2663 = vshrl.u32 %v2662, 7
  %v2664 = vsub.s32 0, %v2663
  %v2665 = vrot.slane %v2634, %v2664
  %v2666 = vmul.f32 %v2660, %v2665
  %v2667 = vmul.f32 %v2661, %v2665
  %v2668 = vlaneseq
  %v2669 = vshrl.u32 %v2668, 7
  %v2670 = vsub.s32 0, %v2669
  %v2671 = vrot.slane %v2635, %v2670
  %v2672 = vadd.f32 %v2666, %v2671
  %v2673 = vadd.f32 %v2667, %v2671
  %v2674 = vld [vmem:[%s8] sm:$0xff]
  %v2675 = vld [vmem:[%s8 + $0x8] sm:$0xff]
  %v2676 = vld [vmem:[%s8 + $0x10] sm:$0xff]
  %v2677 = vld [vmem:[%s8 + $0x18] sm:$0xff]
  %v2678 = vld [vmem:[%s8 + $0x20] sm:$0x1]
  %v2679 = vlaneseq
  %v2680 = vshrl.u32 %v2679, 7
  %v2681 = vsub.s32 0, %v2680
  %v2682 = vrot.slane %v2678, %v2681
  %v2684 = vsel %vm165, %v2672, 0
  %v2687 = vsel %vm165, %v2673, 0
  %2689 = vmatprep.subr.mxu0 0.0
  %2690 = vmatpush1.msra.mxu0 %v2674
  %2691 = vmatprep.subr.mxu0 0.0
  %2692 = vmatpush1.msra.mxu0 %v2675
  %2693 = vmatprep.subr.mxu0 0.0
  %2694 = vmatpush1.msra.mxu0 %v2676
  %2695 = vmatprep.subr.mxu0 0.0
  %2696 = vmatpush1.msra.mxu0 %v2677
  %2697 = vmatprep.subr.mxu0 0.0
  %2698 = vmatpush1.msra.mxu0 0.0
  %2699 = vmatprep.subr.mxu0 0.0
  %2700 = vmatpush1.msra.mxu0 0.0
  %2701 = vmatprep.subr.mxu0 0.0
  %2702 = vmatpush1.msra.mxu0 0.0
  %2703 = vmatprep.subr.mxu0 0.0
  %2704 = vmatpush1.msra.mxu0 0.0
  %2705 = vmatprep.subr.mxu0 0.0
  %2706 = vmatpush1.msra.mxu0 0.0
  %2707 = vmatprep.subr.mxu0 0.0
  %2708 = vmatpush1.msra.mxu0 0.0
  %2709 = vmatprep.subr.mxu0 0.0
  %2710 = vmatpush1.msra.mxu0 0.0
  %2711 = vmatprep.subr.mxu0 0.0
  %2712 = vmatpush1.msra.mxu0 0.0
  %2713 = vmatprep.subr.mxu0 0.0
  %2714 = vmatpush1.msra.mxu0 0.0
  %2715 = vmatprep.subr.mxu0 0.0
  %2716 = vmatpush1.msra.mxu0 0.0
  %2717 = vmatprep.subr.mxu0 0.0
  %2718 = vmatpush1.msra.mxu0 0.0
  %2719 = vmatprep.subr.mxu0 0.0
  %2720 = vmatpush1.msra.mxu0 0.0
  %2721 = vmatprep.subr.mxu0 0.0
  %2722 = vmatpush1.msra.mxu0 0.0
  %2723 = vmatprep.subr.mxu0 0.0
  %2724 = vmatpush1.msra.mxu0 0.0
  %2725 = vmatprep.subr.mxu0 0.0
  %2726 = vmatpush1.msra.mxu0 0.0
  %2727 = vmatprep.subr.mxu0 0.0
  %2728 = vmatpush1.msra.mxu0 0.0
  %2729 = vmatprep.subr.mxu0 0.0
  %2730 = vmatpush1.msra.mxu0 0.0
  %2731 = vmatprep.subr.mxu0 0.0
  %2732 = vmatpush1.msra.mxu0 0.0
  %2733 = vmatprep.subr.mxu0 0.0
  %2734 = vmatpush1.msra.mxu0 0.0
  %2735 = vmatprep.subr.mxu0 0.0
  %2736 = vmatpush1.msra.mxu0 0.0
  %2737 = vmatprep.subr.mxu0 0.0
  %2738 = vmatpush1.msra.mxu0 0.0
  %2739 = vmatprep.subr.mxu0 0.0
  %2740 = vmatpush1.msra.mxu0 0.0
  %2741 = vmatprep.subr.mxu0 0.0
  %2742 = vmatpush1.msra.mxu0 0.0
  %2743 = vmatprep.subr.mxu0 0.0
  %2744 = vmatpush1.msra.mxu0 0.0
  %2745 = vmatprep.subr.mxu0 0.0
  %2746 = vmatpush1.msra.mxu0 0.0
  %2747 = vmatprep.subr.mxu0 0.0
  %2748 = vmatpush1.msra.mxu0 0.0
  %2749 = vmatprep.subr.mxu0 0.0
  %2750 = vmatpush1.msra.mxu0 0.0
  %2751 = vmatprep.subr.mxu0 0.0
  %2752 = vmatpush1.msra.mxu0 0.0
  %2753 = vmatprep.mubr.f32.mxu0 0.0
  %2754 = vmatmul.mubr.f32.gmra.mrb[0].mxu0 %v2684
  %v2755 = vpop.f32.mrb[0].mxu0
  %v2756 = vadd.f32 %v2682, %v2755
  %v2757 = vpop.f32.mrb[0].mxu0
  %2758 = vmatprep.mubr.f32.mxu0 0.0
  %2759 = vmatmul.mubr.f32.gmra.mrb[0].mxu0 %v2687
  %v2760 = vpop.f32.mrb[0].mxu0
  %v2761 = vadd.f32 %v2682, %v2760
  %v2762 = vpop.f32.mrb[0].mxu0
  %2763 = vdwg.mxu0
  %2764 = vmax.xlane.f32.xlu0 %v2756
  %v2765 = vpop.xlane.xlu0 %2764
  %2766 = vmax.xlane.f32.xlu0 %v2761
  %v2767 = vpop.xlane.xlu0 %2766
  %v2768 = vsub.f32 %v2756, %v2765
  %v2769 = vsub.f32 %v2761, %v2767
  %v2770 = vmul.f32 %v2768, 1.442695
  %v2771 = vpow.pop %v2770
  %v2772 = vmul.f32 %v2769, 1.442695
  %v2773 = vpow.pop %v2772
  %2774 = vadd.xlane.f32.xlu0 %v2771
  %v2775 = vpop.xlane.xlu0 %2774
  %2776 = vadd.xlane.f32.xlu0 %v2773
  %v2777 = vpop.xlane.xlu0 %2776
  %v2778 = vlog2.pop %v2775
  %v2779 = vmul.f32 %v2778, 0.6931472
  %v2780 = vlog2.pop %v2777
  %v2781 = vmul.f32 %v2780, 0.6931472
  %v2782 = vadd.f32 %v2765, %v2779
  %v2783 = vadd.f32 %v2767, %v2781
  %2784 = vset.pattern.permute.xlu0 0
  %2785 = vperm.xlu0 %2784, %v35
  %v2786 = vpop.permute.xlu0 %2785
  %2787 = vset.pattern.permute.xlu0 0
  %2788 = vperm.xlu0 %2787, %v36
  %v2789 = vpop.permute.xlu0 %2788
  %vm2790 = vcmp.eq.s32.totalorder %v38, %v2786
  %vm2791 = vcmp.eq.s32.totalorder %v38, %v2789
  %v2792 = vsel %vm2790, 1, 0
  %v2793 = vsel %vm2791, 1, 0
  %v2794 = vcvt.s32.f32 %v2792
  %v2795 = vcvt.s32.f32 %v2793
  %v2796 = vmul.f32 %v2756, %v2794
  %v2797 = vmul.f32 %v2761, %v2795
  %2798 = vadd.xlane.f32.xlu0 %v2796
  %v2799 = vpop.xlane.xlu0 %2798
  %2800 = vadd.xlane.f32.xlu0 %v2797
  %v2801 = vpop.xlane.xlu0 %2800
  %v2802 = vsub.f32 %v2782, %v2799
  %v2803 = vsub.f32 %v2783, %v2801
  %vm2804 = vcmask 7168
  %v2805 = vsel %vm2804, %v2802, 0.0
  %v2806 = vsel %vm2804, %v2803, 0.0
  %v2807 = vadd.f32 %v2805, %v2806
  %2808 = vadd.xlane.f32.xlu0 %v2807
  %v2809 = vpop.xlane.xlu0 %2808
  %v2810 = vrot.slane %v2809, 4
  %v2811 = vadd.f32 %v2809, %v2810
  %v2812 = vrot.slane %v2811, 2
  %v2813 = vadd.f32 %v2811, %v2812
  %v2814 = vrot.slane %v2813, 1
  %v2815 = vadd.f32 %v2813, %v2814
  %s2816 = vtos %v2815
  %s2817 = smul.f32 %s2816, 0.0625
  %2818 = vst [vmem:[%s9] sm:$0xff] %v2756
  %2819 = vst [vmem:[%s9 + $0x8] sm:$0xff] %v2761
  %v2820 = vstv %s2817
  %2821 = vst [vmem:[%s9 + $0x10] sm:$0xff] %v2820
  // Predicated region
  $region38: #{model_forward.1} parent=0 // pred_check
    _
  $region39: #{model_forward.1} parent=0 // pred_check_branch
    %2823 = sbr.rel (0) target = $region41
  $region40: #{model_forward.1} parent=0 // pred_region
    _
  $region41: #{model_forward.1} parent=0 // pred_fallthru
    _
  // Predicated region
  $region42: #{model_forward.1} parent=0 // pred_check
    _
  $region43: #{model_forward.1} parent=0 // pred_check_branch
    %2825 = sbr.rel (0) target = $region45
  $region44: #{model_forward.1} parent=0 // pred_region
    _
  $region45: #{model_forward.1} parent=0 // pred_fallthru
    _

</llo_original>
